<compile_context>
chip_gen: v5e
topology: v5e:2x2
jax: 0.10.0
libtpu: 0.0.40
codegen_flags: <defaults>
</compile_context>

<pallas_src>
import functools

import jax
import jax.numpy as jnp
from jax.experimental import pallas as pl
from jax.experimental.pallas import tpu as pltpu


def _bottleneck_kernel(H, W, CIN, P, C4,
                       x_ref, w1_ref, s1_ref, b1_ref,
                       w2_ref, s2_ref, b2_ref,
                       w3_ref, s3_ref, b3_ref,
                       wf1_ref, wf2_ref, wsa_ref, o_ref):
    f32 = jnp.float32
    bf16 = jnp.bfloat16
    HW = H * W

    x_cm = x_ref[0]                                     # (CIN, HW) f32, channel-major

    # Column (w) coordinate per lane, reused for all horizontal-boundary masks.
    lane_w = jax.lax.broadcasted_iota(jnp.int32, (1, HW), 1) % W

    # ---- conv1 (1x1) + bn1 + relu : (P, CIN) @ (CIN, HW), bf16 MXU, f32 accumulate ----
    h1 = jnp.dot(w1_ref[...], x_cm.astype(bf16), preferred_element_type=f32)
    h1 = jnp.maximum(h1 * s1_ref[...] + b1_ref[...], 0.0)           # (P, HW) f32

    # ---- conv2 (3x3, stride=1, pad=1) as one channel-major im2col matmul, K = 9*P ----
    # Taps are lane-shifted copies of h1: zero lane-pads handle the vertical boundary,
    # an iota lane-mask handles the horizontal boundary (no row wrap-around).
    PADL = W + 1
    h1b = h1.astype(bf16)
    zc = jnp.zeros((P, PADL), bf16)
    h1_pad = jnp.concatenate([zc, h1b, zc], axis=1)                  # (P, HW + 2*PADL)
    wmasks = []
    for dj in range(3):
        wv = lane_w + (dj - 1)
        wmasks.append((wv >= 0) & (wv < W))                          # (1, HW) bool
    rows = []
    for di in range(3):
        for dj in range(3):
            shift = (di - 1) * W + (dj - 1)
            tap = h1_pad[:, PADL + shift: PADL + shift + HW]         # (P, HW) bf16
            rows.append(jnp.where(wmasks[dj], tap, 0.0))
    slab = jnp.concatenate(rows, axis=0)                             # (9P, HW) bf16
    h2 = jnp.dot(w2_ref[...], slab, preferred_element_type=f32)      # (P, 9P)@(9P, HW)
    h2 = jnp.maximum(h2 * s2_ref[...] + b2_ref[...], 0.0)            # (P, HW) f32

    # ---- conv3 (1x1) + bn3 ----
    h3 = jnp.dot(w3_ref[...], h2.astype(bf16), preferred_element_type=f32)  # (C4, HW)
    h3 = h3 * s3_ref[...] + b3_ref[...]                              # (C4, HW) f32

    # ---- ChannelAttention: both pooled branches batched as one (C4, 2) column MLP ----
    gap = jnp.mean(h3, axis=1, keepdims=True)                        # (C4, 1)
    gmp = jnp.max(h3, axis=1, keepdims=True)                         # (C4, 1)
    pooled = jnp.concatenate([gap, gmp], axis=1).astype(bf16)        # (C4, 2)
    hid = jnp.maximum(
        jnp.dot(wf1_ref[...], pooled, preferred_element_type=f32), 0.0)      # (CR, 2)
    att = jnp.dot(wf2_ref[...], hid.astype(bf16), preferred_element_type=f32)  # (C4, 2)
    catt = jax.nn.sigmoid(att[:, 0:1] + att[:, 1:2])                 # (C4, 1)
    hca = h3 * catt                                                  # (C4, HW) f32

    # ---- SpatialAttention: 7x7 conv over (avg,max)-channel rows as ONE MXU matmul ----
    cm = jnp.mean(hca, axis=0, keepdims=True)                        # (1, HW)
    cx = jnp.max(hca, axis=0, keepdims=True)                         # (1, HW)
    cmx = jnp.concatenate([cm, cx], axis=0).astype(bf16)             # (2, HW)
    SAPAD = 3 * W + 3
    zrow = jnp.zeros((2, SAPAD), bf16)
    cmx_p = jnp.concatenate([zrow, cmx, zrow], axis=1)               # (2, HW + 2*SAPAD)
    sa_rows = []
    for dj in range(7):
        wv = lane_w + (dj - 3)
        valid = (wv >= 0) & (wv < W)                                 # (1, HW)
        for di in range(7):
            s = SAPAD + (di - 3) * W + (dj - 3)
            sa_rows.append(jnp.where(valid, cmx_p[:, s:s + HW], 0.0))
    sa_slab = jnp.concatenate(sa_rows, axis=0)                       # (98, HW) bf16
    sacc = jnp.dot(wsa_ref[...], sa_slab, preferred_element_type=f32)  # (1, 98)@(98, HW)
    satt = jax.nn.sigmoid(sacc)                                      # (1, HW)

    # ---- apply SA, identity residual, relu; channel-major (lane-dense) store ----
    out = jnp.maximum(hca * satt + x_cm, 0.0)                        # (C4, HW)
    o_ref[0] = out.astype(o_ref.dtype)


def bottleneck_forward(x_nchw, params):
    (w1, s1, b1, w2, s2, b2, w3, s3, b3, wf1, wf2, wsa) = params
    N, CIN, H, W = x_nchw.shape
    P = w1.shape[1]
    C4 = w3.shape[1]
    CR = wf1.shape[1]
    HW = H * W
    assert CIN == C4, "identity residual requires inplanes == planes * expansion"

    bf16 = jnp.bfloat16
    f32 = jnp.float32
    # Free reshape (no transpose, no extra HBM traffic): NCHW -> (N, C, H*W).
    x = x_nchw.astype(f32).reshape(N, CIN, HW)

    # Trace-time weight transposes so the whole kernel stays channel-major.
    w1t = w1.T.astype(bf16)                               # (P, CIN)
    w2t = w2.reshape(9 * P, P).T.astype(bf16)             # (P, 9P), rows ordered (di,dj,ci)
    w3t = w3.T.astype(bf16)                               # (C4, P)
    wf1t = wf1.T.astype(bf16)                             # (CR, C4)
    wf2t = wf2.T.astype(bf16)                             # (C4, CR)
    # SA 7x7 weights flattened to match the slab row order (dj, di, branch[avg,max]).
    wsa_row = jnp.transpose(wsa.reshape(2, 7, 7), (2, 1, 0)).reshape(1, 98).astype(bf16)

    # BN params as per-channel columns (broadcast over the lane-dense spatial dim).
    s1c, b1c = s1.reshape(P, 1), b1.reshape(P, 1)
    s2c, b2c = s2.reshape(P, 1), b2.reshape(P, 1)
    s3c, b3c = s3.reshape(C4, 1), b3.reshape(C4, 1)

    kernel = functools.partial(_bottleneck_kernel, H, W, CIN, P, C4)
    full2 = lambda n: (0, 0)

    # grid over the batch, marked "parallel": one image per TensorCore on v7x megacore;
    # on single-TC chips (v5e/v6e) this is a short serial loop with negligible overhead.
    out_cm = pl.pallas_call(
        kernel,
        out_shape=jax.ShapeDtypeStruct((N, C4, HW), f32),
        grid=(N,),
        in_specs=[
            pl.BlockSpec((1, CIN, HW), lambda n: (n, 0, 0)),        # x (channel-major)
            pl.BlockSpec((P, CIN), full2),                          # conv1 w^T (bf16)
            pl.BlockSpec((P, 1), full2),                            # bn1 scale
            pl.BlockSpec((P, 1), full2),                            # bn1 bias
            pl.BlockSpec((P, 9 * P), full2),                        # conv2 w^T im2col (bf16)
            pl.BlockSpec((P, 1), full2),                            # bn2 scale
            pl.BlockSpec((P, 1), full2),                            # bn2 bias
            pl.BlockSpec((C4, P), full2),                           # conv3 w^T (bf16)
            pl.BlockSpec((C4, 1), full2),                           # bn3 scale
            pl.BlockSpec((C4, 1), full2),                           # bn3 bias
            pl.BlockSpec((CR, C4), full2),                          # ca.fc1 w^T (bf16)
            pl.BlockSpec((C4, CR), full2),                          # ca.fc2 w^T (bf16)
            pl.BlockSpec((1, 98), full2),                           # sa conv w row (bf16)
        ],
        out_specs=pl.BlockSpec((1, C4, HW), lambda n: (n, 0, 0)),
        compiler_params=pltpu.CompilerParams(
            dimension_semantics=("parallel",)),
    )(x, w1t, s1c, b1c, w2t, s2c, b2c, w3t, s3c, b3c, wf1t, wf2t, wsa_row)

    # Free reshape back to NCHW.
    return out_cm.reshape(N, C4, H, W)


def _make_params(key, inplanes, planes, ratio=16):
    expansion = 4
    C4 = planes * expansion
    CR = C4 // ratio
    ks = jax.random.split(key, 12)

    def nrm(k, shape, scale=0.1):
        return scale * jax.random.normal(k, shape, jnp.float32)

    def bn(k, c):
        k1, k2, k3, k4 = jax.random.split(k, 4)
        gamma = jax.random.uniform(k1, (c,), jnp.float32, 0.5, 1.5)
        beta = 0.1 * jax.random.normal(k2, (c,), jnp.float32)
        rmean = 0.1 * jax.random.normal(k3, (c,), jnp.float32)
        rvar = jax.random.uniform(k4, (c,), jnp.float32, 0.5, 1.5)
        scale = gamma / jnp.sqrt(rvar + 1e-5)
        bias = beta - rmean * scale
        return scale.reshape(1, c), bias.reshape(1, c)

    w1 = nrm(ks[0], (inplanes, planes))          # conv1 as (in, out)
    s1, b1 = bn(ks[1], planes)
    w2 = nrm(ks[2], (3, 3, planes, planes))      # conv2 as (kh, kw, in, out)
    s2, b2 = bn(ks[3], planes)
    w3 = nrm(ks[4], (planes, C4))                # conv3 as (in, out)
    s3, b3 = bn(ks[5], C4)
    wf1 = nrm(ks[6], (C4, CR))                   # ca.fc1 as (in, out)
    wf2 = nrm(ks[7], (CR, C4))                   # ca.fc2 as (in, out)
    wsa = nrm(ks[8], (2, 49))                    # sa.conv1: row0=avg-ch, row1=max-ch, 7x7 flat
    return (w1, s1, b1, w2, s2, b2, w3, s3, b3, wf1, wf2, wsa)


if __name__ == "__main__":
    # Small shapes consistent with the module: planes=16 -> expansion*planes = 64,
    # inplanes=64 so the identity residual is valid (downsample=None, stride=1).
    N, INPLANES, PLANES, H, W = 2, 64, 16, 16, 16

    key = jax.random.PRNGKey(0)
    kx, kp = jax.random.split(key)
    x = jax.random.normal(kx, (N, INPLANES, H, W), jnp.float32)
    params = _make_params(kp, INPLANES, PLANES)

    out = bottleneck_forward(x, params)
    out = jax.block_until_ready(out)
    assert out.shape == (N, PLANES * 4, H, W)
    assert bool(jnp.isfinite(out).all())
    print("KERNEL_OK")
</pallas_src>

<mosaic_0001>
module attributes {stable_mosaic.version = 11 : i64} {
  func.func @_bottleneck_kernel(%arg0: i32, %arg1: memref<1x64x256xf32, #tpu.memory_space<vmem>>, %arg2: memref<16x64xbf16, #tpu.memory_space<vmem>>, %arg3: memref<16x1xf32, #tpu.memory_space<vmem>>, %arg4: memref<16x1xf32, #tpu.memory_space<vmem>>, %arg5: memref<16x144xbf16, #tpu.memory_space<vmem>>, %arg6: memref<16x1xf32, #tpu.memory_space<vmem>>, %arg7: memref<16x1xf32, #tpu.memory_space<vmem>>, %arg8: memref<64x16xbf16, #tpu.memory_space<vmem>>, %arg9: memref<64x1xf32, #tpu.memory_space<vmem>>, %arg10: memref<64x1xf32, #tpu.memory_space<vmem>>, %arg11: memref<4x64xbf16, #tpu.memory_space<vmem>>, %arg12: memref<64x4xbf16, #tpu.memory_space<vmem>>, %arg13: memref<1x98xbf16, #tpu.memory_space<vmem>>, %arg14: memref<1x64x256xf32, #tpu.memory_space<vmem>>) attributes {dimension_semantics = [#tpu.dimension_semantics<parallel>], iteration_bounds = array<i64: 2>, scalar_prefetch = 0 : i64, scratch_operands = 0 : i64, tpu.core_type = #tpu.core_type<tc>, window_params = [{transform_indices = @transform_0, window_bounds = array<i64: 1, 64, 256>}, {pipeline_mode = #tpu.pipeline_mode<synchronous>, transform_indices = @transform_1, window_bounds = array<i64: 16, 64>}, {pipeline_mode = #tpu.pipeline_mode<synchronous>, transform_indices = @transform_2, window_bounds = array<i64: 16, 1>}, {pipeline_mode = #tpu.pipeline_mode<synchronous>, transform_indices = @transform_3, window_bounds = array<i64: 16, 1>}, {pipeline_mode = #tpu.pipeline_mode<synchronous>, transform_indices = @transform_4, window_bounds = array<i64: 16, 144>}, {pipeline_mode = #tpu.pipeline_mode<synchronous>, transform_indices = @transform_5, window_bounds = array<i64: 16, 1>}, {pipeline_mode = #tpu.pipeline_mode<synchronous>, transform_indices = @transform_6, window_bounds = array<i64: 16, 1>}, {pipeline_mode = #tpu.pipeline_mode<synchronous>, transform_indices = @transform_7, window_bounds = array<i64: 64, 16>}, {pipeline_mode = #tpu.pipeline_mode<synchronous>, transform_indices = @transform_8, window_bounds = array<i64: 64, 1>}, {pipeline_mode = #tpu.pipeline_mode<synchronous>, transform_indices = @transform_9, window_bounds = array<i64: 64, 1>}, {pipeline_mode = #tpu.pipeline_mode<synchronous>, transform_indices = @transform_10, window_bounds = array<i64: 4, 64>}, {pipeline_mode = #tpu.pipeline_mode<synchronous>, transform_indices = @transform_11, window_bounds = array<i64: 64, 4>}, {pipeline_mode = #tpu.pipeline_mode<synchronous>, transform_indices = @transform_12, window_bounds = array<i64: 1, 98>}, {transform_indices = @transform_13, window_bounds = array<i64: 1, 64, 256>}]} {
    %c0 = arith.constant 0 : index
    %c0_0 = arith.constant 0 : index
    %c0_1 = arith.constant 0 : index
    %0 = vector.load %arg1[%c0, %c0_0, %c0_1] : memref<1x64x256xf32, #tpu.memory_space<vmem>>, vector<1x64x256xf32>
    %1 = vector.shape_cast %0 : vector<1x64x256xf32> to vector<64x256xf32>
    %2 = tpu.iota {dimensions = array<i32: 1>} : vector<1x256xi32>
    %c16_i32 = arith.constant 16 : i32
    %c0_i32 = arith.constant 0 : i32
    %3 = arith.cmpi eq, %c16_i32, %c0_i32 : i32
    %c1_i32 = arith.constant 1 : i32
    %4 = arith.select %3, %c1_i32, %c16_i32 : i32
    %5 = vector.broadcast %4 : i32 to vector<1x256xi32>
    %6 = arith.remsi %2, %5 : vector<1x256xi32>
    %c0_i32_2 = arith.constant 0 : i32
    %7 = vector.broadcast %c0_i32_2 : i32 to vector<1x256xi32>
    %8 = arith.cmpi ne, %6, %7 : vector<1x256xi32>
    %c0_i32_3 = arith.constant 0 : i32
    %9 = vector.broadcast %c0_i32_3 : i32 to vector<1x256xi32>
    %10 = arith.cmpi slt, %6, %9 : vector<1x256xi32>
    %c0_i32_4 = arith.constant 0 : i32
    %11 = arith.cmpi slt, %4, %c0_i32_4 : i32
    %12 = vector.broadcast %11 : i1 to vector<1x256xi1>
    %13 = vector.broadcast %12 : vector<1x256xi1> to vector<1x256xi1>
    %14 = arith.xori %10, %13 : vector<1x256xi1>
    %15 = arith.andi %14, %8 : vector<1x256xi1>
    %16 = vector.broadcast %4 : i32 to vector<1x256xi32>
    %17 = arith.addi %6, %16 : vector<1x256xi32>
    %18 = arith.select %15, %17, %6 : vector<1x256xi1>, vector<1x256xi32>
    %c0_5 = arith.constant 0 : index
    %c0_6 = arith.constant 0 : index
    %19 = vector.load %arg2[%c0_5, %c0_6] : memref<16x64xbf16, #tpu.memory_space<vmem>>, vector<16x64xbf16>
    %20 = arith.truncf %1 : vector<64x256xf32> to vector<64x256xbf16>
    %cst = arith.constant dense<0.000000e+00> : vector<16x256xf32>
    %21 = tpu.matmul %19, %20, %cst {dimension_numbers = #tpu.dot_dimension_numbers<[1], [0], [0], [1], [0, 0, 1, 1], [], []>} : vector<16x64xbf16>, vector<64x256xbf16>, vector<16x256xf32> -> vector<16x256xf32>
    %c0_7 = arith.constant 0 : index
    %c0_8 = arith.constant 0 : index
    %22 = vector.load %arg3[%c0_7, %c0_8] : memref<16x1xf32, #tpu.memory_space<vmem>>, vector<16x1xf32>
    %23 = vector.broadcast %22 : vector<16x1xf32> to vector<16x256xf32>
    %24 = arith.mulf %21, %23 : vector<16x256xf32>
    %c0_9 = arith.constant 0 : index
    %c0_10 = arith.constant 0 : index
    %25 = vector.load %arg4[%c0_9, %c0_10] : memref<16x1xf32, #tpu.memory_space<vmem>>, vector<16x1xf32>
    %26 = vector.broadcast %25 : vector<16x1xf32> to vector<16x256xf32>
    %27 = arith.addf %24, %26 : vector<16x256xf32>
    %cst_11 = arith.constant 0.000000e+00 : f32
    %28 = vector.broadcast %cst_11 : f32 to vector<16x256xf32>
    %29 = arith.maximumf %27, %28 : vector<16x256xf32>
    %30 = arith.truncf %29 : vector<16x256xf32> to vector<16x256xbf16>
    %cst_12 = arith.constant 0.000000e+00 : bf16
    %31 = vector.broadcast %cst_12 : bf16 to vector<16x17xbf16>
    %32 = tpu.concatenate %31, %30, %31 in 1 : vector<16x17xbf16>, vector<16x256xbf16>, vector<16x17xbf16> -> vector<16x290xbf16>
    %c-1_i32 = arith.constant -1 : i32
    %33 = vector.broadcast %c-1_i32 : i32 to vector<1x256xi32>
    %34 = arith.addi %18, %33 : vector<1x256xi32>
    %c0_i32_13 = arith.constant 0 : i32
    %35 = vector.broadcast %c0_i32_13 : i32 to vector<1x256xi32>
    %36 = arith.cmpi sge, %34, %35 : vector<1x256xi32>
    %c16_i32_14 = arith.constant 16 : i32
    %37 = vector.broadcast %c16_i32_14 : i32 to vector<1x256xi32>
    %38 = arith.cmpi slt, %34, %37 : vector<1x256xi32>
    %39 = arith.andi %36, %38 : vector<1x256xi1>
    %c0_i32_15 = arith.constant 0 : i32
    %40 = vector.broadcast %c0_i32_15 : i32 to vector<1x256xi32>
    %41 = arith.addi %18, %40 : vector<1x256xi32>
    %c0_i32_16 = arith.constant 0 : i32
    %42 = vector.broadcast %c0_i32_16 : i32 to vector<1x256xi32>
    %43 = arith.cmpi sge, %41, %42 : vector<1x256xi32>
    %c16_i32_17 = arith.constant 16 : i32
    %44 = vector.broadcast %c16_i32_17 : i32 to vector<1x256xi32>
    %45 = arith.cmpi slt, %41, %44 : vector<1x256xi32>
    %46 = arith.andi %43, %45 : vector<1x256xi1>
    %c1_i32_18 = arith.constant 1 : i32
    %47 = vector.broadcast %c1_i32_18 : i32 to vector<1x256xi32>
    %48 = arith.addi %18, %47 : vector<1x256xi32>
    %c0_i32_19 = arith.constant 0 : i32
    %49 = vector.broadcast %c0_i32_19 : i32 to vector<1x256xi32>
    %50 = arith.cmpi sge, %48, %49 : vector<1x256xi32>
    %c16_i32_20 = arith.constant 16 : i32
    %51 = vector.broadcast %c16_i32_20 : i32 to vector<1x256xi32>
    %52 = arith.cmpi slt, %48, %51 : vector<1x256xi32>
    %53 = arith.andi %50, %52 : vector<1x256xi1>
    %54 = vector.extract_strided_slice %32 {offsets = [0, 0], sizes = [16, 256], strides = [1, 1]} : vector<16x290xbf16> to vector<16x256xbf16>
    %cst_21 = arith.constant 0.000000e+00 : f32
    %55 = arith.truncf %cst_21 : f32 to bf16
    %56 = vector.shape_cast %39 : vector<1x256xi1> to vector<1x256xi1>
    %57 = vector.broadcast %56 : vector<1x256xi1> to vector<16x256xi1>
    %58 = vector.broadcast %55 : bf16 to vector<16x256xbf16>
    %59 = arith.select %57, %54, %58 : vector<16x256xi1>, vector<16x256xbf16>
    %60 = vector.extract_strided_slice %32 {offsets = [0, 1], sizes = [16, 256], strides = [1, 1]} : vector<16x290xbf16> to vector<16x256xbf16>
    %cst_22 = arith.constant 0.000000e+00 : f32
    %61 = arith.truncf %cst_22 : f32 to bf16
    %62 = vector.shape_cast %46 : vector<1x256xi1> to vector<1x256xi1>
    %63 = vector.broadcast %62 : vector<1x256xi1> to vector<16x256xi1>
    %64 = vector.broadcast %61 : bf16 to vector<16x256xbf16>
    %65 = arith.select %63, %60, %64 : vector<16x256xi1>, vector<16x256xbf16>
    %66 = vector.extract_strided_slice %32 {offsets = [0, 2], sizes = [16, 256], strides = [1, 1]} : vector<16x290xbf16> to vector<16x256xbf16>
    %cst_23 = arith.constant 0.000000e+00 : f32
    %67 = arith.truncf %cst_23 : f32 to bf16
    %68 = vector.shape_cast %53 : vector<1x256xi1> to vector<1x256xi1>
    %69 = vector.broadcast %68 : vector<1x256xi1> to vector<16x256xi1>
    %70 = vector.broadcast %67 : bf16 to vector<16x256xbf16>
    %71 = arith.select %69, %66, %70 : vector<16x256xi1>, vector<16x256xbf16>
    %72 = vector.extract_strided_slice %32 {offsets = [0, 16], sizes = [16, 256], strides = [1, 1]} : vector<16x290xbf16> to vector<16x256xbf16>
    %cst_24 = arith.constant 0.000000e+00 : f32
    %73 = arith.truncf %cst_24 : f32 to bf16
    %74 = vector.shape_cast %39 : vector<1x256xi1> to vector<1x256xi1>
    %75 = vector.broadcast %74 : vector<1x256xi1> to vector<16x256xi1>
    %76 = vector.broadcast %73 : bf16 to vector<16x256xbf16>
    %77 = arith.select %75, %72, %76 : vector<16x256xi1>, vector<16x256xbf16>
    %78 = vector.extract_strided_slice %32 {offsets = [0, 17], sizes = [16, 256], strides = [1, 1]} : vector<16x290xbf16> to vector<16x256xbf16>
    %cst_25 = arith.constant 0.000000e+00 : f32
    %79 = arith.truncf %cst_25 : f32 to bf16
    %80 = vector.shape_cast %46 : vector<1x256xi1> to vector<1x256xi1>
    %81 = vector.broadcast %80 : vector<1x256xi1> to vector<16x256xi1>
    %82 = vector.broadcast %79 : bf16 to vector<16x256xbf16>
    %83 = arith.select %81, %78, %82 : vector<16x256xi1>, vector<16x256xbf16>
    %84 = vector.extract_strided_slice %32 {offsets = [0, 18], sizes = [16, 256], strides = [1, 1]} : vector<16x290xbf16> to vector<16x256xbf16>
    %cst_26 = arith.constant 0.000000e+00 : f32
    %85 = arith.truncf %cst_26 : f32 to bf16
    %86 = vector.shape_cast %53 : vector<1x256xi1> to vector<1x256xi1>
    %87 = vector.broadcast %86 : vector<1x256xi1> to vector<16x256xi1>
    %88 = vector.broadcast %85 : bf16 to vector<16x256xbf16>
    %89 = arith.select %87, %84, %88 : vector<16x256xi1>, vector<16x256xbf16>
    %90 = vector.extract_strided_slice %32 {offsets = [0, 32], sizes = [16, 256], strides = [1, 1]} : vector<16x290xbf16> to vector<16x256xbf16>
    %cst_27 = arith.constant 0.000000e+00 : f32
    %91 = arith.truncf %cst_27 : f32 to bf16
    %92 = vector.shape_cast %39 : vector<1x256xi1> to vector<1x256xi1>
    %93 = vector.broadcast %92 : vector<1x256xi1> to vector<16x256xi1>
    %94 = vector.broadcast %91 : bf16 to vector<16x256xbf16>
    %95 = arith.select %93, %90, %94 : vector<16x256xi1>, vector<16x256xbf16>
    %96 = vector.extract_strided_slice %32 {offsets = [0, 33], sizes = [16, 256], strides = [1, 1]} : vector<16x290xbf16> to vector<16x256xbf16>
    %cst_28 = arith.constant 0.000000e+00 : f32
    %97 = arith.truncf %cst_28 : f32 to bf16
    %98 = vector.shape_cast %46 : vector<1x256xi1> to vector<1x256xi1>
    %99 = vector.broadcast %98 : vector<1x256xi1> to vector<16x256xi1>
    %100 = vector.broadcast %97 : bf16 to vector<16x256xbf16>
    %101 = arith.select %99, %96, %100 : vector<16x256xi1>, vector<16x256xbf16>
    %102 = vector.extract_strided_slice %32 {offsets = [0, 34], sizes = [16, 256], strides = [1, 1]} : vector<16x290xbf16> to vector<16x256xbf16>
    %cst_29 = arith.constant 0.000000e+00 : f32
    %103 = arith.truncf %cst_29 : f32 to bf16
    %104 = vector.shape_cast %53 : vector<1x256xi1> to vector<1x256xi1>
    %105 = vector.broadcast %104 : vector<1x256xi1> to vector<16x256xi1>
    %106 = vector.broadcast %103 : bf16 to vector<16x256xbf16>
    %107 = arith.select %105, %102, %106 : vector<16x256xi1>, vector<16x256xbf16>
    %108 = tpu.concatenate %59, %65, %71, %77, %83, %89, %95, %101, %107 in 0 : vector<16x256xbf16>, vector<16x256xbf16>, vector<16x256xbf16>, vector<16x256xbf16>, vector<16x256xbf16>, vector<16x256xbf16>, vector<16x256xbf16>, vector<16x256xbf16>, vector<16x256xbf16> -> vector<144x256xbf16>
    %c0_30 = arith.constant 0 : index
    %c0_31 = arith.constant 0 : index
    %109 = vector.load %arg5[%c0_30, %c0_31] : memref<16x144xbf16, #tpu.memory_space<vmem>>, vector<16x144xbf16>
    %cst_32 = arith.constant dense<0.000000e+00> : vector<16x256xf32>
    %110 = tpu.matmul %109, %108, %cst_32 {dimension_numbers = #tpu.dot_dimension_numbers<[1], [0], [0], [1], [0, 0, 1, 1], [], []>} : vector<16x144xbf16>, vector<144x256xbf16>, vector<16x256xf32> -> vector<16x256xf32>
    %c0_33 = arith.constant 0 : index
    %c0_34 = arith.constant 0 : index
    %111 = vector.load %arg6[%c0_33, %c0_34] : memref<16x1xf32, #tpu.memory_space<vmem>>, vector<16x1xf32>
    %112 = vector.broadcast %111 : vector<16x1xf32> to vector<16x256xf32>
    %113 = arith.mulf %110, %112 : vector<16x256xf32>
    %c0_35 = arith.constant 0 : index
    %c0_36 = arith.constant 0 : index
    %114 = vector.load %arg7[%c0_35, %c0_36] : memref<16x1xf32, #tpu.memory_space<vmem>>, vector<16x1xf32>
    %115 = vector.broadcast %114 : vector<16x1xf32> to vector<16x256xf32>
    %116 = arith.addf %113, %115 : vector<16x256xf32>
    %cst_37 = arith.constant 0.000000e+00 : f32
    %117 = vector.broadcast %cst_37 : f32 to vector<16x256xf32>
    %118 = arith.maximumf %116, %117 : vector<16x256xf32>
    %c0_38 = arith.constant 0 : index
    %c0_39 = arith.constant 0 : index
    %119 = vector.load %arg8[%c0_38, %c0_39] : memref<64x16xbf16, #tpu.memory_space<vmem>>, vector<64x16xbf16>
    %120 = arith.truncf %118 : vector<16x256xf32> to vector<16x256xbf16>
    %cst_40 = arith.constant dense<0.000000e+00> : vector<64x256xf32>
    %121 = tpu.matmul %119, %120, %cst_40 {dimension_numbers = #tpu.dot_dimension_numbers<[1], [0], [0], [1], [0, 0, 1, 1], [], []>} : vector<64x16xbf16>, vector<16x256xbf16>, vector<64x256xf32> -> vector<64x256xf32>
    %c0_41 = arith.constant 0 : index
    %c0_42 = arith.constant 0 : index
    %122 = vector.load %arg9[%c0_41, %c0_42] : memref<64x1xf32, #tpu.memory_space<vmem>>, vector<64x1xf32>
    %123 = vector.broadcast %122 : vector<64x1xf32> to vector<64x256xf32>
    %124 = arith.mulf %121, %123 : vector<64x256xf32>
    %c0_43 = arith.constant 0 : index
    %c0_44 = arith.constant 0 : index
    %125 = vector.load %arg10[%c0_43, %c0_44] : memref<64x1xf32, #tpu.memory_space<vmem>>, vector<64x1xf32>
    %126 = vector.broadcast %125 : vector<64x1xf32> to vector<64x256xf32>
    %127 = arith.addf %124, %126 : vector<64x256xf32>
    %cst_45 = arith.constant dense<0.000000e+00> : vector<64xf32>
    %128 = vector.multi_reduction <add>, %127, %cst_45 [1] : vector<64x256xf32> to vector<64xf32>
    %129 = vector.shape_cast %128 : vector<64xf32> to vector<64x1xf32>
    %cst_46 = arith.constant 2.560000e+02 : f32
    %130 = vector.broadcast %cst_46 : f32 to vector<64x1xf32>
    %131 = arith.divf %129, %130 : vector<64x1xf32>
    %cst_47 = arith.constant dense<0xFF800000> : vector<64xf32>
    %132 = vector.multi_reduction <maximumf>, %127, %cst_47 [1] : vector<64x256xf32> to vector<64xf32>
    %133 = vector.shape_cast %132 : vector<64xf32> to vector<64x1xf32>
    %134 = tpu.concatenate %131, %133 in 1 : vector<64x1xf32>, vector<64x1xf32> -> vector<64x2xf32>
    %135 = arith.truncf %134 : vector<64x2xf32> to vector<64x2xbf16>
    %c0_48 = arith.constant 0 : index
    %c0_49 = arith.constant 0 : index
    %136 = vector.load %arg11[%c0_48, %c0_49] : memref<4x64xbf16, #tpu.memory_space<vmem>>, vector<4x64xbf16>
    %cst_50 = arith.constant dense<0.000000e+00> : vector<4x2xf32>
    %137 = tpu.matmul %136, %135, %cst_50 {dimension_numbers = #tpu.dot_dimension_numbers<[1], [0], [0], [1], [0, 0, 1, 1], [], []>} : vector<4x64xbf16>, vector<64x2xbf16>, vector<4x2xf32> -> vector<4x2xf32>
    %cst_51 = arith.constant 0.000000e+00 : f32
    %138 = vector.broadcast %cst_51 : f32 to vector<4x2xf32>
    %139 = arith.maximumf %137, %138 : vector<4x2xf32>
    %c0_52 = arith.constant 0 : index
    %c0_53 = arith.constant 0 : index
    %140 = vector.load %arg12[%c0_52, %c0_53] : memref<64x4xbf16, #tpu.memory_space<vmem>>, vector<64x4xbf16>
    %141 = arith.truncf %139 : vector<4x2xf32> to vector<4x2xbf16>
    %cst_54 = arith.constant dense<0.000000e+00> : vector<64x2xf32>
    %142 = tpu.matmul %140, %141, %cst_54 {dimension_numbers = #tpu.dot_dimension_numbers<[1], [0], [0], [1], [0, 0, 1, 1], [], []>} : vector<64x4xbf16>, vector<4x2xbf16>, vector<64x2xf32> -> vector<64x2xf32>
    %143 = vector.extract_strided_slice %142 {offsets = [0, 0], sizes = [64, 1], strides = [1, 1]} : vector<64x2xf32> to vector<64x1xf32>
    %144 = vector.extract_strided_slice %142 {offsets = [0, 1], sizes = [64, 1], strides = [1, 1]} : vector<64x2xf32> to vector<64x1xf32>
    %145 = arith.addf %143, %144 : vector<64x1xf32>
    %146 = arith.negf %145 : vector<64x1xf32>
    %147 = math.exp %146 : vector<64x1xf32>
    %cst_55 = arith.constant 1.000000e+00 : f32
    %148 = vector.broadcast %cst_55 : f32 to vector<64x1xf32>
    %149 = arith.addf %148, %147 : vector<64x1xf32>
    %150 = arith.divf %148, %149 : vector<64x1xf32>
    %151 = vector.broadcast %150 : vector<64x1xf32> to vector<64x256xf32>
    %152 = arith.mulf %127, %151 : vector<64x256xf32>
    %cst_56 = arith.constant dense<0.000000e+00> : vector<256xf32>
    %153 = vector.multi_reduction <add>, %152, %cst_56 [0] : vector<64x256xf32> to vector<256xf32>
    %154 = vector.shape_cast %153 : vector<256xf32> to vector<1x256xf32>
    %cst_57 = arith.constant 6.400000e+01 : f32
    %155 = vector.broadcast %cst_57 : f32 to vector<1x256xf32>
    %156 = arith.divf %154, %155 : vector<1x256xf32>
    %cst_58 = arith.constant dense<0xFF800000> : vector<256xf32>
    %157 = vector.multi_reduction <maximumf>, %152, %cst_58 [0] : vector<64x256xf32> to vector<256xf32>
    %158 = vector.shape_cast %157 : vector<256xf32> to vector<1x256xf32>
    %159 = tpu.concatenate %156, %158 in 0 : vector<1x256xf32>, vector<1x256xf32> -> vector<2x256xf32>
    %160 = arith.truncf %159 : vector<2x256xf32> to vector<2x256xbf16>
    %cst_59 = arith.constant 0.000000e+00 : bf16
    %161 = vector.broadcast %cst_59 : bf16 to vector<2x51xbf16>
    %162 = tpu.concatenate %161, %160, %161 in 1 : vector<2x51xbf16>, vector<2x256xbf16>, vector<2x51xbf16> -> vector<2x358xbf16>
    %c-3_i32 = arith.constant -3 : i32
    %163 = vector.broadcast %c-3_i32 : i32 to vector<1x256xi32>
    %164 = arith.addi %18, %163 : vector<1x256xi32>
    %c0_i32_60 = arith.constant 0 : i32
    %165 = vector.broadcast %c0_i32_60 : i32 to vector<1x256xi32>
    %166 = arith.cmpi sge, %164, %165 : vector<1x256xi32>
    %c16_i32_61 = arith.constant 16 : i32
    %167 = vector.broadcast %c16_i32_61 : i32 to vector<1x256xi32>
    %168 = arith.cmpi slt, %164, %167 : vector<1x256xi32>
    %169 = arith.andi %166, %168 : vector<1x256xi1>
    %170 = vector.extract_strided_slice %162 {offsets = [0, 0], sizes = [2, 256], strides = [1, 1]} : vector<2x358xbf16> to vector<2x256xbf16>
    %cst_62 = arith.constant 0.000000e+00 : f32
    %171 = arith.truncf %cst_62 : f32 to bf16
    %172 = vector.shape_cast %169 : vector<1x256xi1> to vector<1x256xi1>
    %173 = vector.broadcast %172 : vector<1x256xi1> to vector<2x256xi1>
    %174 = vector.broadcast %171 : bf16 to vector<2x256xbf16>
    %175 = arith.select %173, %170, %174 : vector<2x256xi1>, vector<2x256xbf16>
    %176 = vector.extract_strided_slice %162 {offsets = [0, 16], sizes = [2, 256], strides = [1, 1]} : vector<2x358xbf16> to vector<2x256xbf16>
    %cst_63 = arith.constant 0.000000e+00 : f32
    %177 = arith.truncf %cst_63 : f32 to bf16
    %178 = vector.shape_cast %169 : vector<1x256xi1> to vector<1x256xi1>
    %179 = vector.broadcast %178 : vector<1x256xi1> to vector<2x256xi1>
    %180 = vector.broadcast %177 : bf16 to vector<2x256xbf16>
    %181 = arith.select %179, %176, %180 : vector<2x256xi1>, vector<2x256xbf16>
    %182 = vector.extract_strided_slice %162 {offsets = [0, 32], sizes = [2, 256], strides = [1, 1]} : vector<2x358xbf16> to vector<2x256xbf16>
    %cst_64 = arith.constant 0.000000e+00 : f32
    %183 = arith.truncf %cst_64 : f32 to bf16
    %184 = vector.shape_cast %169 : vector<1x256xi1> to vector<1x256xi1>
    %185 = vector.broadcast %184 : vector<1x256xi1> to vector<2x256xi1>
    %186 = vector.broadcast %183 : bf16 to vector<2x256xbf16>
    %187 = arith.select %185, %182, %186 : vector<2x256xi1>, vector<2x256xbf16>
    %188 = vector.extract_strided_slice %162 {offsets = [0, 48], sizes = [2, 256], strides = [1, 1]} : vector<2x358xbf16> to vector<2x256xbf16>
    %cst_65 = arith.constant 0.000000e+00 : f32
    %189 = arith.truncf %cst_65 : f32 to bf16
    %190 = vector.shape_cast %169 : vector<1x256xi1> to vector<1x256xi1>
    %191 = vector.broadcast %190 : vector<1x256xi1> to vector<2x256xi1>
    %192 = vector.broadcast %189 : bf16 to vector<2x256xbf16>
    %193 = arith.select %191, %188, %192 : vector<2x256xi1>, vector<2x256xbf16>
    %194 = vector.extract_strided_slice %162 {offsets = [0, 64], sizes = [2, 256], strides = [1, 1]} : vector<2x358xbf16> to vector<2x256xbf16>
    %cst_66 = arith.constant 0.000000e+00 : f32
    %195 = arith.truncf %cst_66 : f32 to bf16
    %196 = vector.shape_cast %169 : vector<1x256xi1> to vector<1x256xi1>
    %197 = vector.broadcast %196 : vector<1x256xi1> to vector<2x256xi1>
    %198 = vector.broadcast %195 : bf16 to vector<2x256xbf16>
    %199 = arith.select %197, %194, %198 : vector<2x256xi1>, vector<2x256xbf16>
    %200 = vector.extract_strided_slice %162 {offsets = [0, 80], sizes = [2, 256], strides = [1, 1]} : vector<2x358xbf16> to vector<2x256xbf16>
    %cst_67 = arith.constant 0.000000e+00 : f32
    %201 = arith.truncf %cst_67 : f32 to bf16
    %202 = vector.shape_cast %169 : vector<1x256xi1> to vector<1x256xi1>
    %203 = vector.broadcast %202 : vector<1x256xi1> to vector<2x256xi1>
    %204 = vector.broadcast %201 : bf16 to vector<2x256xbf16>
    %205 = arith.select %203, %200, %204 : vector<2x256xi1>, vector<2x256xbf16>
    %206 = vector.extract_strided_slice %162 {offsets = [0, 96], sizes = [2, 256], strides = [1, 1]} : vector<2x358xbf16> to vector<2x256xbf16>
    %cst_68 = arith.constant 0.000000e+00 : f32
    %207 = arith.truncf %cst_68 : f32 to bf16
    %208 = vector.shape_cast %169 : vector<1x256xi1> to vector<1x256xi1>
    %209 = vector.broadcast %208 : vector<1x256xi1> to vector<2x256xi1>
    %210 = vector.broadcast %207 : bf16 to vector<2x256xbf16>
    %211 = arith.select %209, %206, %210 : vector<2x256xi1>, vector<2x256xbf16>
    %c-2_i32 = arith.constant -2 : i32
    %212 = vector.broadcast %c-2_i32 : i32 to vector<1x256xi32>
    %213 = arith.addi %18, %212 : vector<1x256xi32>
    %c0_i32_69 = arith.constant 0 : i32
    %214 = vector.broadcast %c0_i32_69 : i32 to vector<1x256xi32>
    %215 = arith.cmpi sge, %213, %214 : vector<1x256xi32>
    %c16_i32_70 = arith.constant 16 : i32
    %216 = vector.broadcast %c16_i32_70 : i32 to vector<1x256xi32>
    %217 = arith.cmpi slt, %213, %216 : vector<1x256xi32>
    %218 = arith.andi %215, %217 : vector<1x256xi1>
    %219 = vector.extract_strided_slice %162 {offsets = [0, 1], sizes = [2, 256], strides = [1, 1]} : vector<2x358xbf16> to vector<2x256xbf16>
    %cst_71 = arith.constant 0.000000e+00 : f32
    %220 = arith.truncf %cst_71 : f32 to bf16
    %221 = vector.shape_cast %218 : vector<1x256xi1> to vector<1x256xi1>
    %222 = vector.broadcast %221 : vector<1x256xi1> to vector<2x256xi1>
    %223 = vector.broadcast %220 : bf16 to vector<2x256xbf16>
    %224 = arith.select %222, %219, %223 : vector<2x256xi1>, vector<2x256xbf16>
    %225 = vector.extract_strided_slice %162 {offsets = [0, 17], sizes = [2, 256], strides = [1, 1]} : vector<2x358xbf16> to vector<2x256xbf16>
    %cst_72 = arith.constant 0.000000e+00 : f32
    %226 = arith.truncf %cst_72 : f32 to bf16
    %227 = vector.shape_cast %218 : vector<1x256xi1> to vector<1x256xi1>
    %228 = vector.broadcast %227 : vector<1x256xi1> to vector<2x256xi1>
    %229 = vector.broadcast %226 : bf16 to vector<2x256xbf16>
    %230 = arith.select %228, %225, %229 : vector<2x256xi1>, vector<2x256xbf16>
    %231 = vector.extract_strided_slice %162 {offsets = [0, 33], sizes = [2, 256], strides = [1, 1]} : vector<2x358xbf16> to vector<2x256xbf16>
    %cst_73 = arith.constant 0.000000e+00 : f32
    %232 = arith.truncf %cst_73 : f32 to bf16
    %233 = vector.shape_cast %218 : vector<1x256xi1> to vector<1x256xi1>
    %234 = vector.broadcast %233 : vector<1x256xi1> to vector<2x256xi1>
    %235 = vector.broadcast %232 : bf16 to vector<2x256xbf16>
    %236 = arith.select %234, %231, %235 : vector<2x256xi1>, vector<2x256xbf16>
    %237 = vector.extract_strided_slice %162 {offsets = [0, 49], sizes = [2, 256], strides = [1, 1]} : vector<2x358xbf16> to vector<2x256xbf16>
    %cst_74 = arith.constant 0.000000e+00 : f32
    %238 = arith.truncf %cst_74 : f32 to bf16
    %239 = vector.shape_cast %218 : vector<1x256xi1> to vector<1x256xi1>
    %240 = vector.broadcast %239 : vector<1x256xi1> to vector<2x256xi1>
    %241 = vector.broadcast %238 : bf16 to vector<2x256xbf16>
    %242 = arith.select %240, %237, %241 : vector<2x256xi1>, vector<2x256xbf16>
    %243 = vector.extract_strided_slice %162 {offsets = [0, 65], sizes = [2, 256], strides = [1, 1]} : vector<2x358xbf16> to vector<2x256xbf16>
    %cst_75 = arith.constant 0.000000e+00 : f32
    %244 = arith.truncf %cst_75 : f32 to bf16
    %245 = vector.shape_cast %218 : vector<1x256xi1> to vector<1x256xi1>
    %246 = vector.broadcast %245 : vector<1x256xi1> to vector<2x256xi1>
    %247 = vector.broadcast %244 : bf16 to vector<2x256xbf16>
    %248 = arith.select %246, %243, %247 : vector<2x256xi1>, vector<2x256xbf16>
    %249 = vector.extract_strided_slice %162 {offsets = [0, 81], sizes = [2, 256], strides = [1, 1]} : vector<2x358xbf16> to vector<2x256xbf16>
    %cst_76 = arith.constant 0.000000e+00 : f32
    %250 = arith.truncf %cst_76 : f32 to bf16
    %251 = vector.shape_cast %218 : vector<1x256xi1> to vector<1x256xi1>
    %252 = vector.broadcast %251 : vector<1x256xi1> to vector<2x256xi1>
    %253 = vector.broadcast %250 : bf16 to vector<2x256xbf16>
    %254 = arith.select %252, %249, %253 : vector<2x256xi1>, vector<2x256xbf16>
    %255 = vector.extract_strided_slice %162 {offsets = [0, 97], sizes = [2, 256], strides = [1, 1]} : vector<2x358xbf16> to vector<2x256xbf16>
    %cst_77 = arith.constant 0.000000e+00 : f32
    %256 = arith.truncf %cst_77 : f32 to bf16
    %257 = vector.shape_cast %218 : vector<1x256xi1> to vector<1x256xi1>
    %258 = vector.broadcast %257 : vector<1x256xi1> to vector<2x256xi1>
    %259 = vector.broadcast %256 : bf16 to vector<2x256xbf16>
    %260 = arith.select %258, %255, %259 : vector<2x256xi1>, vector<2x256xbf16>
    %c-1_i32_78 = arith.constant -1 : i32
    %261 = vector.broadcast %c-1_i32_78 : i32 to vector<1x256xi32>
    %262 = arith.addi %18, %261 : vector<1x256xi32>
    %c0_i32_79 = arith.constant 0 : i32
    %263 = vector.broadcast %c0_i32_79 : i32 to vector<1x256xi32>
    %264 = arith.cmpi sge, %262, %263 : vector<1x256xi32>
    %c16_i32_80 = arith.constant 16 : i32
    %265 = vector.broadcast %c16_i32_80 : i32 to vector<1x256xi32>
    %266 = arith.cmpi slt, %262, %265 : vector<1x256xi32>
    %267 = arith.andi %264, %266 : vector<1x256xi1>
    %268 = vector.extract_strided_slice %162 {offsets = [0, 2], sizes = [2, 256], strides = [1, 1]} : vector<2x358xbf16> to vector<2x256xbf16>
    %cst_81 = arith.constant 0.000000e+00 : f32
    %269 = arith.truncf %cst_81 : f32 to bf16
    %270 = vector.shape_cast %267 : vector<1x256xi1> to vector<1x256xi1>
    %271 = vector.broadcast %270 : vector<1x256xi1> to vector<2x256xi1>
    %272 = vector.broadcast %269 : bf16 to vector<2x256xbf16>
    %273 = arith.select %271, %268, %272 : vector<2x256xi1>, vector<2x256xbf16>
    %274 = vector.extract_strided_slice %162 {offsets = [0, 18], sizes = [2, 256], strides = [1, 1]} : vector<2x358xbf16> to vector<2x256xbf16>
    %cst_82 = arith.constant 0.000000e+00 : f32
    %275 = arith.truncf %cst_82 : f32 to bf16
    %276 = vector.shape_cast %267 : vector<1x256xi1> to vector<1x256xi1>
    %277 = vector.broadcast %276 : vector<1x256xi1> to vector<2x256xi1>
    %278 = vector.broadcast %275 : bf16 to vector<2x256xbf16>
    %279 = arith.select %277, %274, %278 : vector<2x256xi1>, vector<2x256xbf16>
    %280 = vector.extract_strided_slice %162 {offsets = [0, 34], sizes = [2, 256], strides = [1, 1]} : vector<2x358xbf16> to vector<2x256xbf16>
    %cst_83 = arith.constant 0.000000e+00 : f32
    %281 = arith.truncf %cst_83 : f32 to bf16
    %282 = vector.shape_cast %267 : vector<1x256xi1> to vector<1x256xi1>
    %283 = vector.broadcast %282 : vector<1x256xi1> to vector<2x256xi1>
    %284 = vector.broadcast %281 : bf16 to vector<2x256xbf16>
    %285 = arith.select %283, %280, %284 : vector<2x256xi1>, vector<2x256xbf16>
    %286 = vector.extract_strided_slice %162 {offsets = [0, 50], sizes = [2, 256], strides = [1, 1]} : vector<2x358xbf16> to vector<2x256xbf16>
    %cst_84 = arith.constant 0.000000e+00 : f32
    %287 = arith.truncf %cst_84 : f32 to bf16
    %288 = vector.shape_cast %267 : vector<1x256xi1> to vector<1x256xi1>
    %289 = vector.broadcast %288 : vector<1x256xi1> to vector<2x256xi1>
    %290 = vector.broadcast %287 : bf16 to vector<2x256xbf16>
    %291 = arith.select %289, %286, %290 : vector<2x256xi1>, vector<2x256xbf16>
    %292 = vector.extract_strided_slice %162 {offsets = [0, 66], sizes = [2, 256], strides = [1, 1]} : vector<2x358xbf16> to vector<2x256xbf16>
    %cst_85 = arith.constant 0.000000e+00 : f32
    %293 = arith.truncf %cst_85 : f32 to bf16
    %294 = vector.shape_cast %267 : vector<1x256xi1> to vector<1x256xi1>
    %295 = vector.broadcast %294 : vector<1x256xi1> to vector<2x256xi1>
    %296 = vector.broadcast %293 : bf16 to vector<2x256xbf16>
    %297 = arith.select %295, %292, %296 : vector<2x256xi1>, vector<2x256xbf16>
    %298 = vector.extract_strided_slice %162 {offsets = [0, 82], sizes = [2, 256], strides = [1, 1]} : vector<2x358xbf16> to vector<2x256xbf16>
    %cst_86 = arith.constant 0.000000e+00 : f32
    %299 = arith.truncf %cst_86 : f32 to bf16
    %300 = vector.shape_cast %267 : vector<1x256xi1> to vector<1x256xi1>
    %301 = vector.broadcast %300 : vector<1x256xi1> to vector<2x256xi1>
    %302 = vector.broadcast %299 : bf16 to vector<2x256xbf16>
    %303 = arith.select %301, %298, %302 : vector<2x256xi1>, vector<2x256xbf16>
    %304 = vector.extract_strided_slice %162 {offsets = [0, 98], sizes = [2, 256], strides = [1, 1]} : vector<2x358xbf16> to vector<2x256xbf16>
    %cst_87 = arith.constant 0.000000e+00 : f32
    %305 = arith.truncf %cst_87 : f32 to bf16
    %306 = vector.shape_cast %267 : vector<1x256xi1> to vector<1x256xi1>
    %307 = vector.broadcast %306 : vector<1x256xi1> to vector<2x256xi1>
    %308 = vector.broadcast %305 : bf16 to vector<2x256xbf16>
    %309 = arith.select %307, %304, %308 : vector<2x256xi1>, vector<2x256xbf16>
    %c0_i32_88 = arith.constant 0 : i32
    %310 = vector.broadcast %c0_i32_88 : i32 to vector<1x256xi32>
    %311 = arith.addi %18, %310 : vector<1x256xi32>
    %c0_i32_89 = arith.constant 0 : i32
    %312 = vector.broadcast %c0_i32_89 : i32 to vector<1x256xi32>
    %313 = arith.cmpi sge, %311, %312 : vector<1x256xi32>
    %c16_i32_90 = arith.constant 16 : i32
    %314 = vector.broadcast %c16_i32_90 : i32 to vector<1x256xi32>
    %315 = arith.cmpi slt, %311, %314 : vector<1x256xi32>
    %316 = arith.andi %313, %315 : vector<1x256xi1>
    %317 = vector.extract_strided_slice %162 {offsets = [0, 3], sizes = [2, 256], strides = [1, 1]} : vector<2x358xbf16> to vector<2x256xbf16>
    %cst_91 = arith.constant 0.000000e+00 : f32
    %318 = arith.truncf %cst_91 : f32 to bf16
    %319 = vector.shape_cast %316 : vector<1x256xi1> to vector<1x256xi1>
    %320 = vector.broadcast %319 : vector<1x256xi1> to vector<2x256xi1>
    %321 = vector.broadcast %318 : bf16 to vector<2x256xbf16>
    %322 = arith.select %320, %317, %321 : vector<2x256xi1>, vector<2x256xbf16>
    %323 = vector.extract_strided_slice %162 {offsets = [0, 19], sizes = [2, 256], strides = [1, 1]} : vector<2x358xbf16> to vector<2x256xbf16>
    %cst_92 = arith.constant 0.000000e+00 : f32
    %324 = arith.truncf %cst_92 : f32 to bf16
    %325 = vector.shape_cast %316 : vector<1x256xi1> to vector<1x256xi1>
    %326 = vector.broadcast %325 : vector<1x256xi1> to vector<2x256xi1>
    %327 = vector.broadcast %324 : bf16 to vector<2x256xbf16>
    %328 = arith.select %326, %323, %327 : vector<2x256xi1>, vector<2x256xbf16>
    %329 = vector.extract_strided_slice %162 {offsets = [0, 35], sizes = [2, 256], strides = [1, 1]} : vector<2x358xbf16> to vector<2x256xbf16>
    %cst_93 = arith.constant 0.000000e+00 : f32
    %330 = arith.truncf %cst_93 : f32 to bf16
    %331 = vector.shape_cast %316 : vector<1x256xi1> to vector<1x256xi1>
    %332 = vector.broadcast %331 : vector<1x256xi1> to vector<2x256xi1>
    %333 = vector.broadcast %330 : bf16 to vector<2x256xbf16>
    %334 = arith.select %332, %329, %333 : vector<2x256xi1>, vector<2x256xbf16>
    %335 = vector.extract_strided_slice %162 {offsets = [0, 51], sizes = [2, 256], strides = [1, 1]} : vector<2x358xbf16> to vector<2x256xbf16>
    %cst_94 = arith.constant 0.000000e+00 : f32
    %336 = arith.truncf %cst_94 : f32 to bf16
    %337 = vector.shape_cast %316 : vector<1x256xi1> to vector<1x256xi1>
    %338 = vector.broadcast %337 : vector<1x256xi1> to vector<2x256xi1>
    %339 = vector.broadcast %336 : bf16 to vector<2x256xbf16>
    %340 = arith.select %338, %335, %339 : vector<2x256xi1>, vector<2x256xbf16>
    %341 = vector.extract_strided_slice %162 {offsets = [0, 67], sizes = [2, 256], strides = [1, 1]} : vector<2x358xbf16> to vector<2x256xbf16>
    %cst_95 = arith.constant 0.000000e+00 : f32
    %342 = arith.truncf %cst_95 : f32 to bf16
    %343 = vector.shape_cast %316 : vector<1x256xi1> to vector<1x256xi1>
    %344 = vector.broadcast %343 : vector<1x256xi1> to vector<2x256xi1>
    %345 = vector.broadcast %342 : bf16 to vector<2x256xbf16>
    %346 = arith.select %344, %341, %345 : vector<2x256xi1>, vector<2x256xbf16>
    %347 = vector.extract_strided_slice %162 {offsets = [0, 83], sizes = [2, 256], strides = [1, 1]} : vector<2x358xbf16> to vector<2x256xbf16>
    %cst_96 = arith.constant 0.000000e+00 : f32
    %348 = arith.truncf %cst_96 : f32 to bf16
    %349 = vector.shape_cast %316 : vector<1x256xi1> to vector<1x256xi1>
    %350 = vector.broadcast %349 : vector<1x256xi1> to vector<2x256xi1>
    %351 = vector.broadcast %348 : bf16 to vector<2x256xbf16>
    %352 = arith.select %350, %347, %351 : vector<2x256xi1>, vector<2x256xbf16>
    %353 = vector.extract_strided_slice %162 {offsets = [0, 99], sizes = [2, 256], strides = [1, 1]} : vector<2x358xbf16> to vector<2x256xbf16>
    %cst_97 = arith.constant 0.000000e+00 : f32
    %354 = arith.truncf %cst_97 : f32 to bf16
    %355 = vector.shape_cast %316 : vector<1x256xi1> to vector<1x256xi1>
    %356 = vector.broadcast %355 : vector<1x256xi1> to vector<2x256xi1>
    %357 = vector.broadcast %354 : bf16 to vector<2x256xbf16>
    %358 = arith.select %356, %353, %357 : vector<2x256xi1>, vector<2x256xbf16>
    %c1_i32_98 = arith.constant 1 : i32
    %359 = vector.broadcast %c1_i32_98 : i32 to vector<1x256xi32>
    %360 = arith.addi %18, %359 : vector<1x256xi32>
    %c0_i32_99 = arith.constant 0 : i32
    %361 = vector.broadcast %c0_i32_99 : i32 to vector<1x256xi32>
    %362 = arith.cmpi sge, %360, %361 : vector<1x256xi32>
    %c16_i32_100 = arith.constant 16 : i32
    %363 = vector.broadcast %c16_i32_100 : i32 to vector<1x256xi32>
    %364 = arith.cmpi slt, %360, %363 : vector<1x256xi32>
    %365 = arith.andi %362, %364 : vector<1x256xi1>
    %366 = vector.extract_strided_slice %162 {offsets = [0, 4], sizes = [2, 256], strides = [1, 1]} : vector<2x358xbf16> to vector<2x256xbf16>
    %cst_101 = arith.constant 0.000000e+00 : f32
    %367 = arith.truncf %cst_101 : f32 to bf16
    %368 = vector.shape_cast %365 : vector<1x256xi1> to vector<1x256xi1>
    %369 = vector.broadcast %368 : vector<1x256xi1> to vector<2x256xi1>
    %370 = vector.broadcast %367 : bf16 to vector<2x256xbf16>
    %371 = arith.select %369, %366, %370 : vector<2x256xi1>, vector<2x256xbf16>
    %372 = vector.extract_strided_slice %162 {offsets = [0, 20], sizes = [2, 256], strides = [1, 1]} : vector<2x358xbf16> to vector<2x256xbf16>
    %cst_102 = arith.constant 0.000000e+00 : f32
    %373 = arith.truncf %cst_102 : f32 to bf16
    %374 = vector.shape_cast %365 : vector<1x256xi1> to vector<1x256xi1>
    %375 = vector.broadcast %374 : vector<1x256xi1> to vector<2x256xi1>
    %376 = vector.broadcast %373 : bf16 to vector<2x256xbf16>
    %377 = arith.select %375, %372, %376 : vector<2x256xi1>, vector<2x256xbf16>
    %378 = vector.extract_strided_slice %162 {offsets = [0, 36], sizes = [2, 256], strides = [1, 1]} : vector<2x358xbf16> to vector<2x256xbf16>
    %cst_103 = arith.constant 0.000000e+00 : f32
    %379 = arith.truncf %cst_103 : f32 to bf16
    %380 = vector.shape_cast %365 : vector<1x256xi1> to vector<1x256xi1>
    %381 = vector.broadcast %380 : vector<1x256xi1> to vector<2x256xi1>
    %382 = vector.broadcast %379 : bf16 to vector<2x256xbf16>
    %383 = arith.select %381, %378, %382 : vector<2x256xi1>, vector<2x256xbf16>
    %384 = vector.extract_strided_slice %162 {offsets = [0, 52], sizes = [2, 256], strides = [1, 1]} : vector<2x358xbf16> to vector<2x256xbf16>
    %cst_104 = arith.constant 0.000000e+00 : f32
    %385 = arith.truncf %cst_104 : f32 to bf16
    %386 = vector.shape_cast %365 : vector<1x256xi1> to vector<1x256xi1>
    %387 = vector.broadcast %386 : vector<1x256xi1> to vector<2x256xi1>
    %388 = vector.broadcast %385 : bf16 to vector<2x256xbf16>
    %389 = arith.select %387, %384, %388 : vector<2x256xi1>, vector<2x256xbf16>
    %390 = vector.extract_strided_slice %162 {offsets = [0, 68], sizes = [2, 256], strides = [1, 1]} : vector<2x358xbf16> to vector<2x256xbf16>
    %cst_105 = arith.constant 0.000000e+00 : f32
    %391 = arith.truncf %cst_105 : f32 to bf16
    %392 = vector.shape_cast %365 : vector<1x256xi1> to vector<1x256xi1>
    %393 = vector.broadcast %392 : vector<1x256xi1> to vector<2x256xi1>
    %394 = vector.broadcast %391 : bf16 to vector<2x256xbf16>
    %395 = arith.select %393, %390, %394 : vector<2x256xi1>, vector<2x256xbf16>
    %396 = vector.extract_strided_slice %162 {offsets = [0, 84], sizes = [2, 256], strides = [1, 1]} : vector<2x358xbf16> to vector<2x256xbf16>
    %cst_106 = arith.constant 0.000000e+00 : f32
    %397 = arith.truncf %cst_106 : f32 to bf16
    %398 = vector.shape_cast %365 : vector<1x256xi1> to vector<1x256xi1>
    %399 = vector.broadcast %398 : vector<1x256xi1> to vector<2x256xi1>
    %400 = vector.broadcast %397 : bf16 to vector<2x256xbf16>
    %401 = arith.select %399, %396, %400 : vector<2x256xi1>, vector<2x256xbf16>
    %402 = vector.extract_strided_slice %162 {offsets = [0, 100], sizes = [2, 256], strides = [1, 1]} : vector<2x358xbf16> to vector<2x256xbf16>
    %cst_107 = arith.constant 0.000000e+00 : f32
    %403 = arith.truncf %cst_107 : f32 to bf16
    %404 = vector.shape_cast %365 : vector<1x256xi1> to vector<1x256xi1>
    %405 = vector.broadcast %404 : vector<1x256xi1> to vector<2x256xi1>
    %406 = vector.broadcast %403 : bf16 to vector<2x256xbf16>
    %407 = arith.select %405, %402, %406 : vector<2x256xi1>, vector<2x256xbf16>
    %c2_i32 = arith.constant 2 : i32
    %408 = vector.broadcast %c2_i32 : i32 to vector<1x256xi32>
    %409 = arith.addi %18, %408 : vector<1x256xi32>
    %c0_i32_108 = arith.constant 0 : i32
    %410 = vector.broadcast %c0_i32_108 : i32 to vector<1x256xi32>
    %411 = arith.cmpi sge, %409, %410 : vector<1x256xi32>
    %c16_i32_109 = arith.constant 16 : i32
    %412 = vector.broadcast %c16_i32_109 : i32 to vector<1x256xi32>
    %413 = arith.cmpi slt, %409, %412 : vector<1x256xi32>
    %414 = arith.andi %411, %413 : vector<1x256xi1>
    %415 = vector.extract_strided_slice %162 {offsets = [0, 5], sizes = [2, 256], strides = [1, 1]} : vector<2x358xbf16> to vector<2x256xbf16>
    %cst_110 = arith.constant 0.000000e+00 : f32
    %416 = arith.truncf %cst_110 : f32 to bf16
    %417 = vector.shape_cast %414 : vector<1x256xi1> to vector<1x256xi1>
    %418 = vector.broadcast %417 : vector<1x256xi1> to vector<2x256xi1>
    %419 = vector.broadcast %416 : bf16 to vector<2x256xbf16>
    %420 = arith.select %418, %415, %419 : vector<2x256xi1>, vector<2x256xbf16>
    %421 = vector.extract_strided_slice %162 {offsets = [0, 21], sizes = [2, 256], strides = [1, 1]} : vector<2x358xbf16> to vector<2x256xbf16>
    %cst_111 = arith.constant 0.000000e+00 : f32
    %422 = arith.truncf %cst_111 : f32 to bf16
    %423 = vector.shape_cast %414 : vector<1x256xi1> to vector<1x256xi1>
    %424 = vector.broadcast %423 : vector<1x256xi1> to vector<2x256xi1>
    %425 = vector.broadcast %422 : bf16 to vector<2x256xbf16>
    %426 = arith.select %424, %421, %425 : vector<2x256xi1>, vector<2x256xbf16>
    %427 = vector.extract_strided_slice %162 {offsets = [0, 37], sizes = [2, 256], strides = [1, 1]} : vector<2x358xbf16> to vector<2x256xbf16>
    %cst_112 = arith.constant 0.000000e+00 : f32
    %428 = arith.truncf %cst_112 : f32 to bf16
    %429 = vector.shape_cast %414 : vector<1x256xi1> to vector<1x256xi1>
    %430 = vector.broadcast %429 : vector<1x256xi1> to vector<2x256xi1>
    %431 = vector.broadcast %428 : bf16 to vector<2x256xbf16>
    %432 = arith.select %430, %427, %431 : vector<2x256xi1>, vector<2x256xbf16>
    %433 = vector.extract_strided_slice %162 {offsets = [0, 53], sizes = [2, 256], strides = [1, 1]} : vector<2x358xbf16> to vector<2x256xbf16>
    %cst_113 = arith.constant 0.000000e+00 : f32
    %434 = arith.truncf %cst_113 : f32 to bf16
    %435 = vector.shape_cast %414 : vector<1x256xi1> to vector<1x256xi1>
    %436 = vector.broadcast %435 : vector<1x256xi1> to vector<2x256xi1>
    %437 = vector.broadcast %434 : bf16 to vector<2x256xbf16>
    %438 = arith.select %436, %433, %437 : vector<2x256xi1>, vector<2x256xbf16>
    %439 = vector.extract_strided_slice %162 {offsets = [0, 69], sizes = [2, 256], strides = [1, 1]} : vector<2x358xbf16> to vector<2x256xbf16>
    %cst_114 = arith.constant 0.000000e+00 : f32
    %440 = arith.truncf %cst_114 : f32 to bf16
    %441 = vector.shape_cast %414 : vector<1x256xi1> to vector<1x256xi1>
    %442 = vector.broadcast %441 : vector<1x256xi1> to vector<2x256xi1>
    %443 = vector.broadcast %440 : bf16 to vector<2x256xbf16>
    %444 = arith.select %442, %439, %443 : vector<2x256xi1>, vector<2x256xbf16>
    %445 = vector.extract_strided_slice %162 {offsets = [0, 85], sizes = [2, 256], strides = [1, 1]} : vector<2x358xbf16> to vector<2x256xbf16>
    %cst_115 = arith.constant 0.000000e+00 : f32
    %446 = arith.truncf %cst_115 : f32 to bf16
    %447 = vector.shape_cast %414 : vector<1x256xi1> to vector<1x256xi1>
    %448 = vector.broadcast %447 : vector<1x256xi1> to vector<2x256xi1>
    %449 = vector.broadcast %446 : bf16 to vector<2x256xbf16>
    %450 = arith.select %448, %445, %449 : vector<2x256xi1>, vector<2x256xbf16>
    %451 = vector.extract_strided_slice %162 {offsets = [0, 101], sizes = [2, 256], strides = [1, 1]} : vector<2x358xbf16> to vector<2x256xbf16>
    %cst_116 = arith.constant 0.000000e+00 : f32
    %452 = arith.truncf %cst_116 : f32 to bf16
    %453 = vector.shape_cast %414 : vector<1x256xi1> to vector<1x256xi1>
    %454 = vector.broadcast %453 : vector<1x256xi1> to vector<2x256xi1>
    %455 = vector.broadcast %452 : bf16 to vector<2x256xbf16>
    %456 = arith.select %454, %451, %455 : vector<2x256xi1>, vector<2x256xbf16>
    %c3_i32 = arith.constant 3 : i32
    %457 = vector.broadcast %c3_i32 : i32 to vector<1x256xi32>
    %458 = arith.addi %18, %457 : vector<1x256xi32>
    %c0_i32_117 = arith.constant 0 : i32
    %459 = vector.broadcast %c0_i32_117 : i32 to vector<1x256xi32>
    %460 = arith.cmpi sge, %458, %459 : vector<1x256xi32>
    %c16_i32_118 = arith.constant 16 : i32
    %461 = vector.broadcast %c16_i32_118 : i32 to vector<1x256xi32>
    %462 = arith.cmpi slt, %458, %461 : vector<1x256xi32>
    %463 = arith.andi %460, %462 : vector<1x256xi1>
    %464 = vector.extract_strided_slice %162 {offsets = [0, 6], sizes = [2, 256], strides = [1, 1]} : vector<2x358xbf16> to vector<2x256xbf16>
    %cst_119 = arith.constant 0.000000e+00 : f32
    %465 = arith.truncf %cst_119 : f32 to bf16
    %466 = vector.shape_cast %463 : vector<1x256xi1> to vector<1x256xi1>
    %467 = vector.broadcast %466 : vector<1x256xi1> to vector<2x256xi1>
    %468 = vector.broadcast %465 : bf16 to vector<2x256xbf16>
    %469 = arith.select %467, %464, %468 : vector<2x256xi1>, vector<2x256xbf16>
    %470 = vector.extract_strided_slice %162 {offsets = [0, 22], sizes = [2, 256], strides = [1, 1]} : vector<2x358xbf16> to vector<2x256xbf16>
    %cst_120 = arith.constant 0.000000e+00 : f32
    %471 = arith.truncf %cst_120 : f32 to bf16
    %472 = vector.shape_cast %463 : vector<1x256xi1> to vector<1x256xi1>
    %473 = vector.broadcast %472 : vector<1x256xi1> to vector<2x256xi1>
    %474 = vector.broadcast %471 : bf16 to vector<2x256xbf16>
    %475 = arith.select %473, %470, %474 : vector<2x256xi1>, vector<2x256xbf16>
    %476 = vector.extract_strided_slice %162 {offsets = [0, 38], sizes = [2, 256], strides = [1, 1]} : vector<2x358xbf16> to vector<2x256xbf16>
    %cst_121 = arith.constant 0.000000e+00 : f32
    %477 = arith.truncf %cst_121 : f32 to bf16
    %478 = vector.shape_cast %463 : vector<1x256xi1> to vector<1x256xi1>
    %479 = vector.broadcast %478 : vector<1x256xi1> to vector<2x256xi1>
    %480 = vector.broadcast %477 : bf16 to vector<2x256xbf16>
    %481 = arith.select %479, %476, %480 : vector<2x256xi1>, vector<2x256xbf16>
    %482 = vector.extract_strided_slice %162 {offsets = [0, 54], sizes = [2, 256], strides = [1, 1]} : vector<2x358xbf16> to vector<2x256xbf16>
    %cst_122 = arith.constant 0.000000e+00 : f32
    %483 = arith.truncf %cst_122 : f32 to bf16
    %484 = vector.shape_cast %463 : vector<1x256xi1> to vector<1x256xi1>
    %485 = vector.broadcast %484 : vector<1x256xi1> to vector<2x256xi1>
    %486 = vector.broadcast %483 : bf16 to vector<2x256xbf16>
    %487 = arith.select %485, %482, %486 : vector<2x256xi1>, vector<2x256xbf16>
    %488 = vector.extract_strided_slice %162 {offsets = [0, 70], sizes = [2, 256], strides = [1, 1]} : vector<2x358xbf16> to vector<2x256xbf16>
    %cst_123 = arith.constant 0.000000e+00 : f32
    %489 = arith.truncf %cst_123 : f32 to bf16
    %490 = vector.shape_cast %463 : vector<1x256xi1> to vector<1x256xi1>
    %491 = vector.broadcast %490 : vector<1x256xi1> to vector<2x256xi1>
    %492 = vector.broadcast %489 : bf16 to vector<2x256xbf16>
    %493 = arith.select %491, %488, %492 : vector<2x256xi1>, vector<2x256xbf16>
    %494 = vector.extract_strided_slice %162 {offsets = [0, 86], sizes = [2, 256], strides = [1, 1]} : vector<2x358xbf16> to vector<2x256xbf16>
    %cst_124 = arith.constant 0.000000e+00 : f32
    %495 = arith.truncf %cst_124 : f32 to bf16
    %496 = vector.shape_cast %463 : vector<1x256xi1> to vector<1x256xi1>
    %497 = vector.broadcast %496 : vector<1x256xi1> to vector<2x256xi1>
    %498 = vector.broadcast %495 : bf16 to vector<2x256xbf16>
    %499 = arith.select %497, %494, %498 : vector<2x256xi1>, vector<2x256xbf16>
    %500 = vector.extract_strided_slice %162 {offsets = [0, 102], sizes = [2, 256], strides = [1, 1]} : vector<2x358xbf16> to vector<2x256xbf16>
    %cst_125 = arith.constant 0.000000e+00 : f32
    %501 = arith.truncf %cst_125 : f32 to bf16
    %502 = vector.shape_cast %463 : vector<1x256xi1> to vector<1x256xi1>
    %503 = vector.broadcast %502 : vector<1x256xi1> to vector<2x256xi1>
    %504 = vector.broadcast %501 : bf16 to vector<2x256xbf16>
    %505 = arith.select %503, %500, %504 : vector<2x256xi1>, vector<2x256xbf16>
    %506 = tpu.concatenate %175, %181, %187, %193, %199, %205, %211, %224, %230, %236, %242, %248, %254, %260, %273, %279 in 0 : vector<2x256xbf16>, vector<2x256xbf16>, vector<2x256xbf16>, vector<2x256xbf16>, vector<2x256xbf16>, vector<2x256xbf16>, vector<2x256xbf16>, vector<2x256xbf16>, vector<2x256xbf16>, vector<2x256xbf16>, vector<2x256xbf16>, vector<2x256xbf16>, vector<2x256xbf16>, vector<2x256xbf16>, vector<2x256xbf16>, vector<2x256xbf16> -> vector<32x256xbf16>
    %507 = tpu.concatenate %285, %291, %297, %303, %309, %322, %328, %334, %340, %346, %352, %358, %371, %377, %383, %389 in 0 : vector<2x256xbf16>, vector<2x256xbf16>, vector<2x256xbf16>, vector<2x256xbf16>, vector<2x256xbf16>, vector<2x256xbf16>, vector<2x256xbf16>, vector<2x256xbf16>, vector<2x256xbf16>, vector<2x256xbf16>, vector<2x256xbf16>, vector<2x256xbf16>, vector<2x256xbf16>, vector<2x256xbf16>, vector<2x256xbf16>, vector<2x256xbf16> -> vector<32x256xbf16>
    %508 = tpu.concatenate %395, %401, %407, %420, %426, %432, %438, %444, %450, %456, %469, %475, %481, %487, %493, %499 in 0 : vector<2x256xbf16>, vector<2x256xbf16>, vector<2x256xbf16>, vector<2x256xbf16>, vector<2x256xbf16>, vector<2x256xbf16>, vector<2x256xbf16>, vector<2x256xbf16>, vector<2x256xbf16>, vector<2x256xbf16>, vector<2x256xbf16>, vector<2x256xbf16>, vector<2x256xbf16>, vector<2x256xbf16>, vector<2x256xbf16>, vector<2x256xbf16> -> vector<32x256xbf16>
    %509 = tpu.concatenate %506, %507, %508, %505 in 0 : vector<32x256xbf16>, vector<32x256xbf16>, vector<32x256xbf16>, vector<2x256xbf16> -> vector<98x256xbf16>
    %c0_126 = arith.constant 0 : index
    %c0_127 = arith.constant 0 : index
    %510 = vector.load %arg13[%c0_126, %c0_127] : memref<1x98xbf16, #tpu.memory_space<vmem>>, vector<1x98xbf16>
    %cst_128 = arith.constant dense<0.000000e+00> : vector<1x256xf32>
    %511 = tpu.matmul %510, %509, %cst_128 {dimension_numbers = #tpu.dot_dimension_numbers<[1], [0], [0], [1], [0, 0, 1, 1], [], []>} : vector<1x98xbf16>, vector<98x256xbf16>, vector<1x256xf32> -> vector<1x256xf32>
    %512 = arith.negf %511 : vector<1x256xf32>
    %513 = math.exp %512 : vector<1x256xf32>
    %cst_129 = arith.constant 1.000000e+00 : f32
    %514 = vector.broadcast %cst_129 : f32 to vector<1x256xf32>
    %515 = arith.addf %514, %513 : vector<1x256xf32>
    %516 = arith.divf %514, %515 : vector<1x256xf32>
    %517 = vector.broadcast %516 : vector<1x256xf32> to vector<64x256xf32>
    %518 = arith.mulf %152, %517 : vector<64x256xf32>
    %519 = arith.addf %518, %1 : vector<64x256xf32>
    %cst_130 = arith.constant 0.000000e+00 : f32
    %520 = vector.broadcast %cst_130 : f32 to vector<64x256xf32>
    %521 = arith.maximumf %519, %520 : vector<64x256xf32>
    %c0_131 = arith.constant 0 : index
    %c0_132 = arith.constant 0 : index
    %c0_133 = arith.constant 0 : index
    %522 = vector.load %arg14[%c0_131, %c0_132, %c0_133] : memref<1x64x256xf32, #tpu.memory_space<vmem>>, vector<1x64x256xf32>
    %523 = vector.shape_cast %522 : vector<1x64x256xf32> to vector<64x256xf32>
    %524 = vector.shape_cast %521 : vector<64x256xf32> to vector<1x64x256xf32>
    tpu.vector_store %arg14[%c0_131, %c0_132, %c0_133], %524 {strides = array<i32>} : memref<1x64x256xf32, #tpu.memory_space<vmem>>, vector<1x64x256xf32>,
    return
  }
  func.func @transform_0(%arg0: i32) -> (i32, i32, i32) {
    %c0_i32 = arith.constant 0 : i32
    %c0_i32_0 = arith.constant 0 : i32
    %c0_i32_1 = arith.constant 0 : i32
    return %arg0, %c0_i32, %c0_i32_0 : i32, i32, i32
  }
  func.func @transform_1(%arg0: i32) -> (i32, i32) {
    %c0_i32 = arith.constant 0 : i32
    %c0_i32_0 = arith.constant 0 : i32
    %c0_i32_1 = arith.constant 0 : i32
    return %c0_i32, %c0_i32_0 : i32, i32
  }
  func.func @transform_2(%arg0: i32) -> (i32, i32) {
    %c0_i32 = arith.constant 0 : i32
    %c0_i32_0 = arith.constant 0 : i32
    %c0_i32_1 = arith.constant 0 : i32
    return %c0_i32, %c0_i32_0 : i32, i32
  }
  func.func @transform_3(%arg0: i32) -> (i32, i32) {
    %c0_i32 = arith.constant 0 : i32
    %c0_i32_0 = arith.constant 0 : i32
    %c0_i32_1 = arith.constant 0 : i32
    return %c0_i32, %c0_i32_0 : i32, i32
  }
  func.func @transform_4(%arg0: i32) -> (i32, i32) {
    %c0_i32 = arith.constant 0 : i32
    %c0_i32_0 = arith.constant 0 : i32
    %c0_i32_1 = arith.constant 0 : i32
    return %c0_i32, %c0_i32_0 : i32, i32
  }
  func.func @transform_5(%arg0: i32) -> (i32, i32) {
    %c0_i32 = arith.constant 0 : i32
    %c0_i32_0 = arith.constant 0 : i32
    %c0_i32_1 = arith.constant 0 : i32
    return %c0_i32, %c0_i32_0 : i32, i32
  }
  func.func @transform_6(%arg0: i32) -> (i32, i32) {
    %c0_i32 = arith.constant 0 : i32
    %c0_i32_0 = arith.constant 0 : i32
    %c0_i32_1 = arith.constant 0 : i32
    return %c0_i32, %c0_i32_0 : i32, i32
  }
  func.func @transform_7(%arg0: i32) -> (i32, i32) {
    %c0_i32 = arith.constant 0 : i32
    %c0_i32_0 = arith.constant 0 : i32
    %c0_i32_1 = arith.constant 0 : i32
    return %c0_i32, %c0_i32_0 : i32, i32
  }
  func.func @transform_8(%arg0: i32) -> (i32, i32) {
    %c0_i32 = arith.constant 0 : i32
    %c0_i32_0 = arith.constant 0 : i32
    %c0_i32_1 = arith.constant 0 : i32
    return %c0_i32, %c0_i32_0 : i32, i32
  }
  func.func @transform_9(%arg0: i32) -> (i32, i32) {
    %c0_i32 = arith.constant 0 : i32
    %c0_i32_0 = arith.constant 0 : i32
    %c0_i32_1 = arith.constant 0 : i32
    return %c0_i32, %c0_i32_0 : i32, i32
  }
  func.func @transform_10(%arg0: i32) -> (i32, i32) {
    %c0_i32 = arith.constant 0 : i32
    %c0_i32_0 = arith.constant 0 : i32
    %c0_i32_1 = arith.constant 0 : i32
    return %c0_i32, %c0_i32_0 : i32, i32
  }
  func.func @transform_11(%arg0: i32) -> (i32, i32) {
    %c0_i32 = arith.constant 0 : i32
    %c0_i32_0 = arith.constant 0 : i32
    %c0_i32_1 = arith.constant 0 : i32
    return %c0_i32, %c0_i32_0 : i32, i32
  }
  func.func @transform_12(%arg0: i32) -> (i32, i32) {
    %c0_i32 = arith.constant 0 : i32
    %c0_i32_0 = arith.constant 0 : i32
    %c0_i32_1 = arith.constant 0 : i32
    return %c0_i32, %c0_i32_0 : i32, i32
  }
  func.func @transform_13(%arg0: i32) -> (i32, i32, i32) {
    %c0_i32 = arith.constant 0 : i32
    %c0_i32_0 = arith.constant 0 : i32
    %c0_i32_1 = arith.constant 0 : i32
    return %arg0, %c0_i32, %c0_i32_0 : i32, i32, i32
  }
}

</mosaic_0001>

<llo_original>
// kernel: tpu_custom_call.1
$region0: #{tpu_custom_call.1}
  #allocation0 [shape = 'u32[]', space=smem, size = 0x4, offset = 0x4, fixed_abs, tag = 'smem constant byte address 0x4 - core index']
  #allocation1 [shape = 'u32[72,128]{1,0:T(1,128)}', space=vmem, size = 0x9000, scoped, tag = 'internal scratch']
  %s0 = inlined_call_operand.hbm [shape: f32[2,64,256], index: 0, kind: input, shape index: {}]
  %s1 = inlined_call_operand.vmem [shape: bf16[16,64], index: 1, kind: input, shape index: {}]
  %s2 = inlined_call_operand.vmem [shape: f32[16,1], index: 2, kind: input, shape index: {}]
  %s3 = inlined_call_operand.vmem [shape: f32[16,1], index: 3, kind: input, shape index: {}]
  %s4 = inlined_call_operand.vmem [shape: bf16[16,144], index: 4, kind: input, shape index: {}]
  %s5 = inlined_call_operand.vmem [shape: f32[16,1], index: 5, kind: input, shape index: {}]
  %s6 = inlined_call_operand.vmem [shape: f32[16,1], index: 6, kind: input, shape index: {}]
  %s7 = inlined_call_operand.vmem [shape: bf16[64,16], index: 7, kind: input, shape index: {}]
  %s8 = inlined_call_operand.vmem [shape: f32[64,1], index: 8, kind: input, shape index: {}]
  %s9 = inlined_call_operand.vmem [shape: f32[64,1], index: 9, kind: input, shape index: {}]
  %s10 = inlined_call_operand.vmem [shape: bf16[4,64], index: 10, kind: input, shape index: {}]
  %s11 = inlined_call_operand.vmem [shape: bf16[64,4], index: 11, kind: input, shape index: {}]
  %s12 = inlined_call_operand.vmem [shape: bf16[1,98], index: 12, kind: input, shape index: {}]
  %s13 = inlined_call_operand.hbm [shape: f32[2,64,256], index: 13, kind: output, shape index: {}]
  %s14 = sld [smem:[#allocation0]]
  $region89: #{tpu_custom_call.1} parent=0
    _
  %s16 = ssub.s32 1, %s14
  %s17 = scalar_select 0, %s16, %s14
  $region1: #{tpu_custom_call.1} parent=0
    #allocation2 [shape = 'u8[131072]{0}', space=vmem, size = 0x20000, scoped, tag = 'input window, operand 0']
    #allocation3 [shape = 's32[2]{0}', space=sflag, size = 0x8, scoped, tag = 'scoped memory for tpu_custom_call.1']
    #allocation4 [shape = 's32[2]{0}', space=sflag, size = 0x8, scoped, tag = 'scoped memory for tpu_custom_call.1']
    #allocation5 [shape = 'u8[131072]{0}', space=vmem, size = 0x20000, scoped, tag = 'output window, operand 0']
    %18 = vsyncpa [#allocation3], 0
    %s19 = scalar_lea.sflag [#allocation3], 1
    %20 = vsyncpa %s19, 0
    %21 = vsyncpa [#allocation4], 0
    %s22 = scalar_lea.sflag [#allocation4], 1
    %23 = vsyncpa %s22, 0
    loop: start=0, step=1, limit=4
    $region2: #{tpu_custom_call.1} parent=1 // loop_pre_header
      _
    $region3: #{tpu_custom_call.1} parent=1 // loop_header
      %s25 = sphi 0, %s29
      %p26 = scmp.ge.s32.totalorder %s25, 4
      %s35 = sphi 0, %s37
      %s38 = sphi 0, %s35
      %s39 = sphi 0, %s38
      %s55 = sphi 0, %s39
      %s59 = sphi 0, %s59
      %s61 = sphi 0, %s59
      %s62 = sphi 0, %s61
      %s76 = sphi 0, %s62
      %s80 = sphi 0, %s80
      %s82 = sphi 0, %s80
      %s83 = sphi 0, %s82
      %s97 = sphi 0, %s83
      %s101 = sphi 0, %s101
      %s103 = sphi 0, %s101
      %s104 = sphi 0, %s103
      %s118 = sphi 0, %s104
      %s122 = sphi 0, %s122
      %s124 = sphi 0, %s122
      %s125 = sphi 0, %s124
      %s139 = sphi 0, %s125
      %s143 = sphi 0, %s143
      %s145 = sphi 0, %s143
      %s146 = sphi 0, %s145
      %s160 = sphi 0, %s146
      %s164 = sphi 0, %s164
      %s166 = sphi 0, %s164
      %s167 = sphi 0, %s166
      %s181 = sphi 0, %s167
      %s185 = sphi 0, %s185
      %s187 = sphi 0, %s185
      %s188 = sphi 0, %s187
      %s202 = sphi 0, %s188
      %s206 = sphi 0, %s206
      %s208 = sphi 0, %s206
      %s209 = sphi 0, %s208
      %s223 = sphi 0, %s209
      %s227 = sphi 0, %s227
      %s229 = sphi 0, %s227
      %s230 = sphi 0, %s229
      %s244 = sphi 0, %s230
      %s248 = sphi 0, %s248
      %s250 = sphi 0, %s248
      %s251 = sphi 0, %s250
      %s265 = sphi 0, %s251
      %s269 = sphi 0, %s269
      %s271 = sphi 0, %s269
      %s272 = sphi 0, %s271
      %s286 = sphi 0, %s272
      %s290 = sphi 0, %s290
      %s292 = sphi 0, %s290
      %s293 = sphi 0, %s292
      %s307 = sphi 0, %s293
      %s313 = sphi 0, %s315
      %s316 = sphi 0, %s313
      %s317 = sphi 0, %s316
      %s333 = sphi 0, %s317
    $region4: #{tpu_custom_call.1} parent=1 // loop_header_branch
      %28 = sbr.rel (%p26) target = $region8
    $region5: #{tpu_custom_call.1} parent=1 // loop_body
      %s30 = ssub.s32 %s25, 1
      %s31 = ssub.s32 %s25, 2
      %s32 = sadd.s32 %s25, 1
      %s33 = ssub.s32 %s25, %s32
      %p34 = scmp.eq.s32.totalorder %s33, 0
      %s36 = sadd.s32 %s35, 1
      %s37 = scalar_select %p34, %s35, %s36
      %p40 = pneg %p34
      %p41 = scmp.eq.s32.totalorder %s25, 1
      %p42 = por %p40, %p41
      %p43 = scmp.ne.s32.totalorder %s35, %s38
      %p44 = scmp.eq.s32.totalorder %s25, 0
      %p45 = por %p43, %p44
      %p46 = scmp.ne.s32.totalorder %s35, %s38
      %p47 = scmp.eq.s32.totalorder %s30, 1
      %p48 = por %p46, %p47
      %p49 = scmp.ne.s32.totalorder %s38, %s39
      %p50 = scmp.eq.s32.totalorder %s30, 0
      %p51 = por %p49, %p50
      %p52 = scmp.ne.s32.totalorder %s38, %s39
      %p53 = scmp.eq.s32.totalorder %s31, 1
      %p54 = por %p52, %p53
      %p56 = scmp.ne.s32.totalorder %s39, %s55
      %p57 = scmp.eq.s32.totalorder %s31, 0
      %p58 = por %p56, %p57
      %s60 = sadd.s32 %s59, 1
      %p63 = scmp.eq.s32.totalorder %s25, 1
      %p64 = scmp.ne.s32.totalorder %s59, %s61
      %p65 = scmp.eq.s32.totalorder %s25, 0
      %p66 = por %p64, %p65
      %p67 = scmp.ne.s32.totalorder %s59, %s61
      %p68 = scmp.eq.s32.totalorder %s30, 1
      %p69 = por %p67, %p68
      %p70 = scmp.ne.s32.totalorder %s61, %s62
      %p71 = scmp.eq.s32.totalorder %s30, 0
      %p72 = por %p70, %p71
      %p73 = scmp.ne.s32.totalorder %s61, %s62
      %p74 = scmp.eq.s32.totalorder %s31, 1
      %p75 = por %p73, %p74
      %p77 = scmp.ne.s32.totalorder %s62, %s76
      %p78 = scmp.eq.s32.totalorder %s31, 0
      %p79 = por %p77, %p78
      %s81 = sadd.s32 %s80, 1
      %p84 = scmp.eq.s32.totalorder %s25, 1
      %p85 = scmp.ne.s32.totalorder %s80, %s82
      %p86 = scmp.eq.s32.totalorder %s25, 0
      %p87 = por %p85, %p86
      %p88 = scmp.ne.s32.totalorder %s80, %s82
      %p89 = scmp.eq.s32.totalorder %s30, 1
      %p90 = por %p88, %p89
      %p91 = scmp.ne.s32.totalorder %s82, %s83
      %p92 = scmp.eq.s32.totalorder %s30, 0
      %p93 = por %p91, %p92
      %p94 = scmp.ne.s32.totalorder %s82, %s83
      %p95 = scmp.eq.s32.totalorder %s31, 1
      %p96 = por %p94, %p95
      %p98 = scmp.ne.s32.totalorder %s83, %s97
      %p99 = scmp.eq.s32.totalorder %s31, 0
      %p100 = por %p98, %p99
      %s102 = sadd.s32 %s101, 1
      %p105 = scmp.eq.s32.totalorder %s25, 1
      %p106 = scmp.ne.s32.totalorder %s101, %s103
      %p107 = scmp.eq.s32.totalorder %s25, 0
      %p108 = por %p106, %p107
      %p109 = scmp.ne.s32.totalorder %s101, %s103
      %p110 = scmp.eq.s32.totalorder %s30, 1
      %p111 = por %p109, %p110
      %p112 = scmp.ne.s32.totalorder %s103, %s104
      %p113 = scmp.eq.s32.totalorder %s30, 0
      %p114 = por %p112, %p113
      %p115 = scmp.ne.s32.totalorder %s103, %s104
      %p116 = scmp.eq.s32.totalorder %s31, 1
      %p117 = por %p115, %p116
      %p119 = scmp.ne.s32.totalorder %s104, %s118
      %p120 = scmp.eq.s32.totalorder %s31, 0
      %p121 = por %p119, %p120
      %s123 = sadd.s32 %s122, 1
      %p126 = scmp.eq.s32.totalorder %s25, 1
      %p127 = scmp.ne.s32.totalorder %s122, %s124
      %p128 = scmp.eq.s32.totalorder %s25, 0
      %p129 = por %p127, %p128
      %p130 = scmp.ne.s32.totalorder %s122, %s124
      %p131 = scmp.eq.s32.totalorder %s30, 1
      %p132 = por %p130, %p131
      %p133 = scmp.ne.s32.totalorder %s124, %s125
      %p134 = scmp.eq.s32.totalorder %s30, 0
      %p135 = por %p133, %p134
      %p136 = scmp.ne.s32.totalorder %s124, %s125
      %p137 = scmp.eq.s32.totalorder %s31, 1
      %p138 = por %p136, %p137
      %p140 = scmp.ne.s32.totalorder %s125, %s139
      %p141 = scmp.eq.s32.totalorder %s31, 0
      %p142 = por %p140, %p141
      %s144 = sadd.s32 %s143, 1
      %p147 = scmp.eq.s32.totalorder %s25, 1
      %p148 = scmp.ne.s32.totalorder %s143, %s145
      %p149 = scmp.eq.s32.totalorder %s25, 0
      %p150 = por %p148, %p149
      %p151 = scmp.ne.s32.totalorder %s143, %s145
      %p152 = scmp.eq.s32.totalorder %s30, 1
      %p153 = por %p151, %p152
      %p154 = scmp.ne.s32.totalorder %s145, %s146
      %p155 = scmp.eq.s32.totalorder %s30, 0
      %p156 = por %p154, %p155
      %p157 = scmp.ne.s32.totalorder %s145, %s146
      %p158 = scmp.eq.s32.totalorder %s31, 1
      %p159 = por %p157, %p158
      %p161 = scmp.ne.s32.totalorder %s146, %s160
      %p162 = scmp.eq.s32.totalorder %s31, 0
      %p163 = por %p161, %p162
      %s165 = sadd.s32 %s164, 1
      %p168 = scmp.eq.s32.totalorder %s25, 1
      %p169 = scmp.ne.s32.totalorder %s164, %s166
      %p170 = scmp.eq.s32.totalorder %s25, 0
      %p171 = por %p169, %p170
      %p172 = scmp.ne.s32.totalorder %s164, %s166
      %p173 = scmp.eq.s32.totalorder %s30, 1
      %p174 = por %p172, %p173
      %p175 = scmp.ne.s32.totalorder %s166, %s167
      %p176 = scmp.eq.s32.totalorder %s30, 0
      %p177 = por %p175, %p176
      %p178 = scmp.ne.s32.totalorder %s166, %s167
      %p179 = scmp.eq.s32.totalorder %s31, 1
      %p180 = por %p178, %p179
      %p182 = scmp.ne.s32.totalorder %s167, %s181
      %p183 = scmp.eq.s32.totalorder %s31, 0
      %p184 = por %p182, %p183
      %s186 = sadd.s32 %s185, 1
      %p189 = scmp.eq.s32.totalorder %s25, 1
      %p190 = scmp.ne.s32.totalorder %s185, %s187
      %p191 = scmp.eq.s32.totalorder %s25, 0
      %p192 = por %p190, %p191
      %p193 = scmp.ne.s32.totalorder %s185, %s187
      %p194 = scmp.eq.s32.totalorder %s30, 1
      %p195 = por %p193, %p194
      %p196 = scmp.ne.s32.totalorder %s187, %s188
      %p197 = scmp.eq.s32.totalorder %s30, 0
      %p198 = por %p196, %p197
      %p199 = scmp.ne.s32.totalorder %s187, %s188
      %p200 = scmp.eq.s32.totalorder %s31, 1
      %p201 = por %p199, %p200
      %p203 = scmp.ne.s32.totalorder %s188, %s202
      %p204 = scmp.eq.s32.totalorder %s31, 0
      %p205 = por %p203, %p204
      %s207 = sadd.s32 %s206, 1
      %p210 = scmp.eq.s32.totalorder %s25, 1
      %p211 = scmp.ne.s32.totalorder %s206, %s208
      %p212 = scmp.eq.s32.totalorder %s25, 0
      %p213 = por %p211, %p212
      %p214 = scmp.ne.s32.totalorder %s206, %s208
      %p215 = scmp.eq.s32.totalorder %s30, 1
      %p216 = por %p214, %p215
      %p217 = scmp.ne.s32.totalorder %s208, %s209
      %p218 = scmp.eq.s32.totalorder %s30, 0
      %p219 = por %p217, %p218
      %p220 = scmp.ne.s32.totalorder %s208, %s209
      %p221 = scmp.eq.s32.totalorder %s31, 1
      %p222 = por %p220, %p221
      %p224 = scmp.ne.s32.totalorder %s209, %s223
      %p225 = scmp.eq.s32.totalorder %s31, 0
      %p226 = por %p224, %p225
      %s228 = sadd.s32 %s227, 1
      %p231 = scmp.eq.s32.totalorder %s25, 1
      %p232 = scmp.ne.s32.totalorder %s227, %s229
      %p233 = scmp.eq.s32.totalorder %s25, 0
      %p234 = por %p232, %p233
      %p235 = scmp.ne.s32.totalorder %s227, %s229
      %p236 = scmp.eq.s32.totalorder %s30, 1
      %p237 = por %p235, %p236
      %p238 = scmp.ne.s32.totalorder %s229, %s230
      %p239 = scmp.eq.s32.totalorder %s30, 0
      %p240 = por %p238, %p239
      %p241 = scmp.ne.s32.totalorder %s229, %s230
      %p242 = scmp.eq.s32.totalorder %s31, 1
      %p243 = por %p241, %p242
      %p245 = scmp.ne.s32.totalorder %s230, %s244
      %p246 = scmp.eq.s32.totalorder %s31, 0
      %p247 = por %p245, %p246
      %s249 = sadd.s32 %s248, 1
      %p252 = scmp.eq.s32.totalorder %s25, 1
      %p253 = scmp.ne.s32.totalorder %s248, %s250
      %p254 = scmp.eq.s32.totalorder %s25, 0
      %p255 = por %p253, %p254
      %p256 = scmp.ne.s32.totalorder %s248, %s250
      %p257 = scmp.eq.s32.totalorder %s30, 1
      %p258 = por %p256, %p257
      %p259 = scmp.ne.s32.totalorder %s250, %s251
      %p260 = scmp.eq.s32.totalorder %s30, 0
      %p261 = por %p259, %p260
      %p262 = scmp.ne.s32.totalorder %s250, %s251
      %p263 = scmp.eq.s32.totalorder %s31, 1
      %p264 = por %p262, %p263
      %p266 = scmp.ne.s32.totalorder %s251, %s265
      %p267 = scmp.eq.s32.totalorder %s31, 0
      %p268 = por %p266, %p267
      %s270 = sadd.s32 %s269, 1
      %p273 = scmp.eq.s32.totalorder %s25, 1
      %p274 = scmp.ne.s32.totalorder %s269, %s271
      %p275 = scmp.eq.s32.totalorder %s25, 0
      %p276 = por %p274, %p275
      %p277 = scmp.ne.s32.totalorder %s269, %s271
      %p278 = scmp.eq.s32.totalorder %s30, 1
      %p279 = por %p277, %p278
      %p280 = scmp.ne.s32.totalorder %s271, %s272
      %p281 = scmp.eq.s32.totalorder %s30, 0
      %p282 = por %p280, %p281
      %p283 = scmp.ne.s32.totalorder %s271, %s272
      %p284 = scmp.eq.s32.totalorder %s31, 1
      %p285 = por %p283, %p284
      %p287 = scmp.ne.s32.totalorder %s272, %s286
      %p288 = scmp.eq.s32.totalorder %s31, 0
      %p289 = por %p287, %p288
      %s291 = sadd.s32 %s290, 1
      %p294 = scmp.eq.s32.totalorder %s25, 1
      %p295 = scmp.ne.s32.totalorder %s290, %s292
      %p296 = scmp.eq.s32.totalorder %s25, 0
      %p297 = por %p295, %p296
      %p298 = scmp.ne.s32.totalorder %s290, %s292
      %p299 = scmp.eq.s32.totalorder %s30, 1
      %p300 = por %p298, %p299
      %p301 = scmp.ne.s32.totalorder %s292, %s293
      %p302 = scmp.eq.s32.totalorder %s30, 0
      %p303 = por %p301, %p302
      %p304 = scmp.ne.s32.totalorder %s292, %s293
      %p305 = scmp.eq.s32.totalorder %s31, 1
      %p306 = por %p304, %p305
      %p308 = scmp.ne.s32.totalorder %s293, %s307
      %p309 = scmp.eq.s32.totalorder %s31, 0
      %p310 = por %p308, %p309
      %s311 = ssub.s32 %s25, %s32
      %p312 = scmp.eq.s32.totalorder %s311, 0
      %s314 = sadd.s32 %s313, 1
      %s315 = scalar_select %p312, %s313, %s314
      %p318 = pneg %p312
      %p319 = scmp.eq.s32.totalorder %s25, 1
      %p320 = por %p318, %p319
      %p321 = scmp.ne.s32.totalorder %s313, %s316
      %p322 = scmp.eq.s32.totalorder %s25, 0
      %p323 = por %p321, %p322
      %p324 = scmp.ne.s32.totalorder %s313, %s316
      %p325 = scmp.eq.s32.totalorder %s30, 1
      %p326 = por %p324, %p325
      %p327 = scmp.ne.s32.totalorder %s316, %s317
      %p328 = scmp.eq.s32.totalorder %s30, 0
      %p329 = por %p327, %p328
      %p330 = scmp.ne.s32.totalorder %s316, %s317
      %p331 = scmp.eq.s32.totalorder %s31, 1
      %p332 = por %p330, %p331
      %p334 = scmp.ne.s32.totalorder %s317, %s333
      %p335 = scmp.eq.s32.totalorder %s31, 0
      %p336 = por %p334, %p335
      %p337 = scmp.le.s32.totalorder 1, %s25
      %p338 = scmp.lt.s32.totalorder %s25, 3
      %p339 = pnand %p337, %p338
      %p340 = pneg %p339
      // Predicated region
      $region9: #{tpu_custom_call.1} parent=5 // pred_check
        _
      $region10: #{tpu_custom_call.1} parent=5 // pred_check_branch
        %342 = sbr.rel (%p339) target = $region12
      $region11: #{tpu_custom_call.1} parent=5 // pred_region
        %s343 = ssub.s32 %s25, 1
        // Predicated region
        $region13: #{tpu_custom_call.1} parent=11 // pred_check
          %p344 = pneg %p72
        $region14: #{tpu_custom_call.1} parent=11 // pred_check_branch
          %346 = sbr.rel (%p344) target = $region16
        $region15: #{tpu_custom_call.1} parent=11 // pred_region
          _
        $region16: #{tpu_custom_call.1} parent=11 // pred_fallthru
          _
        // Predicated region
        $region17: #{tpu_custom_call.1} parent=11 // pred_check
          %p347 = pneg %p93
        $region18: #{tpu_custom_call.1} parent=11 // pred_check_branch
          %349 = sbr.rel (%p347) target = $region20
        $region19: #{tpu_custom_call.1} parent=11 // pred_region
          _
        $region20: #{tpu_custom_call.1} parent=11 // pred_fallthru
          _
        // Predicated region
        $region21: #{tpu_custom_call.1} parent=11 // pred_check
          %p350 = pneg %p114
        $region22: #{tpu_custom_call.1} parent=11 // pred_check_branch
          %352 = sbr.rel (%p350) target = $region24
        $region23: #{tpu_custom_call.1} parent=11 // pred_region
          _
        $region24: #{tpu_custom_call.1} parent=11 // pred_fallthru
          _
        // Predicated region
        $region25: #{tpu_custom_call.1} parent=11 // pred_check
          %p353 = pneg %p135
        $region26: #{tpu_custom_call.1} parent=11 // pred_check_branch
          %355 = sbr.rel (%p353) target = $region28
        $region27: #{tpu_custom_call.1} parent=11 // pred_region
          _
        $region28: #{tpu_custom_call.1} parent=11 // pred_fallthru
          _
        // Predicated region
        $region29: #{tpu_custom_call.1} parent=11 // pred_check
          %p356 = pneg %p156
        $region30: #{tpu_custom_call.1} parent=11 // pred_check_branch
          %358 = sbr.rel (%p356) target = $region32
        $region31: #{tpu_custom_call.1} parent=11 // pred_region
          _
        $region32: #{tpu_custom_call.1} parent=11 // pred_fallthru
          _
        // Predicated region
        $region33: #{tpu_custom_call.1} parent=11 // pred_check
          %p359 = pneg %p177
        $region34: #{tpu_custom_call.1} parent=11 // pred_check_branch
          %361 = sbr.rel (%p359) target = $region36
        $region35: #{tpu_custom_call.1} parent=11 // pred_region
          _
        $region36: #{tpu_custom_call.1} parent=11 // pred_fallthru
          _
        // Predicated region
        $region37: #{tpu_custom_call.1} parent=11 // pred_check
          %p362 = pneg %p198
        $region38: #{tpu_custom_call.1} parent=11 // pred_check_branch
          %364 = sbr.rel (%p362) target = $region40
        $region39: #{tpu_custom_call.1} parent=11 // pred_region
          _
        $region40: #{tpu_custom_call.1} parent=11 // pred_fallthru
          _
        // Predicated region
        $region41: #{tpu_custom_call.1} parent=11 // pred_check
          %p365 = pneg %p219
        $region42: #{tpu_custom_call.1} parent=11 // pred_check_branch
          %367 = sbr.rel (%p365) target = $region44
        $region43: #{tpu_custom_call.1} parent=11 // pred_region
          _
        $region44: #{tpu_custom_call.1} parent=11 // pred_fallthru
          _
        // Predicated region
        $region45: #{tpu_custom_call.1} parent=11 // pred_check
          %p368 = pneg %p240
        $region46: #{tpu_custom_call.1} parent=11 // pred_check_branch
          %370 = sbr.rel (%p368) target = $region48
        $region47: #{tpu_custom_call.1} parent=11 // pred_region
          _
        $region48: #{tpu_custom_call.1} parent=11 // pred_fallthru
          _
        // Predicated region
        $region49: #{tpu_custom_call.1} parent=11 // pred_check
          %p371 = pneg %p261
        $region50: #{tpu_custom_call.1} parent=11 // pred_check_branch
          %373 = sbr.rel (%p371) target = $region52
        $region51: #{tpu_custom_call.1} parent=11 // pred_region
          _
        $region52: #{tpu_custom_call.1} parent=11 // pred_fallthru
          _
        // Predicated region
        $region53: #{tpu_custom_call.1} parent=11 // pred_check
          %p374 = pneg %p282
        $region54: #{tpu_custom_call.1} parent=11 // pred_check_branch
          %376 = sbr.rel (%p374) target = $region56
        $region55: #{tpu_custom_call.1} parent=11 // pred_region
          _
        $region56: #{tpu_custom_call.1} parent=11 // pred_fallthru
          _
        // Predicated region
        $region57: #{tpu_custom_call.1} parent=11 // pred_check
          %p377 = pneg %p303
        $region58: #{tpu_custom_call.1} parent=11 // pred_check_branch
          %379 = sbr.rel (%p377) target = $region60
        $region59: #{tpu_custom_call.1} parent=11 // pred_region
          _
        $region60: #{tpu_custom_call.1} parent=11 // pred_fallthru
          _
      $region12: #{tpu_custom_call.1} parent=5 // pred_fallthru
        _
      %p380 = scmp.lt.s32.totalorder %s25, 2
      // Predicated region
      $region61: #{tpu_custom_call.1} parent=5 // pred_check
        %p381 = pneg %p380
      $region62: #{tpu_custom_call.1} parent=5 // pred_check_branch
        %383 = sbr.rel (%p381) target = $region64
      $region63: #{tpu_custom_call.1} parent=5 // pred_region
        // Predicated region
        $region65: #{tpu_custom_call.1} parent=63 // pred_check
          %p384 = pneg %p45
        $region66: #{tpu_custom_call.1} parent=63 // pred_check_branch
          %386 = sbr.rel (%p384) target = $region68
        $region67: #{tpu_custom_call.1} parent=63 // pred_region
          %s387 = sand.u32 %s35, 1
          %s388 = scalar_lea.sflag [#allocation3], %s387
          %s389 = sand.u32 %s35, 1
          %s390 = smul.addr %s389, 128
          %s391 = scalar_lea.vmem [#allocation2], %s390
          %393 = vsyncadd %s388, 0
          %s394 = smul.addr %s25, 16
          %s395 = smul.addr %s394, 8
          %s396 = scalar_lea.hbm %s0, %s395
          %s397 = sshll.u32 %s396, 4
          %s398 = int_to_ptr.hbm [resolvable:$true] %s397
          %s399 = sshll.u32 %s391, 4
          %s400 = int_to_ptr.vmem [resolvable:$true] %s399
          %405 = dma.hbm_to_vmem [thread:$0]  %s398, 2048, %s400, %s388, 256, 256, 16
        $region68: #{tpu_custom_call.1} parent=63 // pred_fallthru
          _
      $region64: #{tpu_custom_call.1} parent=5 // pred_fallthru
        _
      %p406 = scmp.le.s32.totalorder 1, %s25
      %p407 = scmp.lt.s32.totalorder %s25, 3
      %p408 = pnand %p406, %p407
      %p409 = pneg %p408
      // Predicated region
      $region69: #{tpu_custom_call.1} parent=5 // pred_check
        _
      $region70: #{tpu_custom_call.1} parent=5 // pred_check_branch
        %411 = sbr.rel (%p408) target = $region72
      $region71: #{tpu_custom_call.1} parent=5 // pred_region
        %s412 = ssub.s32 %s25, 1
        %s413 = sand.u32 %s38, 1
        %s414 = scalar_lea.sflag [#allocation3], %s413
        %s415 = sand.u32 %s38, 1
        %s416 = smul.addr %s415, 128
        %s417 = scalar_lea.vmem [#allocation2], %s416
        // Predicated region
        $region73: #{tpu_custom_call.1} parent=71 // pred_check
          %p418 = pneg %p51
        $region74: #{tpu_custom_call.1} parent=71 // pred_check_branch
          %420 = sbr.rel (%p418) target = $region76
        $region75: #{tpu_custom_call.1} parent=71 // pred_region
          %422 = dma.done %s414, 2048
        $region76: #{tpu_custom_call.1} parent=71 // pred_fallthru
          _
        %s423 = sand.u32 %s38, 1
        %s424 = scalar_lea.sflag [#allocation3], %s423
        %s425 = sand.u32 %s38, 1
        %s426 = smul.addr %s425, 128
        %s427 = scalar_lea.vmem [#allocation2], %s426
        %p428 = pneg %p51
        %p429 = pneg %p48
        %p430 = pneg %p72
        %p431 = pneg %p69
        %p432 = pneg %p93
        %p433 = pneg %p90
        %p434 = pneg %p114
        %p435 = pneg %p111
        %p436 = pneg %p135
        %p437 = pneg %p132
        %p438 = pneg %p156
        %p439 = pneg %p153
        %p440 = pneg %p177
        %p441 = pneg %p174
        %p442 = pneg %p198
        %p443 = pneg %p195
        %p444 = pneg %p219
        %p445 = pneg %p216
        %p446 = pneg %p240
        %p447 = pneg %p237
        %p448 = pneg %p261
        %p449 = pneg %p258
        %p450 = pneg %p282
        %p451 = pneg %p279
        %p452 = pneg %p303
        %p453 = pneg %p300
        %p454 = pneg %p329
        %p455 = pneg %p326
        %s456 = sand.u32 %s316, 1
        %s457 = scalar_lea.sflag [#allocation4], %s456
        %s458 = sand.u32 %s316, 1
        %s459 = smul.addr %s458, 128
        %s460 = scalar_lea.vmem [#allocation5], %s459
        %v464 = vld [vmem:[%s417] sm:$0xff]
        %v465 = vld [vmem:[%s417 + $0x8] sm:$0xff]
        %v466 = vld [vmem:[%s417 + $0x10] sm:$0xff]
        %v467 = vld [vmem:[%s417 + $0x18] sm:$0xff]
        %v468 = vld [vmem:[%s417 + $0x20] sm:$0xff]
        %v469 = vld [vmem:[%s417 + $0x28] sm:$0xff]
        %v470 = vld [vmem:[%s417 + $0x30] sm:$0xff]
        %v471 = vld [vmem:[%s417 + $0x38] sm:$0xff]
        %v472 = vld [vmem:[%s417 + $0x40] sm:$0xff]
        %v473 = vld [vmem:[%s417 + $0x48] sm:$0xff]
        %v474 = vld [vmem:[%s417 + $0x50] sm:$0xff]
        %v475 = vld [vmem:[%s417 + $0x58] sm:$0xff]
        %v476 = vld [vmem:[%s417 + $0x60] sm:$0xff]
        %v477 = vld [vmem:[%s417 + $0x68] sm:$0xff]
        %v478 = vld [vmem:[%s417 + $0x70] sm:$0xff]
        %v479 = vld [vmem:[%s417 + $0x78] sm:$0xff]
        %v480 = vlaneseq
        %v481 = vand.u32 %v480, 127
        %v482 = vadd.s32 %v481, 128
        %vm483 = vcmp.lt.s32.totalorder %v481, 0
        %v484 = vsub.s32 0, %v481
        %v485 = vsel %vm483, %v484, %v481
        %v486 = vshrl.u32 %v485, 4
        %v487 = vand.u32 %v485, 15
        %v488 = vsub.s32 0, %v487
        %v489 = vsel %vm483, %v488, %v487
        %vm490 = vcmp.lt.s32.totalorder %v482, 0
        %v491 = vsub.s32 0, %v482
        %v492 = vsel %vm490, %v491, %v482
        %v493 = vshrl.u32 %v492, 4
        %v494 = vand.u32 %v492, 15
        %v495 = vsub.s32 0, %v494
        %v496 = vsel %vm490, %v495, %v494
        %vm497 = vcmp.ne.s32.totalorder %v489, 0
        %vm498 = vcmp.ne.s32.totalorder %v496, 0
        %vm499 = vcmp.lt.s32.totalorder %v489, 0
        %vm500 = vcmp.lt.s32.totalorder %v496, 0
        %vm501 = vmand %vm499, %vm497
        %vm502 = vmand %vm500, %vm498
        %v503 = vadd.s32 %v489, 16
        %v504 = vadd.s32 %v496, 16
        %v505 = vsel %vm501, %v503, %v489
        %v506 = vsel %vm502, %v504, %v496
        %v507 = vld [vmem:[%s1] sm:$0xf]
        %v508 = vld [vmem:[%s1 + $0x4] sm:$0xf]
        %v509 = vpack.c.bf16 %v466, %v464
        %v510 = vpack.c.bf16 %v467, %v465
        %v511 = vpack.c.bf16 %v470, %v468
        %v512 = vpack.c.bf16 %v471, %v469
        %v513 = vpack.c.bf16 %v474, %v472
        %v514 = vpack.c.bf16 %v475, %v473
        %v515 = vpack.c.bf16 %v478, %v476
        %v516 = vpack.c.bf16 %v479, %v477
        %v519 = vunpack.c.l.b16 %v507
        %v520 = vunpack.c.l.b16 %v508
        %v521 = vpack.c.b16 %v520, %v519
        %vm522 = vcmask 523264
        %v524 = vsel %vm522, %v521, 0
        %526 = vmatpush.bf16.msra.mxu0 0
        %527 = vmatpush.bf16.msra.mxu0 0
        %528 = vmatpush.bf16.msra.mxu0 0
        %529 = vmatpush.bf16.msra.mxu0 0
        %530 = vmatpush.bf16.msra.mxu0 %v515
        %531 = vmatpush.bf16.msra.mxu0 %v513
        %532 = vmatpush.bf16.msra.mxu0 %v511
        %533 = vmatpush.bf16.msra.mxu0 %v509
        %534 = vmatmul.bf16.gmra.mxu0 %v524
        %v535 = vpop.f32.mrf.mxu0
        %v536 = vadd.f32 0.0, %v535
        %v537 = vpop.f32.mrf.mxu0
        %v538 = vadd.f32 0.0, %v537
        %539 = vdwg.mxu0
        %540 = vmatpush.bf16.msra.mxu0 0
        %541 = vmatpush.bf16.msra.mxu0 0
        %542 = vmatpush.bf16.msra.mxu0 0
        %543 = vmatpush.bf16.msra.mxu0 0
        %544 = vmatpush.bf16.msra.mxu0 %v516
        %545 = vmatpush.bf16.msra.mxu0 %v514
        %546 = vmatpush.bf16.msra.mxu0 %v512
        %547 = vmatpush.bf16.msra.mxu0 %v510
        %548 = vmatmul.bf16.gmra.mxu0 %v524
        %v549 = vpop.f32.mrf.mxu0
        %v550 = vadd.f32 0.0, %v549
        %v551 = vpop.f32.mrf.mxu0
        %v552 = vadd.f32 0.0, %v551
        %553 = vdwg.mxu0
        %v554 = vld [vmem:[%s2] sm:$0xff]
        %v555 = vld [vmem:[%s2 + $0x8] sm:$0xff]
        %557 = vset.pattern.permute.xlu0 0
        %558 = vperm.xlu0 %557, %v554
        %v559 = vpop.permute.xlu0 %558
        %562 = vset.pattern.permute.xlu0 0
        %563 = vperm.xlu0 %562, %v555
        %v564 = vpop.permute.xlu0 %563
        %v566 = vmul.f32 %v536, %v559
        %v567 = vmul.f32 %v550, %v559
        %v568 = vmul.f32 %v538, %v564
        %v569 = vmul.f32 %v552, %v564
        %v570 = vld [vmem:[%s3] sm:$0xff]
        %v571 = vld [vmem:[%s3 + $0x8] sm:$0xff]
        %573 = vset.pattern.permute.xlu0 0
        %574 = vperm.xlu0 %573, %v570
        %v575 = vpop.permute.xlu0 %574
        %578 = vset.pattern.permute.xlu0 0
        %579 = vperm.xlu0 %578, %v571
        %v580 = vpop.permute.xlu0 %579
        %v582 = vadd.f32 %v566, %v575
        %v583 = vadd.f32 %v567, %v575
        %v584 = vadd.f32 %v568, %v580
        %v585 = vadd.f32 %v569, %v580
        %v586 = vmax.f32 %v582, 0.0
        %v587 = vmax.f32 %v583, 0.0
        %v588 = vmax.f32 %v584, 0.0
        %v589 = vmax.f32 %v585, 0.0
        %v590 = vpack.c.bf16 %v587, %v586
        %v591 = vpack.c.bf16 %v589, %v588
        %v594 = vunpack.c.l.b16 %v590
        %v595 = vunpack.c.h.b16 %v590
        %v596 = vunpack.c.l.b16 %v591
        %v597 = vunpack.c.h.b16 %v591
        %v598 = vpack.c.b16 %v596, %v594
        %v599 = vpack.c.b16 %v597, %v595
        %600 = vrot.lane.b32.xlu0 %v598, 17
        %v601 = vpop.permute.xlu0 %600
        %602 = vrot.lane.b32.xlu0 %v599, 17
        %v603 = vpop.permute.xlu0 %602
        %vm604 = vcmask 138240
        %v605 = vsel %vm604, %v601, %v603
        %vm607 = vcmask 138240
        %v610 = vsel %vm607, 0, %v601
        %v613 = vsel %vm607, %v603, 0
        %v615 = vadd.s32 %v505, 4294967295
        %v616 = vadd.s32 %v506, 4294967295
        %vm617 = vcmp.ge.s32.totalorder %v615, 0
        %vm618 = vcmp.ge.s32.totalorder %v616, 0
        %vm619 = vcmp.lt.s32.totalorder %v615, 16
        %vm620 = vcmp.lt.s32.totalorder %v616, 16
        %vm621 = vmand %vm617, %vm619
        %vm622 = vmand %vm618, %vm620
        %vm623 = vcmp.ge.s32.totalorder %v505, 0
        %vm624 = vcmp.ge.s32.totalorder %v506, 0
        %vm625 = vcmp.lt.s32.totalorder %v505, 16
        %vm626 = vcmp.lt.s32.totalorder %v506, 16
        %vm627 = vmand %vm623, %vm625
        %vm628 = vmand %vm624, %vm626
        %v629 = vadd.s32 %v505, 1
        %v630 = vadd.s32 %v506, 1
        %vm631 = vcmp.ge.s32.totalorder %v629, 0
        %vm632 = vcmp.ge.s32.totalorder %v630, 0
        %vm633 = vcmp.lt.s32.totalorder %v629, 16
        %vm634 = vcmp.lt.s32.totalorder %v630, 16
        %vm635 = vmand %vm631, %vm633
        %vm636 = vmand %vm632, %vm634
        %v637 = vsel %vm621, 1, 0
        %v638 = vsel %vm622, 1, 0
        %vm639 = vcmp.eq.s32.totalorder %v637, 1
        %vm640 = vcmp.eq.s32.totalorder %v638, 1
        %vm641 = vmpackc.low %vm640, %vm639
        %v642 = vsel %vm641, 65537, 0
        %v643 = vperm.slane %v642, 0
        %v644 = vperm.slane %v642, 4
        %v645 = vunpack.c.l.b16 %v643
        %v646 = vunpack.c.h.b16 %v643
        %v647 = vunpack.c.l.b16 0
        %v648 = vunpack.c.h.b16 0
        %vm649 = vcmp.ne.s32.totalorder %v645, %v647
        %vm650 = vcmp.ne.s32.totalorder %v646, %v648
        %vm651 = vmpackc.low %vm650, %vm649
        %v652 = vunpack.c.l.b16 %v644
        %v653 = vunpack.c.h.b16 %v644
        %v654 = vunpack.c.l.b16 0
        %v655 = vunpack.c.h.b16 0
        %vm656 = vcmp.ne.s32.totalorder %v652, %v654
        %vm657 = vcmp.ne.s32.totalorder %v653, %v655
        %vm658 = vmpackc.low %vm657, %vm656
        %v659 = vsel %vm651, %v610, 0
        %v660 = vsel %vm658, %v605, 0
        %v661 = vsel %vm627, 1, 0
        %v662 = vsel %vm628, 1, 0
        %vm663 = vcmp.eq.s32.totalorder %v661, 1
        %vm664 = vcmp.eq.s32.totalorder %v662, 1
        %vm665 = vmpackc.low %vm664, %vm663
        %v666 = vsel %vm665, 65537, 0
        %v667 = vperm.slane %v666, 0
        %v668 = vperm.slane %v666, 4
        %669 = vrot.lane.b32.xlu0 %v667, 1
        %v670 = vpop.permute.xlu0 %669
        %671 = vrot.lane.b32.xlu0 %v668, 1
        %v672 = vpop.permute.xlu0 %671
        %vm673 = vcmask 7168
        %v674 = vsel %vm673, %v670, %v672
        %v675 = vunpack.c.l.b16 %v670
        %v676 = vunpack.c.h.b16 %v670
        %v677 = vunpack.c.l.b16 0
        %v678 = vunpack.c.h.b16 0
        %vm679 = vcmp.ne.s32.totalorder %v675, %v677
        %vm680 = vcmp.ne.s32.totalorder %v676, %v678
        %vm681 = vmpackc.low %vm680, %vm679
        %v682 = vunpack.c.l.b16 %v674
        %v683 = vunpack.c.h.b16 %v674
        %v684 = vunpack.c.l.b16 0
        %v685 = vunpack.c.h.b16 0
        %vm686 = vcmp.ne.s32.totalorder %v682, %v684
        %vm687 = vcmp.ne.s32.totalorder %v683, %v685
        %vm688 = vmpackc.low %vm687, %vm686
        %v689 = vunpack.c.l.b16 %v672
        %v690 = vunpack.c.h.b16 %v672
        %v691 = vunpack.c.l.b16 0
        %v692 = vunpack.c.h.b16 0
        %vm693 = vcmp.ne.s32.totalorder %v689, %v691
        %vm694 = vcmp.ne.s32.totalorder %v690, %v692
        %vm695 = vmpackc.low %vm694, %vm693
        %v696 = vsel %vm681, %v610, 0
        %v697 = vsel %vm688, %v605, 0
        %v698 = vsel %vm695, %v613, 0
        %v699 = vsel %vm635, 1, 0
        %v700 = vsel %vm636, 1, 0
        %vm701 = vcmp.eq.s32.totalorder %v699, 1
        %vm702 = vcmp.eq.s32.totalorder %v700, 1
        %vm703 = vmpackc.low %vm702, %vm701
        %v704 = vsel %vm703, 65537, 0
        %v705 = vperm.slane %v704, 0
        %v706 = vperm.slane %v704, 4
        %707 = vrot.lane.b32.xlu0 %v705, 2
        %v708 = vpop.permute.xlu0 %707
        %709 = vrot.lane.b32.xlu0 %v706, 2
        %v710 = vpop.permute.xlu0 %709
        %vm711 = vcmask 15360
        %v712 = vsel %vm711, %v708, %v710
        %v713 = vunpack.c.l.b16 %v708
        %v714 = vunpack.c.h.b16 %v708
        %v715 = vunpack.c.l.b16 0
        %v716 = vunpack.c.h.b16 0
        %vm717 = vcmp.ne.s32.totalorder %v713, %v715
        %vm718 = vcmp.ne.s32.totalorder %v714, %v716
        %vm719 = vmpackc.low %vm718, %vm717
        %v720 = vunpack.c.l.b16 %v712
        %v721 = vunpack.c.h.b16 %v712
        %v722 = vunpack.c.l.b16 0
        %v723 = vunpack.c.h.b16 0
        %vm724 = vcmp.ne.s32.totalorder %v720, %v722
        %vm725 = vcmp.ne.s32.totalorder %v721, %v723
        %vm726 = vmpackc.low %vm725, %vm724
        %v727 = vunpack.c.l.b16 %v710
        %v728 = vunpack.c.h.b16 %v710
        %v729 = vunpack.c.l.b16 0
        %v730 = vunpack.c.h.b16 0
        %vm731 = vcmp.ne.s32.totalorder %v727, %v729
        %vm732 = vcmp.ne.s32.totalorder %v728, %v730
        %vm733 = vmpackc.low %vm732, %vm731
        %v734 = vsel %vm719, %v610, 0
        %v735 = vsel %vm726, %v605, 0
        %v736 = vsel %vm733, %v613, 0
        %737 = vrot.lane.b32.xlu0 %v643, 16
        %v738 = vpop.permute.xlu0 %737
        %739 = vrot.lane.b32.xlu0 %v644, 16
        %v740 = vpop.permute.xlu0 %739
        %vm741 = vcmask 130048
        %v742 = vsel %vm741, %v738, %v740
        %v743 = vunpack.c.l.b16 %v738
        %v744 = vunpack.c.h.b16 %v738
        %v745 = vunpack.c.l.b16 0
        %v746 = vunpack.c.h.b16 0
        %vm747 = vcmp.ne.s32.totalorder %v743, %v745
        %vm748 = vcmp.ne.s32.totalorder %v744, %v746
        %vm749 = vmpackc.low %vm748, %vm747
        %v750 = vunpack.c.l.b16 %v742
        %v751 = vunpack.c.h.b16 %v742
        %v752 = vunpack.c.l.b16 0
        %v753 = vunpack.c.h.b16 0
        %vm754 = vcmp.ne.s32.totalorder %v750, %v752
        %vm755 = vcmp.ne.s32.totalorder %v751, %v753
        %vm756 = vmpackc.low %vm755, %vm754
        %v757 = vunpack.c.l.b16 %v740
        %v758 = vunpack.c.h.b16 %v740
        %v759 = vunpack.c.l.b16 0
        %v760 = vunpack.c.h.b16 0
        %vm761 = vcmp.ne.s32.totalorder %v757, %v759
        %vm762 = vcmp.ne.s32.totalorder %v758, %v760
        %vm763 = vmpackc.low %vm762, %vm761
        %v764 = vsel %vm749, %v610, 0
        %v765 = vsel %vm756, %v605, 0
        %v766 = vsel %vm763, %v613, 0
        %767 = vrot.lane.b32.xlu0 %v667, 17
        %v768 = vpop.permute.xlu0 %767
        %769 = vrot.lane.b32.xlu0 %v668, 17
        %v770 = vpop.permute.xlu0 %769
        %v771 = vsel %vm604, %v768, %v770
        %v772 = vunpack.c.l.b16 %v768
        %v773 = vunpack.c.h.b16 %v768
        %v774 = vunpack.c.l.b16 0
        %v775 = vunpack.c.h.b16 0
        %vm776 = vcmp.ne.s32.totalorder %v772, %v774
        %vm777 = vcmp.ne.s32.totalorder %v773, %v775
        %vm778 = vmpackc.low %vm777, %vm776
        %v779 = vunpack.c.l.b16 %v771
        %v780 = vunpack.c.h.b16 %v771
        %v781 = vunpack.c.l.b16 0
        %v782 = vunpack.c.h.b16 0
        %vm783 = vcmp.ne.s32.totalorder %v779, %v781
        %vm784 = vcmp.ne.s32.totalorder %v780, %v782
        %vm785 = vmpackc.low %vm784, %vm783
        %v786 = vunpack.c.l.b16 %v770
        %v787 = vunpack.c.h.b16 %v770
        %v788 = vunpack.c.l.b16 0
        %v789 = vunpack.c.h.b16 0
        %vm790 = vcmp.ne.s32.totalorder %v786, %v788
        %vm791 = vcmp.ne.s32.totalorder %v787, %v789
        %vm792 = vmpackc.low %vm791, %vm790
        %v793 = vsel %vm778, %v610, 0
        %v794 = vsel %vm785, %v605, 0
        %v795 = vsel %vm792, %v613, 0
        %796 = vrot.lane.b32.xlu0 %v705, 18
        %v797 = vpop.permute.xlu0 %796
        %798 = vrot.lane.b32.xlu0 %v706, 18
        %v799 = vpop.permute.xlu0 %798
        %vm800 = vcmask 146432
        %v801 = vsel %vm800, %v797, %v799
        %v802 = vunpack.c.l.b16 %v797
        %v803 = vunpack.c.h.b16 %v797
        %v804 = vunpack.c.l.b16 0
        %v805 = vunpack.c.h.b16 0
        %vm806 = vcmp.ne.s32.totalorder %v802, %v804
        %vm807 = vcmp.ne.s32.totalorder %v803, %v805
        %vm808 = vmpackc.low %vm807, %vm806
        %v809 = vunpack.c.l.b16 %v801
        %v810 = vunpack.c.h.b16 %v801
        %v811 = vunpack.c.l.b16 0
        %v812 = vunpack.c.h.b16 0
        %vm813 = vcmp.ne.s32.totalorder %v809, %v811
        %vm814 = vcmp.ne.s32.totalorder %v810, %v812
        %vm815 = vmpackc.low %vm814, %vm813
        %v816 = vunpack.c.l.b16 %v799
        %v817 = vunpack.c.h.b16 %v799
        %v818 = vunpack.c.l.b16 0
        %v819 = vunpack.c.h.b16 0
        %vm820 = vcmp.ne.s32.totalorder %v816, %v818
        %vm821 = vcmp.ne.s32.totalorder %v817, %v819
        %vm822 = vmpackc.low %vm821, %vm820
        %v823 = vsel %vm808, %v610, 0
        %v824 = vsel %vm815, %v605, 0
        %v825 = vsel %vm822, %v613, 0
        %826 = vrot.lane.b32.xlu0 %v643, 32
        %v827 = vpop.permute.xlu0 %826
        %828 = vrot.lane.b32.xlu0 %v644, 32
        %v829 = vpop.permute.xlu0 %828
        %vm830 = vcmask 261120
        %v831 = vsel %vm830, %v827, %v829
        %v832 = vunpack.c.l.b16 %v827
        %v833 = vunpack.c.h.b16 %v827
        %v834 = vunpack.c.l.b16 0
        %v835 = vunpack.c.h.b16 0
        %vm836 = vcmp.ne.s32.totalorder %v832, %v834
        %vm837 = vcmp.ne.s32.totalorder %v833, %v835
        %vm838 = vmpackc.low %vm837, %vm836
        %v839 = vunpack.c.l.b16 %v831
        %v840 = vunpack.c.h.b16 %v831
        %v841 = vunpack.c.l.b16 0
        %v842 = vunpack.c.h.b16 0
        %vm843 = vcmp.ne.s32.totalorder %v839, %v841
        %vm844 = vcmp.ne.s32.totalorder %v840, %v842
        %vm845 = vmpackc.low %vm844, %vm843
        %v846 = vunpack.c.l.b16 %v829
        %v847 = vunpack.c.h.b16 %v829
        %v848 = vunpack.c.l.b16 0
        %v849 = vunpack.c.h.b16 0
        %vm850 = vcmp.ne.s32.totalorder %v846, %v848
        %vm851 = vcmp.ne.s32.totalorder %v847, %v849
        %vm852 = vmpackc.low %vm851, %vm850
        %v853 = vsel %vm838, %v610, 0
        %v854 = vsel %vm845, %v605, 0
        %v855 = vsel %vm852, %v613, 0
        %856 = vrot.lane.b32.xlu0 %v667, 33
        %v857 = vpop.permute.xlu0 %856
        %858 = vrot.lane.b32.xlu0 %v668, 33
        %v859 = vpop.permute.xlu0 %858
        %vm860 = vcmask 269312
        %v861 = vsel %vm860, %v857, %v859
        %v862 = vunpack.c.l.b16 %v857
        %v863 = vunpack.c.h.b16 %v857
        %v864 = vunpack.c.l.b16 0
        %v865 = vunpack.c.h.b16 0
        %vm866 = vcmp.ne.s32.totalorder %v862, %v864
        %vm867 = vcmp.ne.s32.totalorder %v863, %v865
        %vm868 = vmpackc.low %vm867, %vm866
        %v869 = vunpack.c.l.b16 %v861
        %v870 = vunpack.c.h.b16 %v861
        %v871 = vunpack.c.l.b16 0
        %v872 = vunpack.c.h.b16 0
        %vm873 = vcmp.ne.s32.totalorder %v869, %v871
        %vm874 = vcmp.ne.s32.totalorder %v870, %v872
        %vm875 = vmpackc.low %vm874, %vm873
        %v876 = vunpack.c.l.b16 %v859
        %v877 = vunpack.c.h.b16 %v859
        %v878 = vunpack.c.l.b16 0
        %v879 = vunpack.c.h.b16 0
        %vm880 = vcmp.ne.s32.totalorder %v876, %v878
        %vm881 = vcmp.ne.s32.totalorder %v877, %v879
        %vm882 = vmpackc.low %vm881, %vm880
        %v883 = vsel %vm868, %v610, 0
        %v884 = vsel %vm875, %v605, 0
        %v885 = vsel %vm882, %v613, 0
        %886 = vrot.lane.b32.xlu0 %v705, 34
        %v887 = vpop.permute.xlu0 %886
        %888 = vrot.lane.b32.xlu0 %v706, 34
        %v889 = vpop.permute.xlu0 %888
        %vm890 = vcmask 277504
        %v891 = vsel %vm890, %v887, %v889
        %v892 = vunpack.c.l.b16 %v887
        %v893 = vunpack.c.h.b16 %v887
        %v894 = vunpack.c.l.b16 0
        %v895 = vunpack.c.h.b16 0
        %vm896 = vcmp.ne.s32.totalorder %v892, %v894
        %vm897 = vcmp.ne.s32.totalorder %v893, %v895
        %vm898 = vmpackc.low %vm897, %vm896
        %v899 = vunpack.c.l.b16 %v891
        %v900 = vunpack.c.h.b16 %v891
        %v901 = vunpack.c.l.b16 0
        %v902 = vunpack.c.h.b16 0
        %vm903 = vcmp.ne.s32.totalorder %v899, %v901
        %vm904 = vcmp.ne.s32.totalorder %v900, %v902
        %vm905 = vmpackc.low %vm904, %vm903
        %v906 = vunpack.c.l.b16 %v889
        %v907 = vunpack.c.h.b16 %v889
        %v908 = vunpack.c.l.b16 0
        %v909 = vunpack.c.h.b16 0
        %vm910 = vcmp.ne.s32.totalorder %v906, %v908
        %vm911 = vcmp.ne.s32.totalorder %v907, %v909
        %vm912 = vmpackc.low %vm911, %vm910
        %v913 = vsel %vm898, %v610, 0
        %v914 = vsel %vm905, %v605, 0
        %v915 = vsel %vm912, %v613, 0
        %919 = vrot.lane.b32.xlu0 %v696, 127
        %v920 = vpop.permute.xlu0 %919
        %921 = vrot.lane.b32.xlu0 %v697, 127
        %v922 = vpop.permute.xlu0 %921
        %923 = vrot.lane.b32.xlu0 %v698, 127
        %v924 = vpop.permute.xlu0 %923
        %vm925 = vcmask 1039360
        %v926 = vsel %vm925, %v920, %v922
        %v927 = vsel %vm925, %v922, %v924
        %933 = vrot.lane.b32.xlu0 %v734, 126
        %v934 = vpop.permute.xlu0 %933
        %935 = vrot.lane.b32.xlu0 %v735, 126
        %v936 = vpop.permute.xlu0 %935
        %937 = vrot.lane.b32.xlu0 %v736, 126
        %v938 = vpop.permute.xlu0 %937
        %vm939 = vcmask 1031168
        %v940 = vsel %vm939, %v934, %v936
        %v941 = vsel %vm939, %v936, %v938
        %947 = vrot.lane.b32.xlu0 %v764, 112
        %v948 = vpop.permute.xlu0 %947
        %949 = vrot.lane.b32.xlu0 %v765, 112
        %v950 = vpop.permute.xlu0 %949
        %951 = vrot.lane.b32.xlu0 %v766, 112
        %v952 = vpop.permute.xlu0 %951
        %vm953 = vcmask 916480
        %v954 = vsel %vm953, %v948, %v950
        %v955 = vsel %vm953, %v950, %v952
        %961 = vrot.lane.b32.xlu0 %v793, 111
        %v962 = vpop.permute.xlu0 %961
        %963 = vrot.lane.b32.xlu0 %v794, 111
        %v964 = vpop.permute.xlu0 %963
        %965 = vrot.lane.b32.xlu0 %v795, 111
        %v966 = vpop.permute.xlu0 %965
        %vm967 = vcmask 908288
        %v968 = vsel %vm967, %v962, %v964
        %v969 = vsel %vm967, %v964, %v966
        %975 = vrot.lane.b32.xlu0 %v823, 110
        %v976 = vpop.permute.xlu0 %975
        %977 = vrot.lane.b32.xlu0 %v824, 110
        %v978 = vpop.permute.xlu0 %977
        %979 = vrot.lane.b32.xlu0 %v825, 110
        %v980 = vpop.permute.xlu0 %979
        %vm981 = vcmask 900096
        %v982 = vsel %vm981, %v976, %v978
        %v983 = vsel %vm981, %v978, %v980
        %989 = vrot.lane.b32.xlu0 %v853, 96
        %v990 = vpop.permute.xlu0 %989
        %991 = vrot.lane.b32.xlu0 %v854, 96
        %v992 = vpop.permute.xlu0 %991
        %993 = vrot.lane.b32.xlu0 %v855, 96
        %v994 = vpop.permute.xlu0 %993
        %vm995 = vcmask 785408
        %v996 = vsel %vm995, %v990, %v992
        %v997 = vsel %vm995, %v992, %v994
        %1003 = vrot.lane.b32.xlu0 %v883, 95
        %v1004 = vpop.permute.xlu0 %1003
        %1005 = vrot.lane.b32.xlu0 %v884, 95
        %v1006 = vpop.permute.xlu0 %1005
        %1007 = vrot.lane.b32.xlu0 %v885, 95
        %v1008 = vpop.permute.xlu0 %1007
        %vm1009 = vcmask 777216
        %v1010 = vsel %vm1009, %v1004, %v1006
        %v1011 = vsel %vm1009, %v1006, %v1008
        %1017 = vrot.lane.b32.xlu0 %v913, 94
        %v1018 = vpop.permute.xlu0 %1017
        %1019 = vrot.lane.b32.xlu0 %v914, 94
        %v1020 = vpop.permute.xlu0 %1019
        %1021 = vrot.lane.b32.xlu0 %v915, 94
        %v1022 = vpop.permute.xlu0 %1021
        %vm1023 = vcmask 769024
        %v1024 = vsel %vm1023, %v1018, %v1020
        %v1025 = vsel %vm1023, %v1020, %v1022
        %v1028 = vld [vmem:[%s4] sm:$0xff]
        %v1029 = vld [vmem:[%s4 + $0x8] sm:$0xff]
        %v1032 = vunpack.c.l.b16 %v1028
        %v1033 = vunpack.c.h.b16 %v1028
        %v1034 = vunpack.c.l.b16 %v1029
        %v1035 = vunpack.c.h.b16 %v1029
        %v1036 = vpack.c.b16 %v1034, %v1032
        %v1037 = vpack.c.b16 %v1035, %v1033
        %vm1039 = vcmask 130048
        %v1041 = vsel %vm1039, %v1037, 0
        %1043 = vmatpush.bf16.msra.mxu0 %v1010
        %1044 = vmatpush.bf16.msra.mxu0 %v996
        %1045 = vmatpush.bf16.msra.mxu0 %v982
        %1046 = vmatpush.bf16.msra.mxu0 %v968
        %1047 = vmatpush.bf16.msra.mxu0 %v954
        %1048 = vmatpush.bf16.msra.mxu0 %v940
        %1049 = vmatpush.bf16.msra.mxu0 %v926
        %1050 = vmatpush.bf16.msra.mxu0 %v659
        %1051 = vmatmul.bf16.gmra.mxu0 %v1036
        %v1052 = vpop.f32.mrf.mxu0
        %v1053 = vadd.f32 0.0, %v1052
        %v1054 = vpop.f32.mrf.mxu0
        %v1055 = vadd.f32 0.0, %v1054
        %1056 = vdwg.mxu0
        %1057 = vmatpush.bf16.msra.mxu0 0
        %1058 = vmatpush.bf16.msra.mxu0 0
        %1059 = vmatpush.bf16.msra.mxu0 0
        %1060 = vmatpush.bf16.msra.mxu0 0
        %1061 = vmatpush.bf16.msra.mxu0 0
        %1062 = vmatpush.bf16.msra.mxu0 0
        %1063 = vmatpush.bf16.msra.mxu0 0
        %1064 = vmatpush.bf16.msra.mxu0 %v1024
        %1065 = vmatmul.bf16.gmra.mxu0 %v1041
        %v1066 = vpop.f32.mrf.mxu0
        %v1067 = vadd.f32 %v1053, %v1066
        %v1068 = vpop.f32.mrf.mxu0
        %v1069 = vadd.f32 %v1055, %v1068
        %1070 = vdwg.mxu0
        %1071 = vmatpush.bf16.msra.mxu0 %v1011
        %1072 = vmatpush.bf16.msra.mxu0 %v997
        %1073 = vmatpush.bf16.msra.mxu0 %v983
        %1074 = vmatpush.bf16.msra.mxu0 %v969
        %1075 = vmatpush.bf16.msra.mxu0 %v955
        %1076 = vmatpush.bf16.msra.mxu0 %v941
        %1077 = vmatpush.bf16.msra.mxu0 %v927
        %1078 = vmatpush.bf16.msra.mxu0 %v660
        %1079 = vmatmul.bf16.gmra.mxu0 %v1036
        %v1080 = vpop.f32.mrf.mxu0
        %v1081 = vadd.f32 0.0, %v1080
        %v1082 = vpop.f32.mrf.mxu0
        %v1083 = vadd.f32 0.0, %v1082
        %1084 = vdwg.mxu0
        %1085 = vmatpush.bf16.msra.mxu0 0
        %1086 = vmatpush.bf16.msra.mxu0 0
        %1087 = vmatpush.bf16.msra.mxu0 0
        %1088 = vmatpush.bf16.msra.mxu0 0
        %1089 = vmatpush.bf16.msra.mxu0 0
        %1090 = vmatpush.bf16.msra.mxu0 0
        %1091 = vmatpush.bf16.msra.mxu0 0
        %1092 = vmatpush.bf16.msra.mxu0 %v1025
        %1093 = vmatmul.bf16.gmra.mxu0 %v1041
        %v1094 = vpop.f32.mrf.mxu0
        %v1095 = vadd.f32 %v1081, %v1094
        %v1096 = vpop.f32.mrf.mxu0
        %v1097 = vadd.f32 %v1083, %v1096
        %1098 = vdwg.mxu0
        %v1099 = vld [vmem:[%s5] sm:$0xff]
        %v1100 = vld [vmem:[%s5 + $0x8] sm:$0xff]
        %1102 = vset.pattern.permute.xlu0 0
        %1103 = vperm.xlu0 %1102, %v1099
        %v1104 = vpop.permute.xlu0 %1103
        %1107 = vset.pattern.permute.xlu0 0
        %1108 = vperm.xlu0 %1107, %v1100
        %v1109 = vpop.permute.xlu0 %1108
        %v1111 = vmul.f32 %v1067, %v1104
        %v1112 = vmul.f32 %v1095, %v1104
        %v1113 = vmul.f32 %v1069, %v1109
        %v1114 = vmul.f32 %v1097, %v1109
        %v1115 = vld [vmem:[%s6] sm:$0xff]
        %v1116 = vld [vmem:[%s6 + $0x8] sm:$0xff]
        %1118 = vset.pattern.permute.xlu0 0
        %1119 = vperm.xlu0 %1118, %v1115
        %v1120 = vpop.permute.xlu0 %1119
        %1123 = vset.pattern.permute.xlu0 0
        %1124 = vperm.xlu0 %1123, %v1116
        %v1125 = vpop.permute.xlu0 %1124
        %v1127 = vadd.f32 %v1111, %v1120
        %v1128 = vadd.f32 %v1112, %v1120
        %v1129 = vadd.f32 %v1113, %v1125
        %v1130 = vadd.f32 %v1114, %v1125
        %v1131 = vmax.f32 %v1127, 0.0
        %v1132 = vmax.f32 %v1128, 0.0
        %v1133 = vmax.f32 %v1129, 0.0
        %v1134 = vmax.f32 %v1130, 0.0
        %v1135 = vld [vmem:[%s7] sm:$0xf]
        %v1136 = vld [vmem:[%s7 + $0x4] sm:$0xf]
        %v1137 = vld [vmem:[%s7 + $0x8] sm:$0xf]
        %v1138 = vld [vmem:[%s7 + $0xc] sm:$0xf]
        %v1139 = vld [vmem:[%s7 + $0x10] sm:$0xf]
        %v1140 = vld [vmem:[%s7 + $0x14] sm:$0xf]
        %v1141 = vld [vmem:[%s7 + $0x18] sm:$0xf]
        %v1142 = vld [vmem:[%s7 + $0x1c] sm:$0xf]
        %v1143 = vpack.c.bf16 %v1133, %v1131
        %v1144 = vpack.c.bf16 %v1134, %v1132
        %v1153 = vunpack.c.l.b16 %v1135
        %v1154 = vunpack.c.l.b16 %v1136
        %v1155 = vunpack.c.l.b16 %v1137
        %v1156 = vunpack.c.l.b16 %v1138
        %v1157 = vunpack.c.l.b16 %v1139
        %v1158 = vunpack.c.l.b16 %v1140
        %v1159 = vunpack.c.l.b16 %v1141
        %v1160 = vunpack.c.l.b16 %v1142
        %v1161 = vpack.c.b16 %v1154, %v1153
        %v1162 = vpack.c.b16 %v1156, %v1155
        %v1163 = vpack.c.b16 %v1158, %v1157
        %v1164 = vpack.c.b16 %v1160, %v1159
        %v1166 = vsel %vm1039, %v1161, 0
        %v1169 = vsel %vm1039, %v1162, 0
        %v1172 = vsel %vm1039, %v1163, 0
        %v1175 = vsel %vm1039, %v1164, 0
        %1177 = vmatpush.bf16.msra.mxu0 0
        %1178 = vmatpush.bf16.msra.mxu0 0
        %1179 = vmatpush.bf16.msra.mxu0 0
        %1180 = vmatpush.bf16.msra.mxu0 0
        %1181 = vmatpush.bf16.msra.mxu0 0
        %1182 = vmatpush.bf16.msra.mxu0 0
        %1183 = vmatpush.bf16.msra.mxu0 0
        %1184 = vmatpush.bf16.msra.mxu0 %v1143
        %1185 = vmatmul.bf16.gmra.mxu0 %v1166
        %v1186 = vpop.f32.mrf.mxu0
        %v1187 = vadd.f32 0.0, %v1186
        %v1188 = vpop.f32.mrf.mxu0
        %v1189 = vadd.f32 0.0, %v1188
        %1190 = vmatmul.bf16.gmra.mxu0 %v1169
        %v1191 = vpop.f32.mrf.mxu0
        %v1192 = vadd.f32 0.0, %v1191
        %v1193 = vpop.f32.mrf.mxu0
        %v1194 = vadd.f32 0.0, %v1193
        %1195 = vmatmul.bf16.gmra.mxu0 %v1172
        %v1196 = vpop.f32.mrf.mxu0
        %v1197 = vadd.f32 0.0, %v1196
        %v1198 = vpop.f32.mrf.mxu0
        %v1199 = vadd.f32 0.0, %v1198
        %1200 = vmatmul.bf16.gmra.mxu0 %v1175
        %v1201 = vpop.f32.mrf.mxu0
        %v1202 = vadd.f32 0.0, %v1201
        %v1203 = vpop.f32.mrf.mxu0
        %v1204 = vadd.f32 0.0, %v1203
        %1205 = vdwg.mxu0
        %1206 = vmatpush.bf16.msra.mxu0 0
        %1207 = vmatpush.bf16.msra.mxu0 0
        %1208 = vmatpush.bf16.msra.mxu0 0
        %1209 = vmatpush.bf16.msra.mxu0 0
        %1210 = vmatpush.bf16.msra.mxu0 0
        %1211 = vmatpush.bf16.msra.mxu0 0
        %1212 = vmatpush.bf16.msra.mxu0 0
        %1213 = vmatpush.bf16.msra.mxu0 %v1144
        %1214 = vmatmul.bf16.gmra.mxu0 %v1166
        %v1215 = vpop.f32.mrf.mxu0
        %v1216 = vadd.f32 0.0, %v1215
        %v1217 = vpop.f32.mrf.mxu0
        %v1218 = vadd.f32 0.0, %v1217
        %1219 = vmatmul.bf16.gmra.mxu0 %v1169
        %v1220 = vpop.f32.mrf.mxu0
        %v1221 = vadd.f32 0.0, %v1220
        %v1222 = vpop.f32.mrf.mxu0
        %v1223 = vadd.f32 0.0, %v1222
        %1224 = vmatmul.bf16.gmra.mxu0 %v1172
        %v1225 = vpop.f32.mrf.mxu0
        %v1226 = vadd.f32 0.0, %v1225
        %v1227 = vpop.f32.mrf.mxu0
        %v1228 = vadd.f32 0.0, %v1227
        %1229 = vmatmul.bf16.gmra.mxu0 %v1175
        %v1230 = vpop.f32.mrf.mxu0
        %v1231 = vadd.f32 0.0, %v1230
        %v1232 = vpop.f32.mrf.mxu0
        %v1233 = vadd.f32 0.0, %v1232
        %1234 = vdwg.mxu0
        %v1235 = vld [vmem:[%s8] sm:$0xff]
        %v1236 = vld [vmem:[%s8 + $0x8] sm:$0xff]
        %v1237 = vld [vmem:[%s8 + $0x10] sm:$0xff]
        %v1238 = vld [vmem:[%s8 + $0x18] sm:$0xff]
        %v1239 = vld [vmem:[%s8 + $0x20] sm:$0xff]
        %v1240 = vld [vmem:[%s8 + $0x28] sm:$0xff]
        %v1241 = vld [vmem:[%s8 + $0x30] sm:$0xff]
        %v1242 = vld [vmem:[%s8 + $0x38] sm:$0xff]
        %1244 = vset.pattern.permute.xlu0 0
        %1245 = vperm.xlu0 %1244, %v1235
        %v1246 = vpop.permute.xlu0 %1245
        %1249 = vset.pattern.permute.xlu0 0
        %1250 = vperm.xlu0 %1249, %v1236
        %v1251 = vpop.permute.xlu0 %1250
        %1254 = vset.pattern.permute.xlu0 0
        %1255 = vperm.xlu0 %1254, %v1237
        %v1256 = vpop.permute.xlu0 %1255
        %1259 = vset.pattern.permute.xlu0 0
        %1260 = vperm.xlu0 %1259, %v1238
        %v1261 = vpop.permute.xlu0 %1260
        %1264 = vset.pattern.permute.xlu0 0
        %1265 = vperm.xlu0 %1264, %v1239
        %v1266 = vpop.permute.xlu0 %1265
        %1269 = vset.pattern.permute.xlu0 0
        %1270 = vperm.xlu0 %1269, %v1240
        %v1271 = vpop.permute.xlu0 %1270
        %1274 = vset.pattern.permute.xlu0 0
        %1275 = vperm.xlu0 %1274, %v1241
        %v1276 = vpop.permute.xlu0 %1275
        %1279 = vset.pattern.permute.xlu0 0
        %1280 = vperm.xlu0 %1279, %v1242
        %v1281 = vpop.permute.xlu0 %1280
        %v1283 = vmul.f32 %v1187, %v1246
        %v1284 = vmul.f32 %v1216, %v1246
        %v1285 = vmul.f32 %v1189, %v1251
        %v1286 = vmul.f32 %v1218, %v1251
        %v1287 = vmul.f32 %v1192, %v1256
        %v1288 = vmul.f32 %v1221, %v1256
        %v1289 = vmul.f32 %v1194, %v1261
        %v1290 = vmul.f32 %v1223, %v1261
        %v1291 = vmul.f32 %v1197, %v1266
        %v1292 = vmul.f32 %v1226, %v1266
        %v1293 = vmul.f32 %v1199, %v1271
        %v1294 = vmul.f32 %v1228, %v1271
        %v1295 = vmul.f32 %v1202, %v1276
        %v1296 = vmul.f32 %v1231, %v1276
        %v1297 = vmul.f32 %v1204, %v1281
        %v1298 = vmul.f32 %v1233, %v1281
        %v1299 = vld [vmem:[%s9] sm:$0xff]
        %v1300 = vld [vmem:[%s9 + $0x8] sm:$0xff]
        %v1301 = vld [vmem:[%s9 + $0x10] sm:$0xff]
        %v1302 = vld [vmem:[%s9 + $0x18] sm:$0xff]
        %v1303 = vld [vmem:[%s9 + $0x20] sm:$0xff]
        %v1304 = vld [vmem:[%s9 + $0x28] sm:$0xff]
        %v1305 = vld [vmem:[%s9 + $0x30] sm:$0xff]
        %v1306 = vld [vmem:[%s9 + $0x38] sm:$0xff]
        %1308 = vset.pattern.permute.xlu0 0
        %1309 = vperm.xlu0 %1308, %v1299
        %v1310 = vpop.permute.xlu0 %1309
        %1313 = vset.pattern.permute.xlu0 0
        %1314 = vperm.xlu0 %1313, %v1300
        %v1315 = vpop.permute.xlu0 %1314
        %1318 = vset.pattern.permute.xlu0 0
        %1319 = vperm.xlu0 %1318, %v1301
        %v1320 = vpop.permute.xlu0 %1319
        %1323 = vset.pattern.permute.xlu0 0
        %1324 = vperm.xlu0 %1323, %v1302
        %v1325 = vpop.permute.xlu0 %1324
        %1328 = vset.pattern.permute.xlu0 0
        %1329 = vperm.xlu0 %1328, %v1303
        %v1330 = vpop.permute.xlu0 %1329
        %1333 = vset.pattern.permute.xlu0 0
        %1334 = vperm.xlu0 %1333, %v1304
        %v1335 = vpop.permute.xlu0 %1334
        %1338 = vset.pattern.permute.xlu0 0
        %1339 = vperm.xlu0 %1338, %v1305
        %v1340 = vpop.permute.xlu0 %1339
        %1343 = vset.pattern.permute.xlu0 0
        %1344 = vperm.xlu0 %1343, %v1306
        %v1345 = vpop.permute.xlu0 %1344
        %v1347 = vadd.f32 %v1283, %v1310
        %v1348 = vadd.f32 %v1284, %v1310
        %v1349 = vadd.f32 %v1285, %v1315
        %v1350 = vadd.f32 %v1286, %v1315
        %v1351 = vadd.f32 %v1287, %v1320
        %v1352 = vadd.f32 %v1288, %v1320
        %v1353 = vadd.f32 %v1289, %v1325
        %v1354 = vadd.f32 %v1290, %v1325
        %v1355 = vadd.f32 %v1291, %v1330
        %v1356 = vadd.f32 %v1292, %v1330
        %v1357 = vadd.f32 %v1293, %v1335
        %v1358 = vadd.f32 %v1294, %v1335
        %v1359 = vadd.f32 %v1295, %v1340
        %v1360 = vadd.f32 %v1296, %v1340
        %v1361 = vadd.f32 %v1297, %v1345
        %v1362 = vadd.f32 %v1298, %v1345
        %v1363 = vadd.f32 %v1347, %v1348
        %1364 = vadd.xlane.f32.xlu0 %v1363
        %v1365 = vpop.xlane.xlu0 %1364
        %v1366 = vadd.f32 %v1349, %v1350
        %1367 = vadd.xlane.f32.xlu0 %v1366
        %v1368 = vpop.xlane.xlu0 %1367
        %v1369 = vadd.f32 %v1351, %v1352
        %1370 = vadd.xlane.f32.xlu0 %v1369
        %v1371 = vpop.xlane.xlu0 %1370
        %v1372 = vadd.f32 %v1353, %v1354
        %1373 = vadd.xlane.f32.xlu0 %v1372
        %v1374 = vpop.xlane.xlu0 %1373
        %v1375 = vadd.f32 %v1355, %v1356
        %1376 = vadd.xlane.f32.xlu0 %v1375
        %v1377 = vpop.xlane.xlu0 %1376
        %v1378 = vadd.f32 %v1357, %v1358
        %1379 = vadd.xlane.f32.xlu0 %v1378
        %v1380 = vpop.xlane.xlu0 %1379
        %v1381 = vadd.f32 %v1359, %v1360
        %1382 = vadd.xlane.f32.xlu0 %v1381
        %v1383 = vpop.xlane.xlu0 %1382
        %v1384 = vadd.f32 %v1361, %v1362
        %1385 = vadd.xlane.f32.xlu0 %v1384
        %v1386 = vpop.xlane.xlu0 %1385
        %v1387 = vrcp.pop 256.0
        %v1388 = vmul.f32 256.0, %v1387
        %v1389 = vsub.f32 1.0, %v1388
        %v1390 = vmul.f32 %v1387, %v1389
        %v1391 = vadd.f32 %v1387, %v1390
        %vm1392 = vweird.f32 %v1387
        %v1393 = vsel %vm1392, %v1387, %v1391
        %v1394 = vmul.f32 %v1365, %v1393
        %v1395 = vmul.f32 %v1368, %v1393
        %v1396 = vmul.f32 %v1371, %v1393
        %v1397 = vmul.f32 %v1374, %v1393
        %v1398 = vmul.f32 %v1377, %v1393
        %v1399 = vmul.f32 %v1380, %v1393
        %v1400 = vmul.f32 %v1383, %v1393
        %v1401 = vmul.f32 %v1386, %v1393
        %v1402 = vmax.f32 %v1347, %v1348
        %1403 = vmax.xlane.f32.xlu0 %v1402
        %v1404 = vpop.xlane.xlu0 %1403
        %v1405 = vmax.f32 %v1349, %v1350
        %1406 = vmax.xlane.f32.xlu0 %v1405
        %v1407 = vpop.xlane.xlu0 %1406
        %v1408 = vmax.f32 %v1351, %v1352
        %1409 = vmax.xlane.f32.xlu0 %v1408
        %v1410 = vpop.xlane.xlu0 %1409
        %v1411 = vmax.f32 %v1353, %v1354
        %1412 = vmax.xlane.f32.xlu0 %v1411
        %v1413 = vpop.xlane.xlu0 %1412
        %v1414 = vmax.f32 %v1355, %v1356
        %1415 = vmax.xlane.f32.xlu0 %v1414
        %v1416 = vpop.xlane.xlu0 %1415
        %v1417 = vmax.f32 %v1357, %v1358
        %1418 = vmax.xlane.f32.xlu0 %v1417
        %v1419 = vpop.xlane.xlu0 %1418
        %v1420 = vmax.f32 %v1359, %v1360
        %1421 = vmax.xlane.f32.xlu0 %v1420
        %v1422 = vpop.xlane.xlu0 %1421
        %v1423 = vmax.f32 %v1361, %v1362
        %1424 = vmax.xlane.f32.xlu0 %v1423
        %v1425 = vpop.xlane.xlu0 %1424
        %vm1426 = vcmask 7168
        %v1427 = vsel %vm1426, %v1394, %v1404
        %v1428 = vsel %vm1426, %v1395, %v1407
        %v1429 = vsel %vm1426, %v1396, %v1410
        %v1430 = vsel %vm1426, %v1397, %v1413
        %v1431 = vsel %vm1426, %v1398, %v1416
        %v1432 = vsel %vm1426, %v1399, %v1419
        %v1433 = vsel %vm1426, %v1400, %v1422
        %v1434 = vsel %vm1426, %v1401, %v1425
        %v1435 = vpack.c.bf16 %v1428, %v1427
        %v1436 = vpack.c.bf16 %v1430, %v1429
        %v1437 = vpack.c.bf16 %v1432, %v1431
        %v1438 = vpack.c.bf16 %v1434, %v1433
        %v1439 = vld [vmem:[%s10] sm:$0x3]
        %v1441 = vsel %vm522, %v1439, 0
        %1443 = vmatpush.bf16.msra.mxu0 0
        %1444 = vmatpush.bf16.msra.mxu0 0
        %1445 = vmatpush.bf16.msra.mxu0 0
        %1446 = vmatpush.bf16.msra.mxu0 0
        %1447 = vmatpush.bf16.msra.mxu0 %v1438
        %1448 = vmatpush.bf16.msra.mxu0 %v1437
        %1449 = vmatpush.bf16.msra.mxu0 %v1436
        %1450 = vmatpush.bf16.msra.mxu0 %v1435
        %1451 = vmatmul.bf16.gmra.mxu0 %v1441
        %v1452 = vpop.f32.mrf.mxu0
        %v1453 = vadd.f32 0.0, %v1452
        %v1454 = vpop.f32.mrf.mxu0
        %1455 = vdwg.mxu0
        %v1456 = vmax.f32 %v1453, 0.0
        %v1457 = vld [vmem:[%s11] sm:$0xf]
        %v1458 = vld [vmem:[%s11 + $0x4] sm:$0xf]
        %v1459 = vld [vmem:[%s11 + $0x8] sm:$0xf]
        %v1460 = vld [vmem:[%s11 + $0xc] sm:$0xf]
        %v1461 = vld [vmem:[%s11 + $0x10] sm:$0xf]
        %v1462 = vld [vmem:[%s11 + $0x14] sm:$0xf]
        %v1463 = vld [vmem:[%s11 + $0x18] sm:$0xf]
        %v1464 = vld [vmem:[%s11 + $0x1c] sm:$0xf]
        %v1465 = vpack.c.bf16 %v1456, %v1456
        %v1474 = vunpack.c.l.b16 %v1457
        %v1475 = vunpack.c.l.b16 %v1458
        %v1476 = vunpack.c.l.b16 %v1459
        %v1477 = vunpack.c.l.b16 %v1460
        %v1478 = vunpack.c.l.b16 %v1461
        %v1479 = vunpack.c.l.b16 %v1462
        %v1480 = vunpack.c.l.b16 %v1463
        %v1481 = vunpack.c.l.b16 %v1464
        %v1482 = vpack.c.b16 %v1475, %v1474
        %v1483 = vpack.c.b16 %v1477, %v1476
        %v1484 = vpack.c.b16 %v1479, %v1478
        %v1485 = vpack.c.b16 %v1481, %v1480
        %vm1486 = vcmask 31744
        %v1488 = vsel %vm1486, %v1482, 0
        %v1491 = vsel %vm1486, %v1483, 0
        %v1494 = vsel %vm1486, %v1484, 0
        %v1497 = vsel %vm1486, %v1485, 0
        %vm1499 = vcmask 1041408
        %v1501 = vsel %vm1499, %v1465, 0
        %1503 = vmatpush.bf16.msra.mxu0 0
        %1504 = vmatpush.bf16.msra.mxu0 0
        %1505 = vmatpush.bf16.msra.mxu0 0
        %1506 = vmatpush.bf16.msra.mxu0 0
        %1507 = vmatpush.bf16.msra.mxu0 0
        %1508 = vmatpush.bf16.msra.mxu0 0
        %1509 = vmatpush.bf16.msra.mxu0 0
        %1510 = vmatpush.bf16.msra.mxu0 %v1501
        %1511 = vmatmul.bf16.gmra.mxu0 %v1488
        %v1512 = vpop.f32.mrf.mxu0
        %v1513 = vadd.f32 0.0, %v1512
        %v1514 = vpop.f32.mrf.mxu0
        %v1515 = vadd.f32 0.0, %v1514
        %1516 = vmatmul.bf16.gmra.mxu0 %v1491
        %v1517 = vpop.f32.mrf.mxu0
        %v1518 = vadd.f32 0.0, %v1517
        %v1519 = vpop.f32.mrf.mxu0
        %v1520 = vadd.f32 0.0, %v1519
        %1521 = vmatmul.bf16.gmra.mxu0 %v1494
        %v1522 = vpop.f32.mrf.mxu0
        %v1523 = vadd.f32 0.0, %v1522
        %v1524 = vpop.f32.mrf.mxu0
        %v1525 = vadd.f32 0.0, %v1524
        %1526 = vmatmul.bf16.gmra.mxu0 %v1497
        %v1527 = vpop.f32.mrf.mxu0
        %v1528 = vadd.f32 0.0, %v1527
        %v1529 = vpop.f32.mrf.mxu0
        %v1530 = vadd.f32 0.0, %v1529
        %1531 = vdwg.mxu0
        %1540 = vrot.lane.b32.xlu0 %v1513, 127
        %v1541 = vpop.permute.xlu0 %1540
        %1542 = vrot.lane.b32.xlu0 %v1515, 127
        %v1543 = vpop.permute.xlu0 %1542
        %1544 = vrot.lane.b32.xlu0 %v1518, 127
        %v1545 = vpop.permute.xlu0 %1544
        %1546 = vrot.lane.b32.xlu0 %v1520, 127
        %v1547 = vpop.permute.xlu0 %1546
        %1548 = vrot.lane.b32.xlu0 %v1523, 127
        %v1549 = vpop.permute.xlu0 %1548
        %1550 = vrot.lane.b32.xlu0 %v1525, 127
        %v1551 = vpop.permute.xlu0 %1550
        %1552 = vrot.lane.b32.xlu0 %v1528, 127
        %v1553 = vpop.permute.xlu0 %1552
        %1554 = vrot.lane.b32.xlu0 %v1530, 127
        %v1555 = vpop.permute.xlu0 %1554
        %v1564 = vadd.f32 %v1513, %v1541
        %v1565 = vadd.f32 %v1515, %v1543
        %v1566 = vadd.f32 %v1518, %v1545
        %v1567 = vadd.f32 %v1520, %v1547
        %v1568 = vadd.f32 %v1523, %v1549
        %v1569 = vadd.f32 %v1525, %v1551
        %v1570 = vadd.f32 %v1528, %v1553
        %v1571 = vadd.f32 %v1530, %v1555
        %v1572 = vxor.u32 %v1564, 2147483648
        %v1573 = vxor.u32 %v1565, 2147483648
        %v1574 = vxor.u32 %v1566, 2147483648
        %v1575 = vxor.u32 %v1567, 2147483648
        %v1576 = vxor.u32 %v1568, 2147483648
        %v1577 = vxor.u32 %v1569, 2147483648
        %v1578 = vxor.u32 %v1570, 2147483648
        %v1579 = vxor.u32 %v1571, 2147483648
        %v1580 = vmul.f32 %v1572, 1.442695
        %v1581 = vpow.pop %v1580
        %v1582 = vmul.f32 %v1573, 1.442695
        %v1583 = vpow.pop %v1582
        %v1584 = vmul.f32 %v1574, 1.442695
        %v1585 = vpow.pop %v1584
        %v1586 = vmul.f32 %v1575, 1.442695
        %v1587 = vpow.pop %v1586
        %v1588 = vmul.f32 %v1576, 1.442695
        %v1589 = vpow.pop %v1588
        %v1590 = vmul.f32 %v1577, 1.442695
        %v1591 = vpow.pop %v1590
        %v1592 = vmul.f32 %v1578, 1.442695
        %v1593 = vpow.pop %v1592
        %v1594 = vmul.f32 %v1579, 1.442695
        %v1595 = vpow.pop %v1594
        %v1596 = vadd.f32 %v1581, 1.0
        %v1597 = vadd.f32 %v1583, 1.0
        %v1598 = vadd.f32 %v1585, 1.0
        %v1599 = vadd.f32 %v1587, 1.0
        %v1600 = vadd.f32 %v1589, 1.0
        %v1601 = vadd.f32 %v1591, 1.0
        %v1602 = vadd.f32 %v1593, 1.0
        %v1603 = vadd.f32 %v1595, 1.0
        %v1604 = vrcp.pop %v1596
        %v1605 = vmul.f32 %v1596, %v1604
        %v1606 = vsub.f32 1.0, %v1605
        %v1607 = vmul.f32 %v1604, %v1606
        %v1608 = vadd.f32 %v1604, %v1607
        %vm1609 = vweird.f32 %v1596
        %vm1610 = vweird.f32 %v1604
        %vm1611 = vmor %vm1609, %vm1610
        %v1612 = vsel %vm1611, %v1604, %v1608
        %v1613 = vand.u32 2147483647, %v1596
        %vm1614 = vcmp.eq.f32.partialorder %v1613, 8.507059e+37
        %v1615 = vand.u32 %v1596, 2147483648
        %v1616 = vor.u32 1.1754944e-38, %v1615
        %v1617 = vsel %vm1614, %v1616, %v1612
        %v1618 = vmul.f32 1.0, %v1617
        %v1619 = vrcp.pop %v1597
        %v1620 = vmul.f32 %v1597, %v1619
        %v1621 = vsub.f32 1.0, %v1620
        %v1622 = vmul.f32 %v1619, %v1621
        %v1623 = vadd.f32 %v1619, %v1622
        %vm1624 = vweird.f32 %v1597
        %vm1625 = vweird.f32 %v1619
        %vm1626 = vmor %vm1624, %vm1625
        %v1627 = vsel %vm1626, %v1619, %v1623
        %v1628 = vand.u32 2147483647, %v1597
        %vm1629 = vcmp.eq.f32.partialorder %v1628, 8.507059e+37
        %v1630 = vand.u32 %v1597, 2147483648
        %v1631 = vor.u32 1.1754944e-38, %v1630
        %v1632 = vsel %vm1629, %v1631, %v1627
        %v1633 = vmul.f32 1.0, %v1632
        %v1634 = vrcp.pop %v1598
        %v1635 = vmul.f32 %v1598, %v1634
        %v1636 = vsub.f32 1.0, %v1635
        %v1637 = vmul.f32 %v1634, %v1636
        %v1638 = vadd.f32 %v1634, %v1637
        %vm1639 = vweird.f32 %v1598
        %vm1640 = vweird.f32 %v1634
        %vm1641 = vmor %vm1639, %vm1640
        %v1642 = vsel %vm1641, %v1634, %v1638
        %v1643 = vand.u32 2147483647, %v1598
        %vm1644 = vcmp.eq.f32.partialorder %v1643, 8.507059e+37
        %v1645 = vand.u32 %v1598, 2147483648
        %v1646 = vor.u32 1.1754944e-38, %v1645
        %v1647 = vsel %vm1644, %v1646, %v1642
        %v1648 = vmul.f32 1.0, %v1647
        %v1649 = vrcp.pop %v1599
        %v1650 = vmul.f32 %v1599, %v1649
        %v1651 = vsub.f32 1.0, %v1650
        %v1652 = vmul.f32 %v1649, %v1651
        %v1653 = vadd.f32 %v1649, %v1652
        %vm1654 = vweird.f32 %v1599
        %vm1655 = vweird.f32 %v1649
        %vm1656 = vmor %vm1654, %vm1655
        %v1657 = vsel %vm1656, %v1649, %v1653
        %v1658 = vand.u32 2147483647, %v1599
        %vm1659 = vcmp.eq.f32.partialorder %v1658, 8.507059e+37
        %v1660 = vand.u32 %v1599, 2147483648
        %v1661 = vor.u32 1.1754944e-38, %v1660
        %v1662 = vsel %vm1659, %v1661, %v1657
        %v1663 = vmul.f32 1.0, %v1662
        %v1664 = vrcp.pop %v1600
        %v1665 = vmul.f32 %v1600, %v1664
        %v1666 = vsub.f32 1.0, %v1665
        %v1667 = vmul.f32 %v1664, %v1666
        %v1668 = vadd.f32 %v1664, %v1667
        %vm1669 = vweird.f32 %v1600
        %vm1670 = vweird.f32 %v1664
        %vm1671 = vmor %vm1669, %vm1670
        %v1672 = vsel %vm1671, %v1664, %v1668
        %v1673 = vand.u32 2147483647, %v1600
        %vm1674 = vcmp.eq.f32.partialorder %v1673, 8.507059e+37
        %v1675 = vand.u32 %v1600, 2147483648
        %v1676 = vor.u32 1.1754944e-38, %v1675
        %v1677 = vsel %vm1674, %v1676, %v1672
        %v1678 = vmul.f32 1.0, %v1677
        %v1679 = vrcp.pop %v1601
        %v1680 = vmul.f32 %v1601, %v1679
        %v1681 = vsub.f32 1.0, %v1680
        %v1682 = vmul.f32 %v1679, %v1681
        %v1683 = vadd.f32 %v1679, %v1682
        %vm1684 = vweird.f32 %v1601
        %vm1685 = vweird.f32 %v1679
        %vm1686 = vmor %vm1684, %vm1685
        %v1687 = vsel %vm1686, %v1679, %v1683
        %v1688 = vand.u32 2147483647, %v1601
        %vm1689 = vcmp.eq.f32.partialorder %v1688, 8.507059e+37
        %v1690 = vand.u32 %v1601, 2147483648
        %v1691 = vor.u32 1.1754944e-38, %v1690
        %v1692 = vsel %vm1689, %v1691, %v1687
        %v1693 = vmul.f32 1.0, %v1692
        %v1694 = vrcp.pop %v1602
        %v1695 = vmul.f32 %v1602, %v1694
        %v1696 = vsub.f32 1.0, %v1695
        %v1697 = vmul.f32 %v1694, %v1696
        %v1698 = vadd.f32 %v1694, %v1697
        %vm1699 = vweird.f32 %v1602
        %vm1700 = vweird.f32 %v1694
        %vm1701 = vmor %vm1699, %vm1700
        %v1702 = vsel %vm1701, %v1694, %v1698
        %v1703 = vand.u32 2147483647, %v1602
        %vm1704 = vcmp.eq.f32.partialorder %v1703, 8.507059e+37
        %v1705 = vand.u32 %v1602, 2147483648
        %v1706 = vor.u32 1.1754944e-38, %v1705
        %v1707 = vsel %vm1704, %v1706, %v1702
        %v1708 = vmul.f32 1.0, %v1707
        %v1709 = vrcp.pop %v1603
        %v1710 = vmul.f32 %v1603, %v1709
        %v1711 = vsub.f32 1.0, %v1710
        %v1712 = vmul.f32 %v1709, %v1711
        %v1713 = vadd.f32 %v1709, %v1712
        %vm1714 = vweird.f32 %v1603
        %vm1715 = vweird.f32 %v1709
        %vm1716 = vmor %vm1714, %vm1715
        %v1717 = vsel %vm1716, %v1709, %v1713
        %v1718 = vand.u32 2147483647, %v1603
        %vm1719 = vcmp.eq.f32.partialorder %v1718, 8.507059e+37
        %v1720 = vand.u32 %v1603, 2147483648
        %v1721 = vor.u32 1.1754944e-38, %v1720
        %v1722 = vsel %vm1719, %v1721, %v1717
        %v1723 = vmul.f32 1.0, %v1722
        %1725 = vset.pattern.permute.xlu0 0
        %1726 = vperm.xlu0 %1725, %v1618
        %v1727 = vpop.permute.xlu0 %1726
        %1730 = vset.pattern.permute.xlu0 0
        %1731 = vperm.xlu0 %1730, %v1633
        %v1732 = vpop.permute.xlu0 %1731
        %1735 = vset.pattern.permute.xlu0 0
        %1736 = vperm.xlu0 %1735, %v1648
        %v1737 = vpop.permute.xlu0 %1736
        %1740 = vset.pattern.permute.xlu0 0
        %1741 = vperm.xlu0 %1740, %v1663
        %v1742 = vpop.permute.xlu0 %1741
        %1745 = vset.pattern.permute.xlu0 0
        %1746 = vperm.xlu0 %1745, %v1678
        %v1747 = vpop.permute.xlu0 %1746
        %1750 = vset.pattern.permute.xlu0 0
        %1751 = vperm.xlu0 %1750, %v1693
        %v1752 = vpop.permute.xlu0 %1751
        %1755 = vset.pattern.permute.xlu0 0
        %1756 = vperm.xlu0 %1755, %v1708
        %v1757 = vpop.permute.xlu0 %1756
        %1760 = vset.pattern.permute.xlu0 0
        %1761 = vperm.xlu0 %1760, %v1723
        %v1762 = vpop.permute.xlu0 %1761
        %v1764 = vmul.f32 %v1347, %v1727
        %v1765 = vmul.f32 %v1348, %v1727
        %v1766 = vmul.f32 %v1349, %v1732
        %v1767 = vmul.f32 %v1350, %v1732
        %v1768 = vmul.f32 %v1351, %v1737
        %v1769 = vmul.f32 %v1352, %v1737
        %v1770 = vmul.f32 %v1353, %v1742
        %v1771 = vmul.f32 %v1354, %v1742
        %v1772 = vmul.f32 %v1355, %v1747
        %v1773 = vmul.f32 %v1356, %v1747
        %v1774 = vmul.f32 %v1357, %v1752
        %v1775 = vmul.f32 %v1358, %v1752
        %v1776 = vmul.f32 %v1359, %v1757
        %v1777 = vmul.f32 %v1360, %v1757
        %v1778 = vmul.f32 %v1361, %v1762
        %v1779 = vmul.f32 %v1362, %v1762
        %v1780 = vadd.f32 %v1764, %v1766
        %v1781 = vadd.f32 %v1780, %v1768
        %v1782 = vadd.f32 %v1781, %v1770
        %v1783 = vadd.f32 %v1782, %v1772
        %v1784 = vadd.f32 %v1783, %v1774
        %v1785 = vadd.f32 %v1784, %v1776
        %v1786 = vadd.f32 %v1785, %v1778
        %v1787 = vrot.slane %v1786, 4
        %v1788 = vadd.f32 %v1786, %v1787
        %v1789 = vrot.slane %v1788, 2
        %v1790 = vadd.f32 %v1788, %v1789
        %v1791 = vrot.slane %v1790, 1
        %v1792 = vadd.f32 %v1790, %v1791
        %v1793 = vadd.f32 %v1765, %v1767
        %v1794 = vadd.f32 %v1793, %v1769
        %v1795 = vadd.f32 %v1794, %v1771
        %v1796 = vadd.f32 %v1795, %v1773
        %v1797 = vadd.f32 %v1796, %v1775
        %v1798 = vadd.f32 %v1797, %v1777
        %v1799 = vadd.f32 %v1798, %v1779
        %v1800 = vrot.slane %v1799, 4
        %v1801 = vadd.f32 %v1799, %v1800
        %v1802 = vrot.slane %v1801, 2
        %v1803 = vadd.f32 %v1801, %v1802
        %v1804 = vrot.slane %v1803, 1
        %v1805 = vadd.f32 %v1803, %v1804
        %v1806 = vrcp.pop 64.0
        %v1807 = vmul.f32 64.0, %v1806
        %v1808 = vsub.f32 1.0, %v1807
        %v1809 = vmul.f32 %v1806, %v1808
        %v1810 = vadd.f32 %v1806, %v1809
        %vm1811 = vweird.f32 %v1806
        %v1812 = vsel %vm1811, %v1806, %v1810
        %v1813 = vmul.f32 %v1792, %v1812
        %v1814 = vmul.f32 %v1805, %v1812
        %v1815 = vmax.f32 %v1764, %v1768
        %v1816 = vmax.f32 %v1766, %v1770
        %v1817 = vmax.f32 %v1815, %v1772
        %v1818 = vmax.f32 %v1816, %v1774
        %v1819 = vmax.f32 %v1817, %v1776
        %v1820 = vmax.f32 %v1818, %v1778
        %v1821 = vmax.f32 %v1819, %v1820
        %v1822 = vrot.slane %v1821, 4
        %v1823 = vmax.f32 %v1821, %v1822
        %v1824 = vrot.slane %v1823, 2
        %v1825 = vmax.f32 %v1823, %v1824
        %v1826 = vrot.slane %v1825, 1
        %v1827 = vmax.f32 %v1825, %v1826
        %v1828 = vmax.f32 %v1765, %v1769
        %v1829 = vmax.f32 %v1767, %v1771
        %v1830 = vmax.f32 %v1828, %v1773
        %v1831 = vmax.f32 %v1829, %v1775
        %v1832 = vmax.f32 %v1830, %v1777
        %v1833 = vmax.f32 %v1831, %v1779
        %v1834 = vmax.f32 %v1832, %v1833
        %v1835 = vrot.slane %v1834, 4
        %v1836 = vmax.f32 %v1834, %v1835
        %v1837 = vrot.slane %v1836, 2
        %v1838 = vmax.f32 %v1836, %v1837
        %v1839 = vrot.slane %v1838, 1
        %v1840 = vmax.f32 %v1838, %v1839
        %vm1841 = vcmask 1040384
        %v1842 = vsel %vm1841, %v1813, %v1827
        %v1843 = vsel %vm1841, %v1814, %v1840
        %v1844 = vpack.c.bf16 %v1843, %v1842
        %v1846 = vunpack.c.l.b16 %v1844
        %v1847 = vunpack.c.h.b16 %v1844
        %v1848 = vpack.c.b16 %v1846, %v1846
        %v1849 = vpack.c.b16 %v1847, %v1847
        %1850 = vrot.lane.b32.xlu0 %v1848, 51
        %v1851 = vpop.permute.xlu0 %1850
        %1852 = vrot.lane.b32.xlu0 %v1849, 51
        %v1853 = vpop.permute.xlu0 %1852
        %vm1854 = vcmask 416768
        %v1855 = vsel %vm1854, %v1851, %v1853
        %vm1857 = vcmask 416768
        %v1859 = vsel %vm1857, 0, %v1851
        %v1862 = vsel %vm1857, %v1853, 0
        %v1864 = vadd.s32 %v505, 4294967293
        %v1865 = vadd.s32 %v506, 4294967293
        %vm1866 = vcmp.ge.s32.totalorder %v1864, 0
        %vm1867 = vcmp.ge.s32.totalorder %v1865, 0
        %vm1868 = vcmp.lt.s32.totalorder %v1864, 16
        %vm1869 = vcmp.lt.s32.totalorder %v1865, 16
        %vm1870 = vmand %vm1866, %vm1868
        %vm1871 = vmand %vm1867, %vm1869
        %v1872 = vsel %vm1870, 1, 0
        %v1873 = vsel %vm1871, 1, 0
        %vm1874 = vcmp.eq.s32.totalorder %v1872, 1
        %vm1875 = vcmp.eq.s32.totalorder %v1873, 1
        %vm1876 = vmpackc.low %vm1875, %vm1874
        %v1877 = vsel %vm1876, 65537, 0
        %v1878 = vperm.slane %v1877, 0
        %v1879 = vperm.slane %v1877, 4
        %v1880 = vunpack.c.l.b16 %v1878
        %v1881 = vunpack.c.h.b16 %v1878
        %v1882 = vunpack.c.l.b16 0
        %v1883 = vunpack.c.h.b16 0
        %vm1884 = vcmp.ne.s32.totalorder %v1880, %v1882
        %vm1885 = vcmp.ne.s32.totalorder %v1881, %v1883
        %vm1886 = vmpackc.low %vm1885, %vm1884
        %v1887 = vunpack.c.l.b16 %v1879
        %v1888 = vunpack.c.h.b16 %v1879
        %v1889 = vunpack.c.l.b16 0
        %v1890 = vunpack.c.h.b16 0
        %vm1891 = vcmp.ne.s32.totalorder %v1887, %v1889
        %vm1892 = vcmp.ne.s32.totalorder %v1888, %v1890
        %vm1893 = vmpackc.low %vm1892, %vm1891
        %v1894 = vsel %vm1886, %v1859, 0
        %v1895 = vsel %vm1893, %v1855, 0
        %1896 = vrot.lane.b32.xlu0 %v1878, 16
        %v1897 = vpop.permute.xlu0 %1896
        %1898 = vrot.lane.b32.xlu0 %v1879, 16
        %v1899 = vpop.permute.xlu0 %1898
        %v1900 = vsel %vm741, %v1897, %v1899
        %v1901 = vunpack.c.l.b16 %v1897
        %v1902 = vunpack.c.h.b16 %v1897
        %v1903 = vunpack.c.l.b16 0
        %v1904 = vunpack.c.h.b16 0
        %vm1905 = vcmp.ne.s32.totalorder %v1901, %v1903
        %vm1906 = vcmp.ne.s32.totalorder %v1902, %v1904
        %vm1907 = vmpackc.low %vm1906, %vm1905
        %v1908 = vunpack.c.l.b16 %v1900
        %v1909 = vunpack.c.h.b16 %v1900
        %v1910 = vunpack.c.l.b16 0
        %v1911 = vunpack.c.h.b16 0
        %vm1912 = vcmp.ne.s32.totalorder %v1908, %v1910
        %vm1913 = vcmp.ne.s32.totalorder %v1909, %v1911
        %vm1914 = vmpackc.low %vm1913, %vm1912
        %v1915 = vunpack.c.l.b16 %v1899
        %v1916 = vunpack.c.h.b16 %v1899
        %v1917 = vunpack.c.l.b16 0
        %v1918 = vunpack.c.h.b16 0
        %vm1919 = vcmp.ne.s32.totalorder %v1915, %v1917
        %vm1920 = vcmp.ne.s32.totalorder %v1916, %v1918
        %vm1921 = vmpackc.low %vm1920, %vm1919
        %v1922 = vsel %vm1907, %v1859, 0
        %v1923 = vsel %vm1914, %v1855, 0
        %v1924 = vsel %vm1921, %v1862, 0
        %1925 = vrot.lane.b32.xlu0 %v1878, 32
        %v1926 = vpop.permute.xlu0 %1925
        %1927 = vrot.lane.b32.xlu0 %v1879, 32
        %v1928 = vpop.permute.xlu0 %1927
        %v1929 = vsel %vm830, %v1926, %v1928
        %v1930 = vunpack.c.l.b16 %v1926
        %v1931 = vunpack.c.h.b16 %v1926
        %v1932 = vunpack.c.l.b16 0
        %v1933 = vunpack.c.h.b16 0
        %vm1934 = vcmp.ne.s32.totalorder %v1930, %v1932
        %vm1935 = vcmp.ne.s32.totalorder %v1931, %v1933
        %vm1936 = vmpackc.low %vm1935, %vm1934
        %v1937 = vunpack.c.l.b16 %v1929
        %v1938 = vunpack.c.h.b16 %v1929
        %v1939 = vunpack.c.l.b16 0
        %v1940 = vunpack.c.h.b16 0
        %vm1941 = vcmp.ne.s32.totalorder %v1937, %v1939
        %vm1942 = vcmp.ne.s32.totalorder %v1938, %v1940
        %vm1943 = vmpackc.low %vm1942, %vm1941
        %v1944 = vunpack.c.l.b16 %v1928
        %v1945 = vunpack.c.h.b16 %v1928
        %v1946 = vunpack.c.l.b16 0
        %v1947 = vunpack.c.h.b16 0
        %vm1948 = vcmp.ne.s32.totalorder %v1944, %v1946
        %vm1949 = vcmp.ne.s32.totalorder %v1945, %v1947
        %vm1950 = vmpackc.low %vm1949, %vm1948
        %v1951 = vsel %vm1936, %v1859, 0
        %v1952 = vsel %vm1943, %v1855, 0
        %v1953 = vsel %vm1950, %v1862, 0
        %1954 = vrot.lane.b32.xlu0 %v1878, 48
        %v1955 = vpop.permute.xlu0 %1954
        %1956 = vrot.lane.b32.xlu0 %v1879, 48
        %v1957 = vpop.permute.xlu0 %1956
        %vm1958 = vcmask 392192
        %v1959 = vsel %vm1958, %v1955, %v1957
        %v1960 = vunpack.c.l.b16 %v1955
        %v1961 = vunpack.c.h.b16 %v1955
        %v1962 = vunpack.c.l.b16 0
        %v1963 = vunpack.c.h.b16 0
        %vm1964 = vcmp.ne.s32.totalorder %v1960, %v1962
        %vm1965 = vcmp.ne.s32.totalorder %v1961, %v1963
        %vm1966 = vmpackc.low %vm1965, %vm1964
        %v1967 = vunpack.c.l.b16 %v1959
        %v1968 = vunpack.c.h.b16 %v1959
        %v1969 = vunpack.c.l.b16 0
        %v1970 = vunpack.c.h.b16 0
        %vm1971 = vcmp.ne.s32.totalorder %v1967, %v1969
        %vm1972 = vcmp.ne.s32.totalorder %v1968, %v1970
        %vm1973 = vmpackc.low %vm1972, %vm1971
        %v1974 = vunpack.c.l.b16 %v1957
        %v1975 = vunpack.c.h.b16 %v1957
        %v1976 = vunpack.c.l.b16 0
        %v1977 = vunpack.c.h.b16 0
        %vm1978 = vcmp.ne.s32.totalorder %v1974, %v1976
        %vm1979 = vcmp.ne.s32.totalorder %v1975, %v1977
        %vm1980 = vmpackc.low %vm1979, %vm1978
        %v1981 = vsel %vm1966, %v1859, 0
        %v1982 = vsel %vm1973, %v1855, 0
        %v1983 = vsel %vm1980, %v1862, 0
        %1984 = vrot.lane.b32.xlu0 %v1878, 64
        %v1985 = vpop.permute.xlu0 %1984
        %1986 = vrot.lane.b32.xlu0 %v1879, 64
        %v1987 = vpop.permute.xlu0 %1986
        %vm1988 = vcmask 523264
        %v1989 = vsel %vm1988, %v1985, %v1987
        %v1990 = vunpack.c.l.b16 %v1985
        %v1991 = vunpack.c.h.b16 %v1985
        %v1992 = vunpack.c.l.b16 0
        %v1993 = vunpack.c.h.b16 0
        %vm1994 = vcmp.ne.s32.totalorder %v1990, %v1992
        %vm1995 = vcmp.ne.s32.totalorder %v1991, %v1993
        %vm1996 = vmpackc.low %vm1995, %vm1994
        %v1997 = vunpack.c.l.b16 %v1989
        %v1998 = vunpack.c.h.b16 %v1989
        %v1999 = vunpack.c.l.b16 0
        %v2000 = vunpack.c.h.b16 0
        %vm2001 = vcmp.ne.s32.totalorder %v1997, %v1999
        %vm2002 = vcmp.ne.s32.totalorder %v1998, %v2000
        %vm2003 = vmpackc.low %vm2002, %vm2001
        %v2004 = vunpack.c.l.b16 %v1987
        %v2005 = vunpack.c.h.b16 %v1987
        %v2006 = vunpack.c.l.b16 0
        %v2007 = vunpack.c.h.b16 0
        %vm2008 = vcmp.ne.s32.totalorder %v2004, %v2006
        %vm2009 = vcmp.ne.s32.totalorder %v2005, %v2007
        %vm2010 = vmpackc.low %vm2009, %vm2008
        %v2011 = vsel %vm1996, %v1859, 0
        %v2012 = vsel %vm2003, %v1855, 0
        %v2013 = vsel %vm2010, %v1862, 0
        %2014 = vrot.lane.b32.xlu0 %v1878, 80
        %v2015 = vpop.permute.xlu0 %2014
        %2016 = vrot.lane.b32.xlu0 %v1879, 80
        %v2017 = vpop.permute.xlu0 %2016
        %vm2018 = vcmask 654336
        %v2019 = vsel %vm2018, %v2015, %v2017
        %v2020 = vunpack.c.l.b16 %v2015
        %v2021 = vunpack.c.h.b16 %v2015
        %v2022 = vunpack.c.l.b16 0
        %v2023 = vunpack.c.h.b16 0
        %vm2024 = vcmp.ne.s32.totalorder %v2020, %v2022
        %vm2025 = vcmp.ne.s32.totalorder %v2021, %v2023
        %vm2026 = vmpackc.low %vm2025, %vm2024
        %v2027 = vunpack.c.l.b16 %v2019
        %v2028 = vunpack.c.h.b16 %v2019
        %v2029 = vunpack.c.l.b16 0
        %v2030 = vunpack.c.h.b16 0
        %vm2031 = vcmp.ne.s32.totalorder %v2027, %v2029
        %vm2032 = vcmp.ne.s32.totalorder %v2028, %v2030
        %vm2033 = vmpackc.low %vm2032, %vm2031
        %v2034 = vunpack.c.l.b16 %v2017
        %v2035 = vunpack.c.h.b16 %v2017
        %v2036 = vunpack.c.l.b16 0
        %v2037 = vunpack.c.h.b16 0
        %vm2038 = vcmp.ne.s32.totalorder %v2034, %v2036
        %vm2039 = vcmp.ne.s32.totalorder %v2035, %v2037
        %vm2040 = vmpackc.low %vm2039, %vm2038
        %v2041 = vsel %vm2026, %v1859, 0
        %v2042 = vsel %vm2033, %v1855, 0
        %v2043 = vsel %vm2040, %v1862, 0
        %2044 = vrot.lane.b32.xlu0 %v1878, 96
        %v2045 = vpop.permute.xlu0 %2044
        %2046 = vrot.lane.b32.xlu0 %v1879, 96
        %v2047 = vpop.permute.xlu0 %2046
        %v2048 = vsel %vm995, %v2045, %v2047
        %v2049 = vunpack.c.l.b16 %v2045
        %v2050 = vunpack.c.h.b16 %v2045
        %v2051 = vunpack.c.l.b16 0
        %v2052 = vunpack.c.h.b16 0
        %vm2053 = vcmp.ne.s32.totalorder %v2049, %v2051
        %vm2054 = vcmp.ne.s32.totalorder %v2050, %v2052
        %vm2055 = vmpackc.low %vm2054, %vm2053
        %v2056 = vunpack.c.l.b16 %v2048
        %v2057 = vunpack.c.h.b16 %v2048
        %v2058 = vunpack.c.l.b16 0
        %v2059 = vunpack.c.h.b16 0
        %vm2060 = vcmp.ne.s32.totalorder %v2056, %v2058
        %vm2061 = vcmp.ne.s32.totalorder %v2057, %v2059
        %vm2062 = vmpackc.low %vm2061, %vm2060
        %v2063 = vunpack.c.l.b16 %v2047
        %v2064 = vunpack.c.h.b16 %v2047
        %v2065 = vunpack.c.l.b16 0
        %v2066 = vunpack.c.h.b16 0
        %vm2067 = vcmp.ne.s32.totalorder %v2063, %v2065
        %vm2068 = vcmp.ne.s32.totalorder %v2064, %v2066
        %vm2069 = vmpackc.low %vm2068, %vm2067
        %v2070 = vsel %vm2055, %v1859, 0
        %v2071 = vsel %vm2062, %v1855, 0
        %v2072 = vsel %vm2069, %v1862, 0
        %v2073 = vadd.s32 %v505, 4294967294
        %v2074 = vadd.s32 %v506, 4294967294
        %vm2075 = vcmp.ge.s32.totalorder %v2073, 0
        %vm2076 = vcmp.ge.s32.totalorder %v2074, 0
        %vm2077 = vcmp.lt.s32.totalorder %v2073, 16
        %vm2078 = vcmp.lt.s32.totalorder %v2074, 16
        %vm2079 = vmand %vm2075, %vm2077
        %vm2080 = vmand %vm2076, %vm2078
        %v2081 = vsel %vm2079, 1, 0
        %v2082 = vsel %vm2080, 1, 0
        %vm2083 = vcmp.eq.s32.totalorder %v2081, 1
        %vm2084 = vcmp.eq.s32.totalorder %v2082, 1
        %vm2085 = vmpackc.low %vm2084, %vm2083
        %v2086 = vsel %vm2085, 65537, 0
        %v2087 = vperm.slane %v2086, 0
        %v2088 = vperm.slane %v2086, 4
        %2089 = vrot.lane.b32.xlu0 %v2087, 1
        %v2090 = vpop.permute.xlu0 %2089
        %2091 = vrot.lane.b32.xlu0 %v2088, 1
        %v2092 = vpop.permute.xlu0 %2091
        %v2093 = vsel %vm673, %v2090, %v2092
        %v2094 = vunpack.c.l.b16 %v2090
        %v2095 = vunpack.c.h.b16 %v2090
        %v2096 = vunpack.c.l.b16 0
        %v2097 = vunpack.c.h.b16 0
        %vm2098 = vcmp.ne.s32.totalorder %v2094, %v2096
        %vm2099 = vcmp.ne.s32.totalorder %v2095, %v2097
        %vm2100 = vmpackc.low %vm2099, %vm2098
        %v2101 = vunpack.c.l.b16 %v2093
        %v2102 = vunpack.c.h.b16 %v2093
        %v2103 = vunpack.c.l.b16 0
        %v2104 = vunpack.c.h.b16 0
        %vm2105 = vcmp.ne.s32.totalorder %v2101, %v2103
        %vm2106 = vcmp.ne.s32.totalorder %v2102, %v2104
        %vm2107 = vmpackc.low %vm2106, %vm2105
        %v2108 = vunpack.c.l.b16 %v2092
        %v2109 = vunpack.c.h.b16 %v2092
        %v2110 = vunpack.c.l.b16 0
        %v2111 = vunpack.c.h.b16 0
        %vm2112 = vcmp.ne.s32.totalorder %v2108, %v2110
        %vm2113 = vcmp.ne.s32.totalorder %v2109, %v2111
        %vm2114 = vmpackc.low %vm2113, %vm2112
        %v2115 = vsel %vm2100, %v1859, 0
        %v2116 = vsel %vm2107, %v1855, 0
        %v2117 = vsel %vm2114, %v1862, 0
        %2118 = vrot.lane.b32.xlu0 %v2087, 17
        %v2119 = vpop.permute.xlu0 %2118
        %2120 = vrot.lane.b32.xlu0 %v2088, 17
        %v2121 = vpop.permute.xlu0 %2120
        %v2122 = vsel %vm604, %v2119, %v2121
        %v2123 = vunpack.c.l.b16 %v2119
        %v2124 = vunpack.c.h.b16 %v2119
        %v2125 = vunpack.c.l.b16 0
        %v2126 = vunpack.c.h.b16 0
        %vm2127 = vcmp.ne.s32.totalorder %v2123, %v2125
        %vm2128 = vcmp.ne.s32.totalorder %v2124, %v2126
        %vm2129 = vmpackc.low %vm2128, %vm2127
        %v2130 = vunpack.c.l.b16 %v2122
        %v2131 = vunpack.c.h.b16 %v2122
        %v2132 = vunpack.c.l.b16 0
        %v2133 = vunpack.c.h.b16 0
        %vm2134 = vcmp.ne.s32.totalorder %v2130, %v2132
        %vm2135 = vcmp.ne.s32.totalorder %v2131, %v2133
        %vm2136 = vmpackc.low %vm2135, %vm2134
        %v2137 = vunpack.c.l.b16 %v2121
        %v2138 = vunpack.c.h.b16 %v2121
        %v2139 = vunpack.c.l.b16 0
        %v2140 = vunpack.c.h.b16 0
        %vm2141 = vcmp.ne.s32.totalorder %v2137, %v2139
        %vm2142 = vcmp.ne.s32.totalorder %v2138, %v2140
        %vm2143 = vmpackc.low %vm2142, %vm2141
        %v2144 = vsel %vm2129, %v1859, 0
        %v2145 = vsel %vm2136, %v1855, 0
        %v2146 = vsel %vm2143, %v1862, 0
        %2147 = vrot.lane.b32.xlu0 %v2087, 33
        %v2148 = vpop.permute.xlu0 %2147
        %2149 = vrot.lane.b32.xlu0 %v2088, 33
        %v2150 = vpop.permute.xlu0 %2149
        %v2151 = vsel %vm860, %v2148, %v2150
        %v2152 = vunpack.c.l.b16 %v2148
        %v2153 = vunpack.c.h.b16 %v2148
        %v2154 = vunpack.c.l.b16 0
        %v2155 = vunpack.c.h.b16 0
        %vm2156 = vcmp.ne.s32.totalorder %v2152, %v2154
        %vm2157 = vcmp.ne.s32.totalorder %v2153, %v2155
        %vm2158 = vmpackc.low %vm2157, %vm2156
        %v2159 = vunpack.c.l.b16 %v2151
        %v2160 = vunpack.c.h.b16 %v2151
        %v2161 = vunpack.c.l.b16 0
        %v2162 = vunpack.c.h.b16 0
        %vm2163 = vcmp.ne.s32.totalorder %v2159, %v2161
        %vm2164 = vcmp.ne.s32.totalorder %v2160, %v2162
        %vm2165 = vmpackc.low %vm2164, %vm2163
        %v2166 = vunpack.c.l.b16 %v2150
        %v2167 = vunpack.c.h.b16 %v2150
        %v2168 = vunpack.c.l.b16 0
        %v2169 = vunpack.c.h.b16 0
        %vm2170 = vcmp.ne.s32.totalorder %v2166, %v2168
        %vm2171 = vcmp.ne.s32.totalorder %v2167, %v2169
        %vm2172 = vmpackc.low %vm2171, %vm2170
        %v2173 = vsel %vm2158, %v1859, 0
        %v2174 = vsel %vm2165, %v1855, 0
        %v2175 = vsel %vm2172, %v1862, 0
        %2176 = vrot.lane.b32.xlu0 %v2087, 49
        %v2177 = vpop.permute.xlu0 %2176
        %2178 = vrot.lane.b32.xlu0 %v2088, 49
        %v2179 = vpop.permute.xlu0 %2178
        %vm2180 = vcmask 400384
        %v2181 = vsel %vm2180, %v2177, %v2179
        %v2182 = vunpack.c.l.b16 %v2177
        %v2183 = vunpack.c.h.b16 %v2177
        %v2184 = vunpack.c.l.b16 0
        %v2185 = vunpack.c.h.b16 0
        %vm2186 = vcmp.ne.s32.totalorder %v2182, %v2184
        %vm2187 = vcmp.ne.s32.totalorder %v2183, %v2185
        %vm2188 = vmpackc.low %vm2187, %vm2186
        %v2189 = vunpack.c.l.b16 %v2181
        %v2190 = vunpack.c.h.b16 %v2181
        %v2191 = vunpack.c.l.b16 0
        %v2192 = vunpack.c.h.b16 0
        %vm2193 = vcmp.ne.s32.totalorder %v2189, %v2191
        %vm2194 = vcmp.ne.s32.totalorder %v2190, %v2192
        %vm2195 = vmpackc.low %vm2194, %vm2193
        %v2196 = vunpack.c.l.b16 %v2179
        %v2197 = vunpack.c.h.b16 %v2179
        %v2198 = vunpack.c.l.b16 0
        %v2199 = vunpack.c.h.b16 0
        %vm2200 = vcmp.ne.s32.totalorder %v2196, %v2198
        %vm2201 = vcmp.ne.s32.totalorder %v2197, %v2199
        %vm2202 = vmpackc.low %vm2201, %vm2200
        %v2203 = vsel %vm2188, %v1859, 0
        %v2204 = vsel %vm2195, %v1855, 0
        %v2205 = vsel %vm2202, %v1862, 0
        %2206 = vrot.lane.b32.xlu0 %v2087, 65
        %v2207 = vpop.permute.xlu0 %2206
        %2208 = vrot.lane.b32.xlu0 %v2088, 65
        %v2209 = vpop.permute.xlu0 %2208
        %vm2210 = vcmask 531456
        %v2211 = vsel %vm2210, %v2207, %v2209
        %v2212 = vunpack.c.l.b16 %v2207
        %v2213 = vunpack.c.h.b16 %v2207
        %v2214 = vunpack.c.l.b16 0
        %v2215 = vunpack.c.h.b16 0
        %vm2216 = vcmp.ne.s32.totalorder %v2212, %v2214
        %vm2217 = vcmp.ne.s32.totalorder %v2213, %v2215
        %vm2218 = vmpackc.low %vm2217, %vm2216
        %v2219 = vunpack.c.l.b16 %v2211
        %v2220 = vunpack.c.h.b16 %v2211
        %v2221 = vunpack.c.l.b16 0
        %v2222 = vunpack.c.h.b16 0
        %vm2223 = vcmp.ne.s32.totalorder %v2219, %v2221
        %vm2224 = vcmp.ne.s32.totalorder %v2220, %v2222
        %vm2225 = vmpackc.low %vm2224, %vm2223
        %v2226 = vunpack.c.l.b16 %v2209
        %v2227 = vunpack.c.h.b16 %v2209
        %v2228 = vunpack.c.l.b16 0
        %v2229 = vunpack.c.h.b16 0
        %vm2230 = vcmp.ne.s32.totalorder %v2226, %v2228
        %vm2231 = vcmp.ne.s32.totalorder %v2227, %v2229
        %vm2232 = vmpackc.low %vm2231, %vm2230
        %v2233 = vsel %vm2218, %v1859, 0
        %v2234 = vsel %vm2225, %v1855, 0
        %v2235 = vsel %vm2232, %v1862, 0
        %2236 = vrot.lane.b32.xlu0 %v2087, 81
        %v2237 = vpop.permute.xlu0 %2236
        %2238 = vrot.lane.b32.xlu0 %v2088, 81
        %v2239 = vpop.permute.xlu0 %2238
        %vm2240 = vcmask 662528
        %v2241 = vsel %vm2240, %v2237, %v2239
        %v2242 = vunpack.c.l.b16 %v2237
        %v2243 = vunpack.c.h.b16 %v2237
        %v2244 = vunpack.c.l.b16 0
        %v2245 = vunpack.c.h.b16 0
        %vm2246 = vcmp.ne.s32.totalorder %v2242, %v2244
        %vm2247 = vcmp.ne.s32.totalorder %v2243, %v2245
        %vm2248 = vmpackc.low %vm2247, %vm2246
        %v2249 = vunpack.c.l.b16 %v2241
        %v2250 = vunpack.c.h.b16 %v2241
        %v2251 = vunpack.c.l.b16 0
        %v2252 = vunpack.c.h.b16 0
        %vm2253 = vcmp.ne.s32.totalorder %v2249, %v2251
        %vm2254 = vcmp.ne.s32.totalorder %v2250, %v2252
        %vm2255 = vmpackc.low %vm2254, %vm2253
        %v2256 = vunpack.c.l.b16 %v2239
        %v2257 = vunpack.c.h.b16 %v2239
        %v2258 = vunpack.c.l.b16 0
        %v2259 = vunpack.c.h.b16 0
        %vm2260 = vcmp.ne.s32.totalorder %v2256, %v2258
        %vm2261 = vcmp.ne.s32.totalorder %v2257, %v2259
        %vm2262 = vmpackc.low %vm2261, %vm2260
        %v2263 = vsel %vm2248, %v1859, 0
        %v2264 = vsel %vm2255, %v1855, 0
        %v2265 = vsel %vm2262, %v1862, 0
        %2266 = vrot.lane.b32.xlu0 %v2087, 97
        %v2267 = vpop.permute.xlu0 %2266
        %2268 = vrot.lane.b32.xlu0 %v2088, 97
        %v2269 = vpop.permute.xlu0 %2268
        %vm2270 = vcmask 793600
        %v2271 = vsel %vm2270, %v2267, %v2269
        %v2272 = vunpack.c.l.b16 %v2267
        %v2273 = vunpack.c.h.b16 %v2267
        %v2274 = vunpack.c.l.b16 0
        %v2275 = vunpack.c.h.b16 0
        %vm2276 = vcmp.ne.s32.totalorder %v2272, %v2274
        %vm2277 = vcmp.ne.s32.totalorder %v2273, %v2275
        %vm2278 = vmpackc.low %vm2277, %vm2276
        %v2279 = vunpack.c.l.b16 %v2271
        %v2280 = vunpack.c.h.b16 %v2271
        %v2281 = vunpack.c.l.b16 0
        %v2282 = vunpack.c.h.b16 0
        %vm2283 = vcmp.ne.s32.totalorder %v2279, %v2281
        %vm2284 = vcmp.ne.s32.totalorder %v2280, %v2282
        %vm2285 = vmpackc.low %vm2284, %vm2283
        %v2286 = vunpack.c.l.b16 %v2269
        %v2287 = vunpack.c.h.b16 %v2269
        %v2288 = vunpack.c.l.b16 0
        %v2289 = vunpack.c.h.b16 0
        %vm2290 = vcmp.ne.s32.totalorder %v2286, %v2288
        %vm2291 = vcmp.ne.s32.totalorder %v2287, %v2289
        %vm2292 = vmpackc.low %vm2291, %vm2290
        %v2293 = vsel %vm2278, %v1859, 0
        %v2294 = vsel %vm2285, %v1855, 0
        %v2295 = vsel %vm2292, %v1862, 0
        %2296 = vrot.lane.b32.xlu0 %v643, 2
        %v2297 = vpop.permute.xlu0 %2296
        %2298 = vrot.lane.b32.xlu0 %v644, 2
        %v2299 = vpop.permute.xlu0 %2298
        %v2300 = vsel %vm711, %v2297, %v2299
        %v2301 = vunpack.c.l.b16 %v2297
        %v2302 = vunpack.c.h.b16 %v2297
        %v2303 = vunpack.c.l.b16 0
        %v2304 = vunpack.c.h.b16 0
        %vm2305 = vcmp.ne.s32.totalorder %v2301, %v2303
        %vm2306 = vcmp.ne.s32.totalorder %v2302, %v2304
        %vm2307 = vmpackc.low %vm2306, %vm2305
        %v2308 = vunpack.c.l.b16 %v2300
        %v2309 = vunpack.c.h.b16 %v2300
        %v2310 = vunpack.c.l.b16 0
        %v2311 = vunpack.c.h.b16 0
        %vm2312 = vcmp.ne.s32.totalorder %v2308, %v2310
        %vm2313 = vcmp.ne.s32.totalorder %v2309, %v2311
        %vm2314 = vmpackc.low %vm2313, %vm2312
        %v2315 = vunpack.c.l.b16 %v2299
        %v2316 = vunpack.c.h.b16 %v2299
        %v2317 = vunpack.c.l.b16 0
        %v2318 = vunpack.c.h.b16 0
        %vm2319 = vcmp.ne.s32.totalorder %v2315, %v2317
        %vm2320 = vcmp.ne.s32.totalorder %v2316, %v2318
        %vm2321 = vmpackc.low %vm2320, %vm2319
        %v2322 = vsel %vm2307, %v1859, 0
        %v2323 = vsel %vm2314, %v1855, 0
        %v2324 = vsel %vm2321, %v1862, 0
        %2325 = vrot.lane.b32.xlu0 %v643, 18
        %v2326 = vpop.permute.xlu0 %2325
        %2327 = vrot.lane.b32.xlu0 %v644, 18
        %v2328 = vpop.permute.xlu0 %2327
        %v2329 = vsel %vm800, %v2326, %v2328
        %v2330 = vunpack.c.l.b16 %v2326
        %v2331 = vunpack.c.h.b16 %v2326
        %v2332 = vunpack.c.l.b16 0
        %v2333 = vunpack.c.h.b16 0
        %vm2334 = vcmp.ne.s32.totalorder %v2330, %v2332
        %vm2335 = vcmp.ne.s32.totalorder %v2331, %v2333
        %vm2336 = vmpackc.low %vm2335, %vm2334
        %v2337 = vunpack.c.l.b16 %v2329
        %v2338 = vunpack.c.h.b16 %v2329
        %v2339 = vunpack.c.l.b16 0
        %v2340 = vunpack.c.h.b16 0
        %vm2341 = vcmp.ne.s32.totalorder %v2337, %v2339
        %vm2342 = vcmp.ne.s32.totalorder %v2338, %v2340
        %vm2343 = vmpackc.low %vm2342, %vm2341
        %v2344 = vunpack.c.l.b16 %v2328
        %v2345 = vunpack.c.h.b16 %v2328
        %v2346 = vunpack.c.l.b16 0
        %v2347 = vunpack.c.h.b16 0
        %vm2348 = vcmp.ne.s32.totalorder %v2344, %v2346
        %vm2349 = vcmp.ne.s32.totalorder %v2345, %v2347
        %vm2350 = vmpackc.low %vm2349, %vm2348
        %v2351 = vsel %vm2336, %v1859, 0
        %v2352 = vsel %vm2343, %v1855, 0
        %v2353 = vsel %vm2350, %v1862, 0
        %2354 = vrot.lane.b32.xlu0 %v643, 34
        %v2355 = vpop.permute.xlu0 %2354
        %2356 = vrot.lane.b32.xlu0 %v644, 34
        %v2357 = vpop.permute.xlu0 %2356
        %v2358 = vsel %vm890, %v2355, %v2357
        %v2359 = vunpack.c.l.b16 %v2355
        %v2360 = vunpack.c.h.b16 %v2355
        %v2361 = vunpack.c.l.b16 0
        %v2362 = vunpack.c.h.b16 0
        %vm2363 = vcmp.ne.s32.totalorder %v2359, %v2361
        %vm2364 = vcmp.ne.s32.totalorder %v2360, %v2362
        %vm2365 = vmpackc.low %vm2364, %vm2363
        %v2366 = vunpack.c.l.b16 %v2358
        %v2367 = vunpack.c.h.b16 %v2358
        %v2368 = vunpack.c.l.b16 0
        %v2369 = vunpack.c.h.b16 0
        %vm2370 = vcmp.ne.s32.totalorder %v2366, %v2368
        %vm2371 = vcmp.ne.s32.totalorder %v2367, %v2369
        %vm2372 = vmpackc.low %vm2371, %vm2370
        %v2373 = vunpack.c.l.b16 %v2357
        %v2374 = vunpack.c.h.b16 %v2357
        %v2375 = vunpack.c.l.b16 0
        %v2376 = vunpack.c.h.b16 0
        %vm2377 = vcmp.ne.s32.totalorder %v2373, %v2375
        %vm2378 = vcmp.ne.s32.totalorder %v2374, %v2376
        %vm2379 = vmpackc.low %vm2378, %vm2377
        %v2380 = vsel %vm2365, %v1859, 0
        %v2381 = vsel %vm2372, %v1855, 0
        %v2382 = vsel %vm2379, %v1862, 0
        %2383 = vrot.lane.b32.xlu0 %v643, 50
        %v2384 = vpop.permute.xlu0 %2383
        %2385 = vrot.lane.b32.xlu0 %v644, 50
        %v2386 = vpop.permute.xlu0 %2385
        %vm2387 = vcmask 408576
        %v2388 = vsel %vm2387, %v2384, %v2386
        %v2389 = vunpack.c.l.b16 %v2384
        %v2390 = vunpack.c.h.b16 %v2384
        %v2391 = vunpack.c.l.b16 0
        %v2392 = vunpack.c.h.b16 0
        %vm2393 = vcmp.ne.s32.totalorder %v2389, %v2391
        %vm2394 = vcmp.ne.s32.totalorder %v2390, %v2392
        %vm2395 = vmpackc.low %vm2394, %vm2393
        %v2396 = vunpack.c.l.b16 %v2388
        %v2397 = vunpack.c.h.b16 %v2388
        %v2398 = vunpack.c.l.b16 0
        %v2399 = vunpack.c.h.b16 0
        %vm2400 = vcmp.ne.s32.totalorder %v2396, %v2398
        %vm2401 = vcmp.ne.s32.totalorder %v2397, %v2399
        %vm2402 = vmpackc.low %vm2401, %vm2400
        %v2403 = vunpack.c.l.b16 %v2386
        %v2404 = vunpack.c.h.b16 %v2386
        %v2405 = vunpack.c.l.b16 0
        %v2406 = vunpack.c.h.b16 0
        %vm2407 = vcmp.ne.s32.totalorder %v2403, %v2405
        %vm2408 = vcmp.ne.s32.totalorder %v2404, %v2406
        %vm2409 = vmpackc.low %vm2408, %vm2407
        %v2410 = vsel %vm2395, %v1859, 0
        %v2411 = vsel %vm2402, %v1855, 0
        %v2412 = vsel %vm2409, %v1862, 0
        %2413 = vrot.lane.b32.xlu0 %v643, 66
        %v2414 = vpop.permute.xlu0 %2413
        %2415 = vrot.lane.b32.xlu0 %v644, 66
        %v2416 = vpop.permute.xlu0 %2415
        %vm2417 = vcmask 539648
        %v2418 = vsel %vm2417, %v2414, %v2416
        %v2419 = vunpack.c.l.b16 %v2414
        %v2420 = vunpack.c.h.b16 %v2414
        %v2421 = vunpack.c.l.b16 0
        %v2422 = vunpack.c.h.b16 0
        %vm2423 = vcmp.ne.s32.totalorder %v2419, %v2421
        %vm2424 = vcmp.ne.s32.totalorder %v2420, %v2422
        %vm2425 = vmpackc.low %vm2424, %vm2423
        %v2426 = vunpack.c.l.b16 %v2418
        %v2427 = vunpack.c.h.b16 %v2418
        %v2428 = vunpack.c.l.b16 0
        %v2429 = vunpack.c.h.b16 0
        %vm2430 = vcmp.ne.s32.totalorder %v2426, %v2428
        %vm2431 = vcmp.ne.s32.totalorder %v2427, %v2429
        %vm2432 = vmpackc.low %vm2431, %vm2430
        %v2433 = vunpack.c.l.b16 %v2416
        %v2434 = vunpack.c.h.b16 %v2416
        %v2435 = vunpack.c.l.b16 0
        %v2436 = vunpack.c.h.b16 0
        %vm2437 = vcmp.ne.s32.totalorder %v2433, %v2435
        %vm2438 = vcmp.ne.s32.totalorder %v2434, %v2436
        %vm2439 = vmpackc.low %vm2438, %vm2437
        %v2440 = vsel %vm2425, %v1859, 0
        %v2441 = vsel %vm2432, %v1855, 0
        %v2442 = vsel %vm2439, %v1862, 0
        %2443 = vrot.lane.b32.xlu0 %v643, 82
        %v2444 = vpop.permute.xlu0 %2443
        %2445 = vrot.lane.b32.xlu0 %v644, 82
        %v2446 = vpop.permute.xlu0 %2445
        %vm2447 = vcmask 670720
        %v2448 = vsel %vm2447, %v2444, %v2446
        %v2449 = vunpack.c.l.b16 %v2444
        %v2450 = vunpack.c.h.b16 %v2444
        %v2451 = vunpack.c.l.b16 0
        %v2452 = vunpack.c.h.b16 0
        %vm2453 = vcmp.ne.s32.totalorder %v2449, %v2451
        %vm2454 = vcmp.ne.s32.totalorder %v2450, %v2452
        %vm2455 = vmpackc.low %vm2454, %vm2453
        %v2456 = vunpack.c.l.b16 %v2448
        %v2457 = vunpack.c.h.b16 %v2448
        %v2458 = vunpack.c.l.b16 0
        %v2459 = vunpack.c.h.b16 0
        %vm2460 = vcmp.ne.s32.totalorder %v2456, %v2458
        %vm2461 = vcmp.ne.s32.totalorder %v2457, %v2459
        %vm2462 = vmpackc.low %vm2461, %vm2460
        %v2463 = vunpack.c.l.b16 %v2446
        %v2464 = vunpack.c.h.b16 %v2446
        %v2465 = vunpack.c.l.b16 0
        %v2466 = vunpack.c.h.b16 0
        %vm2467 = vcmp.ne.s32.totalorder %v2463, %v2465
        %vm2468 = vcmp.ne.s32.totalorder %v2464, %v2466
        %vm2469 = vmpackc.low %vm2468, %vm2467
        %v2470 = vsel %vm2455, %v1859, 0
        %v2471 = vsel %vm2462, %v1855, 0
        %v2472 = vsel %vm2469, %v1862, 0
        %2473 = vrot.lane.b32.xlu0 %v643, 98
        %v2474 = vpop.permute.xlu0 %2473
        %2475 = vrot.lane.b32.xlu0 %v644, 98
        %v2476 = vpop.permute.xlu0 %2475
        %vm2477 = vcmask 801792
        %v2478 = vsel %vm2477, %v2474, %v2476
        %v2479 = vunpack.c.l.b16 %v2474
        %v2480 = vunpack.c.h.b16 %v2474
        %v2481 = vunpack.c.l.b16 0
        %v2482 = vunpack.c.h.b16 0
        %vm2483 = vcmp.ne.s32.totalorder %v2479, %v2481
        %vm2484 = vcmp.ne.s32.totalorder %v2480, %v2482
        %vm2485 = vmpackc.low %vm2484, %vm2483
        %v2486 = vunpack.c.l.b16 %v2478
        %v2487 = vunpack.c.h.b16 %v2478
        %v2488 = vunpack.c.l.b16 0
        %v2489 = vunpack.c.h.b16 0
        %vm2490 = vcmp.ne.s32.totalorder %v2486, %v2488
        %vm2491 = vcmp.ne.s32.totalorder %v2487, %v2489
        %vm2492 = vmpackc.low %vm2491, %vm2490
        %v2493 = vunpack.c.l.b16 %v2476
        %v2494 = vunpack.c.h.b16 %v2476
        %v2495 = vunpack.c.l.b16 0
        %v2496 = vunpack.c.h.b16 0
        %vm2497 = vcmp.ne.s32.totalorder %v2493, %v2495
        %vm2498 = vcmp.ne.s32.totalorder %v2494, %v2496
        %vm2499 = vmpackc.low %vm2498, %vm2497
        %v2500 = vsel %vm2485, %v1859, 0
        %v2501 = vsel %vm2492, %v1855, 0
        %v2502 = vsel %vm2499, %v1862, 0
        %2503 = vrot.lane.b32.xlu0 %v667, 3
        %v2504 = vpop.permute.xlu0 %2503
        %2505 = vrot.lane.b32.xlu0 %v668, 3
        %v2506 = vpop.permute.xlu0 %2505
        %vm2507 = vcmask 23552
        %v2508 = vsel %vm2507, %v2504, %v2506
        %v2509 = vunpack.c.l.b16 %v2504
        %v2510 = vunpack.c.h.b16 %v2504
        %v2511 = vunpack.c.l.b16 0
        %v2512 = vunpack.c.h.b16 0
        %vm2513 = vcmp.ne.s32.totalorder %v2509, %v2511
        %vm2514 = vcmp.ne.s32.totalorder %v2510, %v2512
        %vm2515 = vmpackc.low %vm2514, %vm2513
        %v2516 = vunpack.c.l.b16 %v2508
        %v2517 = vunpack.c.h.b16 %v2508
        %v2518 = vunpack.c.l.b16 0
        %v2519 = vunpack.c.h.b16 0
        %vm2520 = vcmp.ne.s32.totalorder %v2516, %v2518
        %vm2521 = vcmp.ne.s32.totalorder %v2517, %v2519
        %vm2522 = vmpackc.low %vm2521, %vm2520
        %v2523 = vunpack.c.l.b16 %v2506
        %v2524 = vunpack.c.h.b16 %v2506
        %v2525 = vunpack.c.l.b16 0
        %v2526 = vunpack.c.h.b16 0
        %vm2527 = vcmp.ne.s32.totalorder %v2523, %v2525
        %vm2528 = vcmp.ne.s32.totalorder %v2524, %v2526
        %vm2529 = vmpackc.low %vm2528, %vm2527
        %v2530 = vsel %vm2515, %v1859, 0
        %v2531 = vsel %vm2522, %v1855, 0
        %v2532 = vsel %vm2529, %v1862, 0
        %2533 = vrot.lane.b32.xlu0 %v667, 19
        %v2534 = vpop.permute.xlu0 %2533
        %2535 = vrot.lane.b32.xlu0 %v668, 19
        %v2536 = vpop.permute.xlu0 %2535
        %vm2537 = vcmask 154624
        %v2538 = vsel %vm2537, %v2534, %v2536
        %v2539 = vunpack.c.l.b16 %v2534
        %v2540 = vunpack.c.h.b16 %v2534
        %v2541 = vunpack.c.l.b16 0
        %v2542 = vunpack.c.h.b16 0
        %vm2543 = vcmp.ne.s32.totalorder %v2539, %v2541
        %vm2544 = vcmp.ne.s32.totalorder %v2540, %v2542
        %vm2545 = vmpackc.low %vm2544, %vm2543
        %v2546 = vunpack.c.l.b16 %v2538
        %v2547 = vunpack.c.h.b16 %v2538
        %v2548 = vunpack.c.l.b16 0
        %v2549 = vunpack.c.h.b16 0
        %vm2550 = vcmp.ne.s32.totalorder %v2546, %v2548
        %vm2551 = vcmp.ne.s32.totalorder %v2547, %v2549
        %vm2552 = vmpackc.low %vm2551, %vm2550
        %v2553 = vunpack.c.l.b16 %v2536
        %v2554 = vunpack.c.h.b16 %v2536
        %v2555 = vunpack.c.l.b16 0
        %v2556 = vunpack.c.h.b16 0
        %vm2557 = vcmp.ne.s32.totalorder %v2553, %v2555
        %vm2558 = vcmp.ne.s32.totalorder %v2554, %v2556
        %vm2559 = vmpackc.low %vm2558, %vm2557
        %v2560 = vsel %vm2545, %v1859, 0
        %v2561 = vsel %vm2552, %v1855, 0
        %v2562 = vsel %vm2559, %v1862, 0
        %2563 = vrot.lane.b32.xlu0 %v667, 35
        %v2564 = vpop.permute.xlu0 %2563
        %2565 = vrot.lane.b32.xlu0 %v668, 35
        %v2566 = vpop.permute.xlu0 %2565
        %vm2567 = vcmask 285696
        %v2568 = vsel %vm2567, %v2564, %v2566
        %v2569 = vunpack.c.l.b16 %v2564
        %v2570 = vunpack.c.h.b16 %v2564
        %v2571 = vunpack.c.l.b16 0
        %v2572 = vunpack.c.h.b16 0
        %vm2573 = vcmp.ne.s32.totalorder %v2569, %v2571
        %vm2574 = vcmp.ne.s32.totalorder %v2570, %v2572
        %vm2575 = vmpackc.low %vm2574, %vm2573
        %v2576 = vunpack.c.l.b16 %v2568
        %v2577 = vunpack.c.h.b16 %v2568
        %v2578 = vunpack.c.l.b16 0
        %v2579 = vunpack.c.h.b16 0
        %vm2580 = vcmp.ne.s32.totalorder %v2576, %v2578
        %vm2581 = vcmp.ne.s32.totalorder %v2577, %v2579
        %vm2582 = vmpackc.low %vm2581, %vm2580
        %v2583 = vunpack.c.l.b16 %v2566
        %v2584 = vunpack.c.h.b16 %v2566
        %v2585 = vunpack.c.l.b16 0
        %v2586 = vunpack.c.h.b16 0
        %vm2587 = vcmp.ne.s32.totalorder %v2583, %v2585
        %vm2588 = vcmp.ne.s32.totalorder %v2584, %v2586
        %vm2589 = vmpackc.low %vm2588, %vm2587
        %v2590 = vsel %vm2575, %v1859, 0
        %v2591 = vsel %vm2582, %v1855, 0
        %v2592 = vsel %vm2589, %v1862, 0
        %2593 = vrot.lane.b32.xlu0 %v667, 51
        %v2594 = vpop.permute.xlu0 %2593
        %2595 = vrot.lane.b32.xlu0 %v668, 51
        %v2596 = vpop.permute.xlu0 %2595
        %v2597 = vsel %vm1854, %v2594, %v2596
        %v2598 = vunpack.c.l.b16 %v2594
        %v2599 = vunpack.c.h.b16 %v2594
        %v2600 = vunpack.c.l.b16 0
        %v2601 = vunpack.c.h.b16 0
        %vm2602 = vcmp.ne.s32.totalorder %v2598, %v2600
        %vm2603 = vcmp.ne.s32.totalorder %v2599, %v2601
        %vm2604 = vmpackc.low %vm2603, %vm2602
        %v2605 = vunpack.c.l.b16 %v2597
        %v2606 = vunpack.c.h.b16 %v2597
        %v2607 = vunpack.c.l.b16 0
        %v2608 = vunpack.c.h.b16 0
        %vm2609 = vcmp.ne.s32.totalorder %v2605, %v2607
        %vm2610 = vcmp.ne.s32.totalorder %v2606, %v2608
        %vm2611 = vmpackc.low %vm2610, %vm2609
        %v2612 = vunpack.c.l.b16 %v2596
        %v2613 = vunpack.c.h.b16 %v2596
        %v2614 = vunpack.c.l.b16 0
        %v2615 = vunpack.c.h.b16 0
        %vm2616 = vcmp.ne.s32.totalorder %v2612, %v2614
        %vm2617 = vcmp.ne.s32.totalorder %v2613, %v2615
        %vm2618 = vmpackc.low %vm2617, %vm2616
        %v2619 = vsel %vm2604, %v1859, 0
        %v2620 = vsel %vm2611, %v1855, 0
        %v2621 = vsel %vm2618, %v1862, 0
        %2622 = vrot.lane.b32.xlu0 %v667, 67
        %v2623 = vpop.permute.xlu0 %2622
        %2624 = vrot.lane.b32.xlu0 %v668, 67
        %v2625 = vpop.permute.xlu0 %2624
        %vm2626 = vcmask 547840
        %v2627 = vsel %vm2626, %v2623, %v2625
        %v2628 = vunpack.c.l.b16 %v2623
        %v2629 = vunpack.c.h.b16 %v2623
        %v2630 = vunpack.c.l.b16 0
        %v2631 = vunpack.c.h.b16 0
        %vm2632 = vcmp.ne.s32.totalorder %v2628, %v2630
        %vm2633 = vcmp.ne.s32.totalorder %v2629, %v2631
        %vm2634 = vmpackc.low %vm2633, %vm2632
        %v2635 = vunpack.c.l.b16 %v2627
        %v2636 = vunpack.c.h.b16 %v2627
        %v2637 = vunpack.c.l.b16 0
        %v2638 = vunpack.c.h.b16 0
        %vm2639 = vcmp.ne.s32.totalorder %v2635, %v2637
        %vm2640 = vcmp.ne.s32.totalorder %v2636, %v2638
        %vm2641 = vmpackc.low %vm2640, %vm2639
        %v2642 = vunpack.c.l.b16 %v2625
        %v2643 = vunpack.c.h.b16 %v2625
        %v2644 = vunpack.c.l.b16 0
        %v2645 = vunpack.c.h.b16 0
        %vm2646 = vcmp.ne.s32.totalorder %v2642, %v2644
        %vm2647 = vcmp.ne.s32.totalorder %v2643, %v2645
        %vm2648 = vmpackc.low %vm2647, %vm2646
        %v2649 = vsel %vm2634, %v1859, 0
        %v2650 = vsel %vm2641, %v1855, 0
        %v2651 = vsel %vm2648, %v1862, 0
        %2652 = vrot.lane.b32.xlu0 %v667, 83
        %v2653 = vpop.permute.xlu0 %2652
        %2654 = vrot.lane.b32.xlu0 %v668, 83
        %v2655 = vpop.permute.xlu0 %2654
        %vm2656 = vcmask 678912
        %v2657 = vsel %vm2656, %v2653, %v2655
        %v2658 = vunpack.c.l.b16 %v2653
        %v2659 = vunpack.c.h.b16 %v2653
        %v2660 = vunpack.c.l.b16 0
        %v2661 = vunpack.c.h.b16 0
        %vm2662 = vcmp.ne.s32.totalorder %v2658, %v2660
        %vm2663 = vcmp.ne.s32.totalorder %v2659, %v2661
        %vm2664 = vmpackc.low %vm2663, %vm2662
        %v2665 = vunpack.c.l.b16 %v2657
        %v2666 = vunpack.c.h.b16 %v2657
        %v2667 = vunpack.c.l.b16 0
        %v2668 = vunpack.c.h.b16 0
        %vm2669 = vcmp.ne.s32.totalorder %v2665, %v2667
        %vm2670 = vcmp.ne.s32.totalorder %v2666, %v2668
        %vm2671 = vmpackc.low %vm2670, %vm2669
        %v2672 = vunpack.c.l.b16 %v2655
        %v2673 = vunpack.c.h.b16 %v2655
        %v2674 = vunpack.c.l.b16 0
        %v2675 = vunpack.c.h.b16 0
        %vm2676 = vcmp.ne.s32.totalorder %v2672, %v2674
        %vm2677 = vcmp.ne.s32.totalorder %v2673, %v2675
        %vm2678 = vmpackc.low %vm2677, %vm2676
        %v2679 = vsel %vm2664, %v1859, 0
        %v2680 = vsel %vm2671, %v1855, 0
        %v2681 = vsel %vm2678, %v1862, 0
        %2682 = vrot.lane.b32.xlu0 %v667, 99
        %v2683 = vpop.permute.xlu0 %2682
        %2684 = vrot.lane.b32.xlu0 %v668, 99
        %v2685 = vpop.permute.xlu0 %2684
        %vm2686 = vcmask 809984
        %v2687 = vsel %vm2686, %v2683, %v2685
        %v2688 = vunpack.c.l.b16 %v2683
        %v2689 = vunpack.c.h.b16 %v2683
        %v2690 = vunpack.c.l.b16 0
        %v2691 = vunpack.c.h.b16 0
        %vm2692 = vcmp.ne.s32.totalorder %v2688, %v2690
        %vm2693 = vcmp.ne.s32.totalorder %v2689, %v2691
        %vm2694 = vmpackc.low %vm2693, %vm2692
        %v2695 = vunpack.c.l.b16 %v2687
        %v2696 = vunpack.c.h.b16 %v2687
        %v2697 = vunpack.c.l.b16 0
        %v2698 = vunpack.c.h.b16 0
        %vm2699 = vcmp.ne.s32.totalorder %v2695, %v2697
        %vm2700 = vcmp.ne.s32.totalorder %v2696, %v2698
        %vm2701 = vmpackc.low %vm2700, %vm2699
        %v2702 = vunpack.c.l.b16 %v2685
        %v2703 = vunpack.c.h.b16 %v2685
        %v2704 = vunpack.c.l.b16 0
        %v2705 = vunpack.c.h.b16 0
        %vm2706 = vcmp.ne.s32.totalorder %v2702, %v2704
        %vm2707 = vcmp.ne.s32.totalorder %v2703, %v2705
        %vm2708 = vmpackc.low %vm2707, %vm2706
        %v2709 = vsel %vm2694, %v1859, 0
        %v2710 = vsel %vm2701, %v1855, 0
        %v2711 = vsel %vm2708, %v1862, 0
        %2712 = vrot.lane.b32.xlu0 %v705, 4
        %v2713 = vpop.permute.xlu0 %2712
        %2714 = vrot.lane.b32.xlu0 %v706, 4
        %v2715 = vpop.permute.xlu0 %2714
        %vm2716 = vcmask 31744
        %v2717 = vsel %vm2716, %v2713, %v2715
        %v2718 = vunpack.c.l.b16 %v2713
        %v2719 = vunpack.c.h.b16 %v2713
        %v2720 = vunpack.c.l.b16 0
        %v2721 = vunpack.c.h.b16 0
        %vm2722 = vcmp.ne.s32.totalorder %v2718, %v2720
        %vm2723 = vcmp.ne.s32.totalorder %v2719, %v2721
        %vm2724 = vmpackc.low %vm2723, %vm2722
        %v2725 = vunpack.c.l.b16 %v2717
        %v2726 = vunpack.c.h.b16 %v2717
        %v2727 = vunpack.c.l.b16 0
        %v2728 = vunpack.c.h.b16 0
        %vm2729 = vcmp.ne.s32.totalorder %v2725, %v2727
        %vm2730 = vcmp.ne.s32.totalorder %v2726, %v2728
        %vm2731 = vmpackc.low %vm2730, %vm2729
        %v2732 = vunpack.c.l.b16 %v2715
        %v2733 = vunpack.c.h.b16 %v2715
        %v2734 = vunpack.c.l.b16 0
        %v2735 = vunpack.c.h.b16 0
        %vm2736 = vcmp.ne.s32.totalorder %v2732, %v2734
        %vm2737 = vcmp.ne.s32.totalorder %v2733, %v2735
        %vm2738 = vmpackc.low %vm2737, %vm2736
        %v2739 = vsel %vm2724, %v1859, 0
        %v2740 = vsel %vm2731, %v1855, 0
        %v2741 = vsel %vm2738, %v1862, 0
        %2742 = vrot.lane.b32.xlu0 %v705, 20
        %v2743 = vpop.permute.xlu0 %2742
        %2744 = vrot.lane.b32.xlu0 %v706, 20
        %v2745 = vpop.permute.xlu0 %2744
        %vm2746 = vcmask 162816
        %v2747 = vsel %vm2746, %v2743, %v2745
        %v2748 = vunpack.c.l.b16 %v2743
        %v2749 = vunpack.c.h.b16 %v2743
        %v2750 = vunpack.c.l.b16 0
        %v2751 = vunpack.c.h.b16 0
        %vm2752 = vcmp.ne.s32.totalorder %v2748, %v2750
        %vm2753 = vcmp.ne.s32.totalorder %v2749, %v2751
        %vm2754 = vmpackc.low %vm2753, %vm2752
        %v2755 = vunpack.c.l.b16 %v2747
        %v2756 = vunpack.c.h.b16 %v2747
        %v2757 = vunpack.c.l.b16 0
        %v2758 = vunpack.c.h.b16 0
        %vm2759 = vcmp.ne.s32.totalorder %v2755, %v2757
        %vm2760 = vcmp.ne.s32.totalorder %v2756, %v2758
        %vm2761 = vmpackc.low %vm2760, %vm2759
        %v2762 = vunpack.c.l.b16 %v2745
        %v2763 = vunpack.c.h.b16 %v2745
        %v2764 = vunpack.c.l.b16 0
        %v2765 = vunpack.c.h.b16 0
        %vm2766 = vcmp.ne.s32.totalorder %v2762, %v2764
        %vm2767 = vcmp.ne.s32.totalorder %v2763, %v2765
        %vm2768 = vmpackc.low %vm2767, %vm2766
        %v2769 = vsel %vm2754, %v1859, 0
        %v2770 = vsel %vm2761, %v1855, 0
        %v2771 = vsel %vm2768, %v1862, 0
        %2772 = vrot.lane.b32.xlu0 %v705, 36
        %v2773 = vpop.permute.xlu0 %2772
        %2774 = vrot.lane.b32.xlu0 %v706, 36
        %v2775 = vpop.permute.xlu0 %2774
        %vm2776 = vcmask 293888
        %v2777 = vsel %vm2776, %v2773, %v2775
        %v2778 = vunpack.c.l.b16 %v2773
        %v2779 = vunpack.c.h.b16 %v2773
        %v2780 = vunpack.c.l.b16 0
        %v2781 = vunpack.c.h.b16 0
        %vm2782 = vcmp.ne.s32.totalorder %v2778, %v2780
        %vm2783 = vcmp.ne.s32.totalorder %v2779, %v2781
        %vm2784 = vmpackc.low %vm2783, %vm2782
        %v2785 = vunpack.c.l.b16 %v2777
        %v2786 = vunpack.c.h.b16 %v2777
        %v2787 = vunpack.c.l.b16 0
        %v2788 = vunpack.c.h.b16 0
        %vm2789 = vcmp.ne.s32.totalorder %v2785, %v2787
        %vm2790 = vcmp.ne.s32.totalorder %v2786, %v2788
        %vm2791 = vmpackc.low %vm2790, %vm2789
        %v2792 = vunpack.c.l.b16 %v2775
        %v2793 = vunpack.c.h.b16 %v2775
        %v2794 = vunpack.c.l.b16 0
        %v2795 = vunpack.c.h.b16 0
        %vm2796 = vcmp.ne.s32.totalorder %v2792, %v2794
        %vm2797 = vcmp.ne.s32.totalorder %v2793, %v2795
        %vm2798 = vmpackc.low %vm2797, %vm2796
        %v2799 = vsel %vm2784, %v1859, 0
        %v2800 = vsel %vm2791, %v1855, 0
        %v2801 = vsel %vm2798, %v1862, 0
        %2802 = vrot.lane.b32.xlu0 %v705, 52
        %v2803 = vpop.permute.xlu0 %2802
        %2804 = vrot.lane.b32.xlu0 %v706, 52
        %v2805 = vpop.permute.xlu0 %2804
        %vm2806 = vcmask 424960
        %v2807 = vsel %vm2806, %v2803, %v2805
        %v2808 = vunpack.c.l.b16 %v2803
        %v2809 = vunpack.c.h.b16 %v2803
        %v2810 = vunpack.c.l.b16 0
        %v2811 = vunpack.c.h.b16 0
        %vm2812 = vcmp.ne.s32.totalorder %v2808, %v2810
        %vm2813 = vcmp.ne.s32.totalorder %v2809, %v2811
        %vm2814 = vmpackc.low %vm2813, %vm2812
        %v2815 = vunpack.c.l.b16 %v2807
        %v2816 = vunpack.c.h.b16 %v2807
        %v2817 = vunpack.c.l.b16 0
        %v2818 = vunpack.c.h.b16 0
        %vm2819 = vcmp.ne.s32.totalorder %v2815, %v2817
        %vm2820 = vcmp.ne.s32.totalorder %v2816, %v2818
        %vm2821 = vmpackc.low %vm2820, %vm2819
        %v2822 = vunpack.c.l.b16 %v2805
        %v2823 = vunpack.c.h.b16 %v2805
        %v2824 = vunpack.c.l.b16 0
        %v2825 = vunpack.c.h.b16 0
        %vm2826 = vcmp.ne.s32.totalorder %v2822, %v2824
        %vm2827 = vcmp.ne.s32.totalorder %v2823, %v2825
        %vm2828 = vmpackc.low %vm2827, %vm2826
        %v2829 = vsel %vm2814, %v1859, 0
        %v2830 = vsel %vm2821, %v1855, 0
        %v2831 = vsel %vm2828, %v1862, 0
        %2832 = vrot.lane.b32.xlu0 %v705, 68
        %v2833 = vpop.permute.xlu0 %2832
        %2834 = vrot.lane.b32.xlu0 %v706, 68
        %v2835 = vpop.permute.xlu0 %2834
        %vm2836 = vcmask 556032
        %v2837 = vsel %vm2836, %v2833, %v2835
        %v2838 = vunpack.c.l.b16 %v2833
        %v2839 = vunpack.c.h.b16 %v2833
        %v2840 = vunpack.c.l.b16 0
        %v2841 = vunpack.c.h.b16 0
        %vm2842 = vcmp.ne.s32.totalorder %v2838, %v2840
        %vm2843 = vcmp.ne.s32.totalorder %v2839, %v2841
        %vm2844 = vmpackc.low %vm2843, %vm2842
        %v2845 = vunpack.c.l.b16 %v2837
        %v2846 = vunpack.c.h.b16 %v2837
        %v2847 = vunpack.c.l.b16 0
        %v2848 = vunpack.c.h.b16 0
        %vm2849 = vcmp.ne.s32.totalorder %v2845, %v2847
        %vm2850 = vcmp.ne.s32.totalorder %v2846, %v2848
        %vm2851 = vmpackc.low %vm2850, %vm2849
        %v2852 = vunpack.c.l.b16 %v2835
        %v2853 = vunpack.c.h.b16 %v2835
        %v2854 = vunpack.c.l.b16 0
        %v2855 = vunpack.c.h.b16 0
        %vm2856 = vcmp.ne.s32.totalorder %v2852, %v2854
        %vm2857 = vcmp.ne.s32.totalorder %v2853, %v2855
        %vm2858 = vmpackc.low %vm2857, %vm2856
        %v2859 = vsel %vm2844, %v1859, 0
        %v2860 = vsel %vm2851, %v1855, 0
        %v2861 = vsel %vm2858, %v1862, 0
        %2862 = vrot.lane.b32.xlu0 %v705, 84
        %v2863 = vpop.permute.xlu0 %2862
        %2864 = vrot.lane.b32.xlu0 %v706, 84
        %v2865 = vpop.permute.xlu0 %2864
        %vm2866 = vcmask 687104
        %v2867 = vsel %vm2866, %v2863, %v2865
        %v2868 = vunpack.c.l.b16 %v2863
        %v2869 = vunpack.c.h.b16 %v2863
        %v2870 = vunpack.c.l.b16 0
        %v2871 = vunpack.c.h.b16 0
        %vm2872 = vcmp.ne.s32.totalorder %v2868, %v2870
        %vm2873 = vcmp.ne.s32.totalorder %v2869, %v2871
        %vm2874 = vmpackc.low %vm2873, %vm2872
        %v2875 = vunpack.c.l.b16 %v2867
        %v2876 = vunpack.c.h.b16 %v2867
        %v2877 = vunpack.c.l.b16 0
        %v2878 = vunpack.c.h.b16 0
        %vm2879 = vcmp.ne.s32.totalorder %v2875, %v2877
        %vm2880 = vcmp.ne.s32.totalorder %v2876, %v2878
        %vm2881 = vmpackc.low %vm2880, %vm2879
        %v2882 = vunpack.c.l.b16 %v2865
        %v2883 = vunpack.c.h.b16 %v2865
        %v2884 = vunpack.c.l.b16 0
        %v2885 = vunpack.c.h.b16 0
        %vm2886 = vcmp.ne.s32.totalorder %v2882, %v2884
        %vm2887 = vcmp.ne.s32.totalorder %v2883, %v2885
        %vm2888 = vmpackc.low %vm2887, %vm2886
        %v2889 = vsel %vm2874, %v1859, 0
        %v2890 = vsel %vm2881, %v1855, 0
        %v2891 = vsel %vm2888, %v1862, 0
        %2892 = vrot.lane.b32.xlu0 %v705, 100
        %v2893 = vpop.permute.xlu0 %2892
        %2894 = vrot.lane.b32.xlu0 %v706, 100
        %v2895 = vpop.permute.xlu0 %2894
        %vm2896 = vcmask 818176
        %v2897 = vsel %vm2896, %v2893, %v2895
        %v2898 = vunpack.c.l.b16 %v2893
        %v2899 = vunpack.c.h.b16 %v2893
        %v2900 = vunpack.c.l.b16 0
        %v2901 = vunpack.c.h.b16 0
        %vm2902 = vcmp.ne.s32.totalorder %v2898, %v2900
        %vm2903 = vcmp.ne.s32.totalorder %v2899, %v2901
        %vm2904 = vmpackc.low %vm2903, %vm2902
        %v2905 = vunpack.c.l.b16 %v2897
        %v2906 = vunpack.c.h.b16 %v2897
        %v2907 = vunpack.c.l.b16 0
        %v2908 = vunpack.c.h.b16 0
        %vm2909 = vcmp.ne.s32.totalorder %v2905, %v2907
        %vm2910 = vcmp.ne.s32.totalorder %v2906, %v2908
        %vm2911 = vmpackc.low %vm2910, %vm2909
        %v2912 = vunpack.c.l.b16 %v2895
        %v2913 = vunpack.c.h.b16 %v2895
        %v2914 = vunpack.c.l.b16 0
        %v2915 = vunpack.c.h.b16 0
        %vm2916 = vcmp.ne.s32.totalorder %v2912, %v2914
        %vm2917 = vcmp.ne.s32.totalorder %v2913, %v2915
        %vm2918 = vmpackc.low %vm2917, %vm2916
        %v2919 = vsel %vm2904, %v1859, 0
        %v2920 = vsel %vm2911, %v1855, 0
        %v2921 = vsel %vm2918, %v1862, 0
        %v2922 = vadd.s32 %v505, 2
        %v2923 = vadd.s32 %v506, 2
        %vm2924 = vcmp.ge.s32.totalorder %v2922, 0
        %vm2925 = vcmp.ge.s32.totalorder %v2923, 0
        %vm2926 = vcmp.lt.s32.totalorder %v2922, 16
        %vm2927 = vcmp.lt.s32.totalorder %v2923, 16
        %vm2928 = vmand %vm2924, %vm2926
        %vm2929 = vmand %vm2925, %vm2927
        %v2930 = vsel %vm2928, 1, 0
        %v2931 = vsel %vm2929, 1, 0
        %vm2932 = vcmp.eq.s32.totalorder %v2930, 1
        %vm2933 = vcmp.eq.s32.totalorder %v2931, 1
        %vm2934 = vmpackc.low %vm2933, %vm2932
        %v2935 = vsel %vm2934, 65537, 0
        %v2936 = vperm.slane %v2935, 0
        %v2937 = vperm.slane %v2935, 4
        %2938 = vrot.lane.b32.xlu0 %v2936, 5
        %v2939 = vpop.permute.xlu0 %2938
        %2940 = vrot.lane.b32.xlu0 %v2937, 5
        %v2941 = vpop.permute.xlu0 %2940
        %vm2942 = vcmask 39936
        %v2943 = vsel %vm2942, %v2939, %v2941
        %v2944 = vunpack.c.l.b16 %v2939
        %v2945 = vunpack.c.h.b16 %v2939
        %v2946 = vunpack.c.l.b16 0
        %v2947 = vunpack.c.h.b16 0
        %vm2948 = vcmp.ne.s32.totalorder %v2944, %v2946
        %vm2949 = vcmp.ne.s32.totalorder %v2945, %v2947
        %vm2950 = vmpackc.low %vm2949, %vm2948
        %v2951 = vunpack.c.l.b16 %v2943
        %v2952 = vunpack.c.h.b16 %v2943
        %v2953 = vunpack.c.l.b16 0
        %v2954 = vunpack.c.h.b16 0
        %vm2955 = vcmp.ne.s32.totalorder %v2951, %v2953
        %vm2956 = vcmp.ne.s32.totalorder %v2952, %v2954
        %vm2957 = vmpackc.low %vm2956, %vm2955
        %v2958 = vunpack.c.l.b16 %v2941
        %v2959 = vunpack.c.h.b16 %v2941
        %v2960 = vunpack.c.l.b16 0
        %v2961 = vunpack.c.h.b16 0
        %vm2962 = vcmp.ne.s32.totalorder %v2958, %v2960
        %vm2963 = vcmp.ne.s32.totalorder %v2959, %v2961
        %vm2964 = vmpackc.low %vm2963, %vm2962
        %v2965 = vsel %vm2950, %v1859, 0
        %v2966 = vsel %vm2957, %v1855, 0
        %v2967 = vsel %vm2964, %v1862, 0
        %2968 = vrot.lane.b32.xlu0 %v2936, 21
        %v2969 = vpop.permute.xlu0 %2968
        %2970 = vrot.lane.b32.xlu0 %v2937, 21
        %v2971 = vpop.permute.xlu0 %2970
        %vm2972 = vcmask 171008
        %v2973 = vsel %vm2972, %v2969, %v2971
        %v2974 = vunpack.c.l.b16 %v2969
        %v2975 = vunpack.c.h.b16 %v2969
        %v2976 = vunpack.c.l.b16 0
        %v2977 = vunpack.c.h.b16 0
        %vm2978 = vcmp.ne.s32.totalorder %v2974, %v2976
        %vm2979 = vcmp.ne.s32.totalorder %v2975, %v2977
        %vm2980 = vmpackc.low %vm2979, %vm2978
        %v2981 = vunpack.c.l.b16 %v2973
        %v2982 = vunpack.c.h.b16 %v2973
        %v2983 = vunpack.c.l.b16 0
        %v2984 = vunpack.c.h.b16 0
        %vm2985 = vcmp.ne.s32.totalorder %v2981, %v2983
        %vm2986 = vcmp.ne.s32.totalorder %v2982, %v2984
        %vm2987 = vmpackc.low %vm2986, %vm2985
        %v2988 = vunpack.c.l.b16 %v2971
        %v2989 = vunpack.c.h.b16 %v2971
        %v2990 = vunpack.c.l.b16 0
        %v2991 = vunpack.c.h.b16 0
        %vm2992 = vcmp.ne.s32.totalorder %v2988, %v2990
        %vm2993 = vcmp.ne.s32.totalorder %v2989, %v2991
        %vm2994 = vmpackc.low %vm2993, %vm2992
        %v2995 = vsel %vm2980, %v1859, 0
        %v2996 = vsel %vm2987, %v1855, 0
        %v2997 = vsel %vm2994, %v1862, 0
        %2998 = vrot.lane.b32.xlu0 %v2936, 37
        %v2999 = vpop.permute.xlu0 %2998
        %3000 = vrot.lane.b32.xlu0 %v2937, 37
        %v3001 = vpop.permute.xlu0 %3000
        %vm3002 = vcmask 302080
        %v3003 = vsel %vm3002, %v2999, %v3001
        %v3004 = vunpack.c.l.b16 %v2999
        %v3005 = vunpack.c.h.b16 %v2999
        %v3006 = vunpack.c.l.b16 0
        %v3007 = vunpack.c.h.b16 0
        %vm3008 = vcmp.ne.s32.totalorder %v3004, %v3006
        %vm3009 = vcmp.ne.s32.totalorder %v3005, %v3007
        %vm3010 = vmpackc.low %vm3009, %vm3008
        %v3011 = vunpack.c.l.b16 %v3003
        %v3012 = vunpack.c.h.b16 %v3003
        %v3013 = vunpack.c.l.b16 0
        %v3014 = vunpack.c.h.b16 0
        %vm3015 = vcmp.ne.s32.totalorder %v3011, %v3013
        %vm3016 = vcmp.ne.s32.totalorder %v3012, %v3014
        %vm3017 = vmpackc.low %vm3016, %vm3015
        %v3018 = vunpack.c.l.b16 %v3001
        %v3019 = vunpack.c.h.b16 %v3001
        %v3020 = vunpack.c.l.b16 0
        %v3021 = vunpack.c.h.b16 0
        %vm3022 = vcmp.ne.s32.totalorder %v3018, %v3020
        %vm3023 = vcmp.ne.s32.totalorder %v3019, %v3021
        %vm3024 = vmpackc.low %vm3023, %vm3022
        %v3025 = vsel %vm3010, %v1859, 0
        %v3026 = vsel %vm3017, %v1855, 0
        %v3027 = vsel %vm3024, %v1862, 0
        %3028 = vrot.lane.b32.xlu0 %v2936, 53
        %v3029 = vpop.permute.xlu0 %3028
        %3030 = vrot.lane.b32.xlu0 %v2937, 53
        %v3031 = vpop.permute.xlu0 %3030
        %vm3032 = vcmask 433152
        %v3033 = vsel %vm3032, %v3029, %v3031
        %v3034 = vunpack.c.l.b16 %v3029
        %v3035 = vunpack.c.h.b16 %v3029
        %v3036 = vunpack.c.l.b16 0
        %v3037 = vunpack.c.h.b16 0
        %vm3038 = vcmp.ne.s32.totalorder %v3034, %v3036
        %vm3039 = vcmp.ne.s32.totalorder %v3035, %v3037
        %vm3040 = vmpackc.low %vm3039, %vm3038
        %v3041 = vunpack.c.l.b16 %v3033
        %v3042 = vunpack.c.h.b16 %v3033
        %v3043 = vunpack.c.l.b16 0
        %v3044 = vunpack.c.h.b16 0
        %vm3045 = vcmp.ne.s32.totalorder %v3041, %v3043
        %vm3046 = vcmp.ne.s32.totalorder %v3042, %v3044
        %vm3047 = vmpackc.low %vm3046, %vm3045
        %v3048 = vunpack.c.l.b16 %v3031
        %v3049 = vunpack.c.h.b16 %v3031
        %v3050 = vunpack.c.l.b16 0
        %v3051 = vunpack.c.h.b16 0
        %vm3052 = vcmp.ne.s32.totalorder %v3048, %v3050
        %vm3053 = vcmp.ne.s32.totalorder %v3049, %v3051
        %vm3054 = vmpackc.low %vm3053, %vm3052
        %v3055 = vsel %vm3040, %v1859, 0
        %v3056 = vsel %vm3047, %v1855, 0
        %v3057 = vsel %vm3054, %v1862, 0
        %3058 = vrot.lane.b32.xlu0 %v2936, 69
        %v3059 = vpop.permute.xlu0 %3058
        %3060 = vrot.lane.b32.xlu0 %v2937, 69
        %v3061 = vpop.permute.xlu0 %3060
        %vm3062 = vcmask 564224
        %v3063 = vsel %vm3062, %v3059, %v3061
        %v3064 = vunpack.c.l.b16 %v3059
        %v3065 = vunpack.c.h.b16 %v3059
        %v3066 = vunpack.c.l.b16 0
        %v3067 = vunpack.c.h.b16 0
        %vm3068 = vcmp.ne.s32.totalorder %v3064, %v3066
        %vm3069 = vcmp.ne.s32.totalorder %v3065, %v3067
        %vm3070 = vmpackc.low %vm3069, %vm3068
        %v3071 = vunpack.c.l.b16 %v3063
        %v3072 = vunpack.c.h.b16 %v3063
        %v3073 = vunpack.c.l.b16 0
        %v3074 = vunpack.c.h.b16 0
        %vm3075 = vcmp.ne.s32.totalorder %v3071, %v3073
        %vm3076 = vcmp.ne.s32.totalorder %v3072, %v3074
        %vm3077 = vmpackc.low %vm3076, %vm3075
        %v3078 = vunpack.c.l.b16 %v3061
        %v3079 = vunpack.c.h.b16 %v3061
        %v3080 = vunpack.c.l.b16 0
        %v3081 = vunpack.c.h.b16 0
        %vm3082 = vcmp.ne.s32.totalorder %v3078, %v3080
        %vm3083 = vcmp.ne.s32.totalorder %v3079, %v3081
        %vm3084 = vmpackc.low %vm3083, %vm3082
        %v3085 = vsel %vm3070, %v1859, 0
        %v3086 = vsel %vm3077, %v1855, 0
        %v3087 = vsel %vm3084, %v1862, 0
        %3088 = vrot.lane.b32.xlu0 %v2936, 85
        %v3089 = vpop.permute.xlu0 %3088
        %3090 = vrot.lane.b32.xlu0 %v2937, 85
        %v3091 = vpop.permute.xlu0 %3090
        %vm3092 = vcmask 695296
        %v3093 = vsel %vm3092, %v3089, %v3091
        %v3094 = vunpack.c.l.b16 %v3089
        %v3095 = vunpack.c.h.b16 %v3089
        %v3096 = vunpack.c.l.b16 0
        %v3097 = vunpack.c.h.b16 0
        %vm3098 = vcmp.ne.s32.totalorder %v3094, %v3096
        %vm3099 = vcmp.ne.s32.totalorder %v3095, %v3097
        %vm3100 = vmpackc.low %vm3099, %vm3098
        %v3101 = vunpack.c.l.b16 %v3093
        %v3102 = vunpack.c.h.b16 %v3093
        %v3103 = vunpack.c.l.b16 0
        %v3104 = vunpack.c.h.b16 0
        %vm3105 = vcmp.ne.s32.totalorder %v3101, %v3103
        %vm3106 = vcmp.ne.s32.totalorder %v3102, %v3104
        %vm3107 = vmpackc.low %vm3106, %vm3105
        %v3108 = vunpack.c.l.b16 %v3091
        %v3109 = vunpack.c.h.b16 %v3091
        %v3110 = vunpack.c.l.b16 0
        %v3111 = vunpack.c.h.b16 0
        %vm3112 = vcmp.ne.s32.totalorder %v3108, %v3110
        %vm3113 = vcmp.ne.s32.totalorder %v3109, %v3111
        %vm3114 = vmpackc.low %vm3113, %vm3112
        %v3115 = vsel %vm3100, %v1859, 0
        %v3116 = vsel %vm3107, %v1855, 0
        %v3117 = vsel %vm3114, %v1862, 0
        %3118 = vrot.lane.b32.xlu0 %v2936, 101
        %v3119 = vpop.permute.xlu0 %3118
        %3120 = vrot.lane.b32.xlu0 %v2937, 101
        %v3121 = vpop.permute.xlu0 %3120
        %vm3122 = vcmask 826368
        %v3123 = vsel %vm3122, %v3119, %v3121
        %v3124 = vunpack.c.l.b16 %v3119
        %v3125 = vunpack.c.h.b16 %v3119
        %v3126 = vunpack.c.l.b16 0
        %v3127 = vunpack.c.h.b16 0
        %vm3128 = vcmp.ne.s32.totalorder %v3124, %v3126
        %vm3129 = vcmp.ne.s32.totalorder %v3125, %v3127
        %vm3130 = vmpackc.low %vm3129, %vm3128
        %v3131 = vunpack.c.l.b16 %v3123
        %v3132 = vunpack.c.h.b16 %v3123
        %v3133 = vunpack.c.l.b16 0
        %v3134 = vunpack.c.h.b16 0
        %vm3135 = vcmp.ne.s32.totalorder %v3131, %v3133
        %vm3136 = vcmp.ne.s32.totalorder %v3132, %v3134
        %vm3137 = vmpackc.low %vm3136, %vm3135
        %v3138 = vunpack.c.l.b16 %v3121
        %v3139 = vunpack.c.h.b16 %v3121
        %v3140 = vunpack.c.l.b16 0
        %v3141 = vunpack.c.h.b16 0
        %vm3142 = vcmp.ne.s32.totalorder %v3138, %v3140
        %vm3143 = vcmp.ne.s32.totalorder %v3139, %v3141
        %vm3144 = vmpackc.low %vm3143, %vm3142
        %v3145 = vsel %vm3130, %v1859, 0
        %v3146 = vsel %vm3137, %v1855, 0
        %v3147 = vsel %vm3144, %v1862, 0
        %v3148 = vadd.s32 %v505, 3
        %v3149 = vadd.s32 %v506, 3
        %vm3150 = vcmp.ge.s32.totalorder %v3148, 0
        %vm3151 = vcmp.ge.s32.totalorder %v3149, 0
        %vm3152 = vcmp.lt.s32.totalorder %v3148, 16
        %vm3153 = vcmp.lt.s32.totalorder %v3149, 16
        %vm3154 = vmand %vm3150, %vm3152
        %vm3155 = vmand %vm3151, %vm3153
        %v3156 = vsel %vm3154, 1, 0
        %v3157 = vsel %vm3155, 1, 0
        %vm3158 = vcmp.eq.s32.totalorder %v3156, 1
        %vm3159 = vcmp.eq.s32.totalorder %v3157, 1
        %vm3160 = vmpackc.low %vm3159, %vm3158
        %v3161 = vsel %vm3160, 65537, 0
        %v3162 = vperm.slane %v3161, 0
        %v3163 = vperm.slane %v3161, 4
        %3164 = vrot.lane.b32.xlu0 %v3162, 6
        %v3165 = vpop.permute.xlu0 %3164
        %3166 = vrot.lane.b32.xlu0 %v3163, 6
        %v3167 = vpop.permute.xlu0 %3166
        %vm3168 = vcmask 48128
        %v3169 = vsel %vm3168, %v3165, %v3167
        %v3170 = vunpack.c.l.b16 %v3165
        %v3171 = vunpack.c.h.b16 %v3165
        %v3172 = vunpack.c.l.b16 0
        %v3173 = vunpack.c.h.b16 0
        %vm3174 = vcmp.ne.s32.totalorder %v3170, %v3172
        %vm3175 = vcmp.ne.s32.totalorder %v3171, %v3173
        %vm3176 = vmpackc.low %vm3175, %vm3174
        %v3177 = vunpack.c.l.b16 %v3169
        %v3178 = vunpack.c.h.b16 %v3169
        %v3179 = vunpack.c.l.b16 0
        %v3180 = vunpack.c.h.b16 0
        %vm3181 = vcmp.ne.s32.totalorder %v3177, %v3179
        %vm3182 = vcmp.ne.s32.totalorder %v3178, %v3180
        %vm3183 = vmpackc.low %vm3182, %vm3181
        %v3184 = vunpack.c.l.b16 %v3167
        %v3185 = vunpack.c.h.b16 %v3167
        %v3186 = vunpack.c.l.b16 0
        %v3187 = vunpack.c.h.b16 0
        %vm3188 = vcmp.ne.s32.totalorder %v3184, %v3186
        %vm3189 = vcmp.ne.s32.totalorder %v3185, %v3187
        %vm3190 = vmpackc.low %vm3189, %vm3188
        %v3191 = vsel %vm3176, %v1859, 0
        %v3192 = vsel %vm3183, %v1855, 0
        %v3193 = vsel %vm3190, %v1862, 0
        %3194 = vrot.lane.b32.xlu0 %v3162, 22
        %v3195 = vpop.permute.xlu0 %3194
        %3196 = vrot.lane.b32.xlu0 %v3163, 22
        %v3197 = vpop.permute.xlu0 %3196
        %vm3198 = vcmask 179200
        %v3199 = vsel %vm3198, %v3195, %v3197
        %v3200 = vunpack.c.l.b16 %v3195
        %v3201 = vunpack.c.h.b16 %v3195
        %v3202 = vunpack.c.l.b16 0
        %v3203 = vunpack.c.h.b16 0
        %vm3204 = vcmp.ne.s32.totalorder %v3200, %v3202
        %vm3205 = vcmp.ne.s32.totalorder %v3201, %v3203
        %vm3206 = vmpackc.low %vm3205, %vm3204
        %v3207 = vunpack.c.l.b16 %v3199
        %v3208 = vunpack.c.h.b16 %v3199
        %v3209 = vunpack.c.l.b16 0
        %v3210 = vunpack.c.h.b16 0
        %vm3211 = vcmp.ne.s32.totalorder %v3207, %v3209
        %vm3212 = vcmp.ne.s32.totalorder %v3208, %v3210
        %vm3213 = vmpackc.low %vm3212, %vm3211
        %v3214 = vunpack.c.l.b16 %v3197
        %v3215 = vunpack.c.h.b16 %v3197
        %v3216 = vunpack.c.l.b16 0
        %v3217 = vunpack.c.h.b16 0
        %vm3218 = vcmp.ne.s32.totalorder %v3214, %v3216
        %vm3219 = vcmp.ne.s32.totalorder %v3215, %v3217
        %vm3220 = vmpackc.low %vm3219, %vm3218
        %v3221 = vsel %vm3206, %v1859, 0
        %v3222 = vsel %vm3213, %v1855, 0
        %v3223 = vsel %vm3220, %v1862, 0
        %3224 = vrot.lane.b32.xlu0 %v3162, 38
        %v3225 = vpop.permute.xlu0 %3224
        %3226 = vrot.lane.b32.xlu0 %v3163, 38
        %v3227 = vpop.permute.xlu0 %3226
        %vm3228 = vcmask 310272
        %v3229 = vsel %vm3228, %v3225, %v3227
        %v3230 = vunpack.c.l.b16 %v3225
        %v3231 = vunpack.c.h.b16 %v3225
        %v3232 = vunpack.c.l.b16 0
        %v3233 = vunpack.c.h.b16 0
        %vm3234 = vcmp.ne.s32.totalorder %v3230, %v3232
        %vm3235 = vcmp.ne.s32.totalorder %v3231, %v3233
        %vm3236 = vmpackc.low %vm3235, %vm3234
        %v3237 = vunpack.c.l.b16 %v3229
        %v3238 = vunpack.c.h.b16 %v3229
        %v3239 = vunpack.c.l.b16 0
        %v3240 = vunpack.c.h.b16 0
        %vm3241 = vcmp.ne.s32.totalorder %v3237, %v3239
        %vm3242 = vcmp.ne.s32.totalorder %v3238, %v3240
        %vm3243 = vmpackc.low %vm3242, %vm3241
        %v3244 = vunpack.c.l.b16 %v3227
        %v3245 = vunpack.c.h.b16 %v3227
        %v3246 = vunpack.c.l.b16 0
        %v3247 = vunpack.c.h.b16 0
        %vm3248 = vcmp.ne.s32.totalorder %v3244, %v3246
        %vm3249 = vcmp.ne.s32.totalorder %v3245, %v3247
        %vm3250 = vmpackc.low %vm3249, %vm3248
        %v3251 = vsel %vm3236, %v1859, 0
        %v3252 = vsel %vm3243, %v1855, 0
        %v3253 = vsel %vm3250, %v1862, 0
        %3254 = vrot.lane.b32.xlu0 %v3162, 54
        %v3255 = vpop.permute.xlu0 %3254
        %3256 = vrot.lane.b32.xlu0 %v3163, 54
        %v3257 = vpop.permute.xlu0 %3256
        %vm3258 = vcmask 441344
        %v3259 = vsel %vm3258, %v3255, %v3257
        %v3260 = vunpack.c.l.b16 %v3255
        %v3261 = vunpack.c.h.b16 %v3255
        %v3262 = vunpack.c.l.b16 0
        %v3263 = vunpack.c.h.b16 0
        %vm3264 = vcmp.ne.s32.totalorder %v3260, %v3262
        %vm3265 = vcmp.ne.s32.totalorder %v3261, %v3263
        %vm3266 = vmpackc.low %vm3265, %vm3264
        %v3267 = vunpack.c.l.b16 %v3259
        %v3268 = vunpack.c.h.b16 %v3259
        %v3269 = vunpack.c.l.b16 0
        %v3270 = vunpack.c.h.b16 0
        %vm3271 = vcmp.ne.s32.totalorder %v3267, %v3269
        %vm3272 = vcmp.ne.s32.totalorder %v3268, %v3270
        %vm3273 = vmpackc.low %vm3272, %vm3271
        %v3274 = vunpack.c.l.b16 %v3257
        %v3275 = vunpack.c.h.b16 %v3257
        %v3276 = vunpack.c.l.b16 0
        %v3277 = vunpack.c.h.b16 0
        %vm3278 = vcmp.ne.s32.totalorder %v3274, %v3276
        %vm3279 = vcmp.ne.s32.totalorder %v3275, %v3277
        %vm3280 = vmpackc.low %vm3279, %vm3278
        %v3281 = vsel %vm3266, %v1859, 0
        %v3282 = vsel %vm3273, %v1855, 0
        %v3283 = vsel %vm3280, %v1862, 0
        %3284 = vrot.lane.b32.xlu0 %v3162, 70
        %v3285 = vpop.permute.xlu0 %3284
        %3286 = vrot.lane.b32.xlu0 %v3163, 70
        %v3287 = vpop.permute.xlu0 %3286
        %vm3288 = vcmask 572416
        %v3289 = vsel %vm3288, %v3285, %v3287
        %v3290 = vunpack.c.l.b16 %v3285
        %v3291 = vunpack.c.h.b16 %v3285
        %v3292 = vunpack.c.l.b16 0
        %v3293 = vunpack.c.h.b16 0
        %vm3294 = vcmp.ne.s32.totalorder %v3290, %v3292
        %vm3295 = vcmp.ne.s32.totalorder %v3291, %v3293
        %vm3296 = vmpackc.low %vm3295, %vm3294
        %v3297 = vunpack.c.l.b16 %v3289
        %v3298 = vunpack.c.h.b16 %v3289
        %v3299 = vunpack.c.l.b16 0
        %v3300 = vunpack.c.h.b16 0
        %vm3301 = vcmp.ne.s32.totalorder %v3297, %v3299
        %vm3302 = vcmp.ne.s32.totalorder %v3298, %v3300
        %vm3303 = vmpackc.low %vm3302, %vm3301
        %v3304 = vunpack.c.l.b16 %v3287
        %v3305 = vunpack.c.h.b16 %v3287
        %v3306 = vunpack.c.l.b16 0
        %v3307 = vunpack.c.h.b16 0
        %vm3308 = vcmp.ne.s32.totalorder %v3304, %v3306
        %vm3309 = vcmp.ne.s32.totalorder %v3305, %v3307
        %vm3310 = vmpackc.low %vm3309, %vm3308
        %v3311 = vsel %vm3296, %v1859, 0
        %v3312 = vsel %vm3303, %v1855, 0
        %v3313 = vsel %vm3310, %v1862, 0
        %3314 = vrot.lane.b32.xlu0 %v3162, 86
        %v3315 = vpop.permute.xlu0 %3314
        %3316 = vrot.lane.b32.xlu0 %v3163, 86
        %v3317 = vpop.permute.xlu0 %3316
        %vm3318 = vcmask 703488
        %v3319 = vsel %vm3318, %v3315, %v3317
        %v3320 = vunpack.c.l.b16 %v3315
        %v3321 = vunpack.c.h.b16 %v3315
        %v3322 = vunpack.c.l.b16 0
        %v3323 = vunpack.c.h.b16 0
        %vm3324 = vcmp.ne.s32.totalorder %v3320, %v3322
        %vm3325 = vcmp.ne.s32.totalorder %v3321, %v3323
        %vm3326 = vmpackc.low %vm3325, %vm3324
        %v3327 = vunpack.c.l.b16 %v3319
        %v3328 = vunpack.c.h.b16 %v3319
        %v3329 = vunpack.c.l.b16 0
        %v3330 = vunpack.c.h.b16 0
        %vm3331 = vcmp.ne.s32.totalorder %v3327, %v3329
        %vm3332 = vcmp.ne.s32.totalorder %v3328, %v3330
        %vm3333 = vmpackc.low %vm3332, %vm3331
        %v3334 = vunpack.c.l.b16 %v3317
        %v3335 = vunpack.c.h.b16 %v3317
        %v3336 = vunpack.c.l.b16 0
        %v3337 = vunpack.c.h.b16 0
        %vm3338 = vcmp.ne.s32.totalorder %v3334, %v3336
        %vm3339 = vcmp.ne.s32.totalorder %v3335, %v3337
        %vm3340 = vmpackc.low %vm3339, %vm3338
        %v3341 = vsel %vm3326, %v1859, 0
        %v3342 = vsel %vm3333, %v1855, 0
        %v3343 = vsel %vm3340, %v1862, 0
        %3344 = vrot.lane.b32.xlu0 %v3162, 102
        %v3345 = vpop.permute.xlu0 %3344
        %3346 = vrot.lane.b32.xlu0 %v3163, 102
        %v3347 = vpop.permute.xlu0 %3346
        %vm3348 = vcmask 834560
        %v3349 = vsel %vm3348, %v3345, %v3347
        %v3350 = vunpack.c.l.b16 %v3345
        %v3351 = vunpack.c.h.b16 %v3345
        %v3352 = vunpack.c.l.b16 0
        %v3353 = vunpack.c.h.b16 0
        %vm3354 = vcmp.ne.s32.totalorder %v3350, %v3352
        %vm3355 = vcmp.ne.s32.totalorder %v3351, %v3353
        %vm3356 = vmpackc.low %vm3355, %vm3354
        %v3357 = vunpack.c.l.b16 %v3349
        %v3358 = vunpack.c.h.b16 %v3349
        %v3359 = vunpack.c.l.b16 0
        %v3360 = vunpack.c.h.b16 0
        %vm3361 = vcmp.ne.s32.totalorder %v3357, %v3359
        %vm3362 = vcmp.ne.s32.totalorder %v3358, %v3360
        %vm3363 = vmpackc.low %vm3362, %vm3361
        %v3364 = vunpack.c.l.b16 %v3347
        %v3365 = vunpack.c.h.b16 %v3347
        %v3366 = vunpack.c.l.b16 0
        %v3367 = vunpack.c.h.b16 0
        %vm3368 = vcmp.ne.s32.totalorder %v3364, %v3366
        %vm3369 = vcmp.ne.s32.totalorder %v3365, %v3367
        %vm3370 = vmpackc.low %vm3369, %vm3368
        %v3371 = vsel %vm3356, %v1859, 0
        %v3372 = vsel %vm3363, %v1855, 0
        %v3373 = vsel %vm3370, %v1862, 0
        %v3377 = vrot.slane %v1922, 7
        %v3378 = vrot.slane %v1923, 7
        %v3379 = vrot.slane %v1924, 7
        %3380 = vrot.lane.b32.xlu0 %v3377, 112
        %v3381 = vpop.permute.xlu0 %3380
        %3382 = vrot.lane.b32.xlu0 %v3378, 112
        %v3383 = vpop.permute.xlu0 %3382
        %3384 = vrot.lane.b32.xlu0 %v3379, 112
        %v3385 = vpop.permute.xlu0 %3384
        %v3386 = vsel %vm953, %v3381, %v3383
        %v3387 = vsel %vm953, %v3383, %v3385
        %v3391 = vrot.slane %v1951, 6
        %v3392 = vrot.slane %v1952, 6
        %v3393 = vrot.slane %v1953, 6
        %3394 = vrot.lane.b32.xlu0 %v3391, 96
        %v3395 = vpop.permute.xlu0 %3394
        %3396 = vrot.lane.b32.xlu0 %v3392, 96
        %v3397 = vpop.permute.xlu0 %3396
        %3398 = vrot.lane.b32.xlu0 %v3393, 96
        %v3399 = vpop.permute.xlu0 %3398
        %v3400 = vsel %vm995, %v3395, %v3397
        %v3401 = vsel %vm995, %v3397, %v3399
        %v3405 = vrot.slane %v1981, 5
        %v3406 = vrot.slane %v1982, 5
        %v3407 = vrot.slane %v1983, 5
        %3408 = vrot.lane.b32.xlu0 %v3405, 80
        %v3409 = vpop.permute.xlu0 %3408
        %3410 = vrot.lane.b32.xlu0 %v3406, 80
        %v3411 = vpop.permute.xlu0 %3410
        %3412 = vrot.lane.b32.xlu0 %v3407, 80
        %v3413 = vpop.permute.xlu0 %3412
        %v3414 = vsel %vm2018, %v3409, %v3411
        %v3415 = vsel %vm2018, %v3411, %v3413
        %v3419 = vrot.slane %v2011, 4
        %v3420 = vrot.slane %v2012, 4
        %v3421 = vrot.slane %v2013, 4
        %3422 = vrot.lane.b32.xlu0 %v3419, 64
        %v3423 = vpop.permute.xlu0 %3422
        %3424 = vrot.lane.b32.xlu0 %v3420, 64
        %v3425 = vpop.permute.xlu0 %3424
        %3426 = vrot.lane.b32.xlu0 %v3421, 64
        %v3427 = vpop.permute.xlu0 %3426
        %v3428 = vsel %vm1988, %v3423, %v3425
        %v3429 = vsel %vm1988, %v3425, %v3427
        %v3433 = vrot.slane %v2041, 3
        %v3434 = vrot.slane %v2042, 3
        %v3435 = vrot.slane %v2043, 3
        %3436 = vrot.lane.b32.xlu0 %v3433, 48
        %v3437 = vpop.permute.xlu0 %3436
        %3438 = vrot.lane.b32.xlu0 %v3434, 48
        %v3439 = vpop.permute.xlu0 %3438
        %3440 = vrot.lane.b32.xlu0 %v3435, 48
        %v3441 = vpop.permute.xlu0 %3440
        %v3442 = vsel %vm1958, %v3437, %v3439
        %v3443 = vsel %vm1958, %v3439, %v3441
        %v3447 = vrot.slane %v2070, 2
        %v3448 = vrot.slane %v2071, 2
        %v3449 = vrot.slane %v2072, 2
        %3450 = vrot.lane.b32.xlu0 %v3447, 32
        %v3451 = vpop.permute.xlu0 %3450
        %3452 = vrot.lane.b32.xlu0 %v3448, 32
        %v3453 = vpop.permute.xlu0 %3452
        %3454 = vrot.lane.b32.xlu0 %v3449, 32
        %v3455 = vpop.permute.xlu0 %3454
        %v3456 = vsel %vm830, %v3451, %v3453
        %v3457 = vsel %vm830, %v3453, %v3455
        %v3461 = vrot.slane %v2115, 1
        %v3462 = vrot.slane %v2116, 1
        %v3463 = vrot.slane %v2117, 1
        %3464 = vrot.lane.b32.xlu0 %v3461, 127
        %v3465 = vpop.permute.xlu0 %3464
        %3466 = vrot.lane.b32.xlu0 %v3462, 127
        %v3467 = vpop.permute.xlu0 %3466
        %3468 = vrot.lane.b32.xlu0 %v3463, 127
        %v3469 = vpop.permute.xlu0 %3468
        %v3470 = vsel %vm925, %v3465, %v3467
        %v3471 = vsel %vm925, %v3467, %v3469
        %3475 = vrot.lane.b32.xlu0 %v2144, 111
        %v3476 = vpop.permute.xlu0 %3475
        %3477 = vrot.lane.b32.xlu0 %v2145, 111
        %v3478 = vpop.permute.xlu0 %3477
        %3479 = vrot.lane.b32.xlu0 %v2146, 111
        %v3480 = vpop.permute.xlu0 %3479
        %v3481 = vsel %vm967, %v3476, %v3478
        %v3482 = vsel %vm967, %v3478, %v3480
        %v3486 = vrot.slane %v2173, 7
        %v3487 = vrot.slane %v2174, 7
        %v3488 = vrot.slane %v2175, 7
        %3489 = vrot.lane.b32.xlu0 %v3486, 95
        %v3490 = vpop.permute.xlu0 %3489
        %3491 = vrot.lane.b32.xlu0 %v3487, 95
        %v3492 = vpop.permute.xlu0 %3491
        %3493 = vrot.lane.b32.xlu0 %v3488, 95
        %v3494 = vpop.permute.xlu0 %3493
        %v3495 = vsel %vm1009, %v3490, %v3492
        %v3496 = vsel %vm1009, %v3492, %v3494
        %v3500 = vrot.slane %v2203, 6
        %v3501 = vrot.slane %v2204, 6
        %v3502 = vrot.slane %v2205, 6
        %3503 = vrot.lane.b32.xlu0 %v3500, 79
        %v3504 = vpop.permute.xlu0 %3503
        %3505 = vrot.lane.b32.xlu0 %v3501, 79
        %v3506 = vpop.permute.xlu0 %3505
        %3507 = vrot.lane.b32.xlu0 %v3502, 79
        %v3508 = vpop.permute.xlu0 %3507
        %vm3509 = vcmask 646144
        %v3510 = vsel %vm3509, %v3504, %v3506
        %v3511 = vsel %vm3509, %v3506, %v3508
        %v3515 = vrot.slane %v2233, 5
        %v3516 = vrot.slane %v2234, 5
        %v3517 = vrot.slane %v2235, 5
        %3518 = vrot.lane.b32.xlu0 %v3515, 63
        %v3519 = vpop.permute.xlu0 %3518
        %3520 = vrot.lane.b32.xlu0 %v3516, 63
        %v3521 = vpop.permute.xlu0 %3520
        %3522 = vrot.lane.b32.xlu0 %v3517, 63
        %v3523 = vpop.permute.xlu0 %3522
        %vm3524 = vcmask 515072
        %v3525 = vsel %vm3524, %v3519, %v3521
        %v3526 = vsel %vm3524, %v3521, %v3523
        %v3530 = vrot.slane %v2263, 4
        %v3531 = vrot.slane %v2264, 4
        %v3532 = vrot.slane %v2265, 4
        %3533 = vrot.lane.b32.xlu0 %v3530, 47
        %v3534 = vpop.permute.xlu0 %3533
        %3535 = vrot.lane.b32.xlu0 %v3531, 47
        %v3536 = vpop.permute.xlu0 %3535
        %3537 = vrot.lane.b32.xlu0 %v3532, 47
        %v3538 = vpop.permute.xlu0 %3537
        %vm3539 = vcmask 384000
        %v3540 = vsel %vm3539, %v3534, %v3536
        %v3541 = vsel %vm3539, %v3536, %v3538
        %v3545 = vrot.slane %v2293, 3
        %v3546 = vrot.slane %v2294, 3
        %v3547 = vrot.slane %v2295, 3
        %3548 = vrot.lane.b32.xlu0 %v3545, 31
        %v3549 = vpop.permute.xlu0 %3548
        %3550 = vrot.lane.b32.xlu0 %v3546, 31
        %v3551 = vpop.permute.xlu0 %3550
        %3552 = vrot.lane.b32.xlu0 %v3547, 31
        %v3553 = vpop.permute.xlu0 %3552
        %vm3554 = vcmask 252928
        %v3555 = vsel %vm3554, %v3549, %v3551
        %v3556 = vsel %vm3554, %v3551, %v3553
        %v3560 = vrot.slane %v2322, 2
        %v3561 = vrot.slane %v2323, 2
        %v3562 = vrot.slane %v2324, 2
        %3563 = vrot.lane.b32.xlu0 %v3560, 126
        %v3564 = vpop.permute.xlu0 %3563
        %3565 = vrot.lane.b32.xlu0 %v3561, 126
        %v3566 = vpop.permute.xlu0 %3565
        %3567 = vrot.lane.b32.xlu0 %v3562, 126
        %v3568 = vpop.permute.xlu0 %3567
        %v3569 = vsel %vm939, %v3564, %v3566
        %v3570 = vsel %vm939, %v3566, %v3568
        %v3574 = vrot.slane %v2351, 1
        %v3575 = vrot.slane %v2352, 1
        %v3576 = vrot.slane %v2353, 1
        %3577 = vrot.lane.b32.xlu0 %v3574, 110
        %v3578 = vpop.permute.xlu0 %3577
        %3579 = vrot.lane.b32.xlu0 %v3575, 110
        %v3580 = vpop.permute.xlu0 %3579
        %3581 = vrot.lane.b32.xlu0 %v3576, 110
        %v3582 = vpop.permute.xlu0 %3581
        %v3583 = vsel %vm981, %v3578, %v3580
        %v3584 = vsel %vm981, %v3580, %v3582
        %v3587 = vsel %vm1841, %v1894, %v3386
        %v3590 = vsel %vm1841, %v1895, %v3387
        %v3592 = vsel %vm1499, %v3587, %v3400
        %v3594 = vsel %vm1499, %v3590, %v3401
        %vm3595 = vcmask 1042432
        %v3597 = vsel %vm3595, %v3592, %v3414
        %v3599 = vsel %vm3595, %v3594, %v3415
        %vm3600 = vcmask 1043456
        %v3602 = vsel %vm3600, %v3597, %v3428
        %v3604 = vsel %vm3600, %v3599, %v3429
        %vm3605 = vcmask 1044480
        %v3607 = vsel %vm3605, %v3602, %v3442
        %v3609 = vsel %vm3605, %v3604, %v3443
        %vm3610 = vcmask 1045504
        %v3612 = vsel %vm3610, %v3607, %v3456
        %v3614 = vsel %vm3610, %v3609, %v3457
        %vm3615 = vcmask 1046528
        %v3617 = vsel %vm3615, %v3612, %v3470
        %v3620 = vsel %vm3615, %v3614, %v3471
        %v3624 = vsel %vm1841, %v3481, %v3495
        %v3627 = vsel %vm1841, %v3482, %v3496
        %v3629 = vsel %vm1499, %v3624, %v3510
        %v3631 = vsel %vm1499, %v3627, %v3511
        %v3633 = vsel %vm3595, %v3629, %v3525
        %v3635 = vsel %vm3595, %v3631, %v3526
        %v3637 = vsel %vm3600, %v3633, %v3540
        %v3639 = vsel %vm3600, %v3635, %v3541
        %v3641 = vsel %vm3605, %v3637, %v3555
        %v3643 = vsel %vm3605, %v3639, %v3556
        %v3645 = vsel %vm3610, %v3641, %v3569
        %v3647 = vsel %vm3610, %v3643, %v3570
        %v3649 = vsel %vm3615, %v3645, %v3583
        %v3652 = vsel %vm3615, %v3647, %v3584
        %v3657 = vrot.slane %v2410, 7
        %v3658 = vrot.slane %v2411, 7
        %v3659 = vrot.slane %v2412, 7
        %3660 = vrot.lane.b32.xlu0 %v3657, 112
        %v3661 = vpop.permute.xlu0 %3660
        %3662 = vrot.lane.b32.xlu0 %v3658, 112
        %v3663 = vpop.permute.xlu0 %3662
        %3664 = vrot.lane.b32.xlu0 %v3659, 112
        %v3665 = vpop.permute.xlu0 %3664
        %v3666 = vsel %vm953, %v3661, %v3663
        %v3667 = vsel %vm953, %v3663, %v3665
        %v3671 = vrot.slane %v2440, 6
        %v3672 = vrot.slane %v2441, 6
        %v3673 = vrot.slane %v2442, 6
        %3674 = vrot.lane.b32.xlu0 %v3671, 96
        %v3675 = vpop.permute.xlu0 %3674
        %3676 = vrot.lane.b32.xlu0 %v3672, 96
        %v3677 = vpop.permute.xlu0 %3676
        %3678 = vrot.lane.b32.xlu0 %v3673, 96
        %v3679 = vpop.permute.xlu0 %3678
        %v3680 = vsel %vm995, %v3675, %v3677
        %v3681 = vsel %vm995, %v3677, %v3679
        %v3685 = vrot.slane %v2470, 5
        %v3686 = vrot.slane %v2471, 5
        %v3687 = vrot.slane %v2472, 5
        %3688 = vrot.lane.b32.xlu0 %v3685, 80
        %v3689 = vpop.permute.xlu0 %3688
        %3690 = vrot.lane.b32.xlu0 %v3686, 80
        %v3691 = vpop.permute.xlu0 %3690
        %3692 = vrot.lane.b32.xlu0 %v3687, 80
        %v3693 = vpop.permute.xlu0 %3692
        %v3694 = vsel %vm2018, %v3689, %v3691
        %v3695 = vsel %vm2018, %v3691, %v3693
        %v3699 = vrot.slane %v2500, 4
        %v3700 = vrot.slane %v2501, 4
        %v3701 = vrot.slane %v2502, 4
        %3702 = vrot.lane.b32.xlu0 %v3699, 64
        %v3703 = vpop.permute.xlu0 %3702
        %3704 = vrot.lane.b32.xlu0 %v3700, 64
        %v3705 = vpop.permute.xlu0 %3704
        %3706 = vrot.lane.b32.xlu0 %v3701, 64
        %v3707 = vpop.permute.xlu0 %3706
        %v3708 = vsel %vm1988, %v3703, %v3705
        %v3709 = vsel %vm1988, %v3705, %v3707
        %v3713 = vrot.slane %v2530, 3
        %v3714 = vrot.slane %v2531, 3
        %v3715 = vrot.slane %v2532, 3
        %3716 = vrot.lane.b32.xlu0 %v3713, 31
        %v3717 = vpop.permute.xlu0 %3716
        %3718 = vrot.lane.b32.xlu0 %v3714, 31
        %v3719 = vpop.permute.xlu0 %3718
        %3720 = vrot.lane.b32.xlu0 %v3715, 31
        %v3721 = vpop.permute.xlu0 %3720
        %v3722 = vsel %vm3554, %v3717, %v3719
        %v3723 = vsel %vm3554, %v3719, %v3721
        %v3727 = vrot.slane %v2560, 2
        %v3728 = vrot.slane %v2561, 2
        %v3729 = vrot.slane %v2562, 2
        %3730 = vrot.lane.b32.xlu0 %v3727, 15
        %v3731 = vpop.permute.xlu0 %3730
        %3732 = vrot.lane.b32.xlu0 %v3728, 15
        %v3733 = vpop.permute.xlu0 %3732
        %3734 = vrot.lane.b32.xlu0 %v3729, 15
        %v3735 = vpop.permute.xlu0 %3734
        %vm3736 = vcmask 121856
        %v3737 = vsel %vm3736, %v3731, %v3733
        %v3738 = vsel %vm3736, %v3733, %v3735
        %v3742 = vrot.slane %v2590, 1
        %v3743 = vrot.slane %v2591, 1
        %v3744 = vrot.slane %v2592, 1
        %3745 = vrot.lane.b32.xlu0 %v3742, 127
        %v3746 = vpop.permute.xlu0 %3745
        %3747 = vrot.lane.b32.xlu0 %v3743, 127
        %v3748 = vpop.permute.xlu0 %3747
        %3749 = vrot.lane.b32.xlu0 %v3744, 127
        %v3750 = vpop.permute.xlu0 %3749
        %v3751 = vsel %vm925, %v3746, %v3748
        %v3752 = vsel %vm925, %v3748, %v3750
        %3756 = vrot.lane.b32.xlu0 %v2619, 111
        %v3757 = vpop.permute.xlu0 %3756
        %3758 = vrot.lane.b32.xlu0 %v2620, 111
        %v3759 = vpop.permute.xlu0 %3758
        %3760 = vrot.lane.b32.xlu0 %v2621, 111
        %v3761 = vpop.permute.xlu0 %3760
        %v3762 = vsel %vm967, %v3757, %v3759
        %v3763 = vsel %vm967, %v3759, %v3761
        %v3767 = vrot.slane %v2649, 7
        %v3768 = vrot.slane %v2650, 7
        %v3769 = vrot.slane %v2651, 7
        %3770 = vrot.lane.b32.xlu0 %v3767, 95
        %v3771 = vpop.permute.xlu0 %3770
        %3772 = vrot.lane.b32.xlu0 %v3768, 95
        %v3773 = vpop.permute.xlu0 %3772
        %3774 = vrot.lane.b32.xlu0 %v3769, 95
        %v3775 = vpop.permute.xlu0 %3774
        %v3776 = vsel %vm1009, %v3771, %v3773
        %v3777 = vsel %vm1009, %v3773, %v3775
        %v3781 = vrot.slane %v2679, 6
        %v3782 = vrot.slane %v2680, 6
        %v3783 = vrot.slane %v2681, 6
        %3784 = vrot.lane.b32.xlu0 %v3781, 79
        %v3785 = vpop.permute.xlu0 %3784
        %3786 = vrot.lane.b32.xlu0 %v3782, 79
        %v3787 = vpop.permute.xlu0 %3786
        %3788 = vrot.lane.b32.xlu0 %v3783, 79
        %v3789 = vpop.permute.xlu0 %3788
        %v3790 = vsel %vm3509, %v3785, %v3787
        %v3791 = vsel %vm3509, %v3787, %v3789
        %v3795 = vrot.slane %v2709, 5
        %v3796 = vrot.slane %v2710, 5
        %v3797 = vrot.slane %v2711, 5
        %3798 = vrot.lane.b32.xlu0 %v3795, 63
        %v3799 = vpop.permute.xlu0 %3798
        %3800 = vrot.lane.b32.xlu0 %v3796, 63
        %v3801 = vpop.permute.xlu0 %3800
        %3802 = vrot.lane.b32.xlu0 %v3797, 63
        %v3803 = vpop.permute.xlu0 %3802
        %v3804 = vsel %vm3524, %v3799, %v3801
        %v3805 = vsel %vm3524, %v3801, %v3803
        %v3809 = vrot.slane %v2739, 4
        %v3810 = vrot.slane %v2740, 4
        %v3811 = vrot.slane %v2741, 4
        %3812 = vrot.lane.b32.xlu0 %v3809, 30
        %v3813 = vpop.permute.xlu0 %3812
        %3814 = vrot.lane.b32.xlu0 %v3810, 30
        %v3815 = vpop.permute.xlu0 %3814
        %3816 = vrot.lane.b32.xlu0 %v3811, 30
        %v3817 = vpop.permute.xlu0 %3816
        %vm3818 = vcmask 244736
        %v3819 = vsel %vm3818, %v3813, %v3815
        %v3820 = vsel %vm3818, %v3815, %v3817
        %v3824 = vrot.slane %v2769, 3
        %v3825 = vrot.slane %v2770, 3
        %v3826 = vrot.slane %v2771, 3
        %3827 = vrot.lane.b32.xlu0 %v3824, 14
        %v3828 = vpop.permute.xlu0 %3827
        %3829 = vrot.lane.b32.xlu0 %v3825, 14
        %v3830 = vpop.permute.xlu0 %3829
        %3831 = vrot.lane.b32.xlu0 %v3826, 14
        %v3832 = vpop.permute.xlu0 %3831
        %vm3833 = vcmask 113664
        %v3834 = vsel %vm3833, %v3828, %v3830
        %v3835 = vsel %vm3833, %v3830, %v3832
        %v3839 = vrot.slane %v2799, 2
        %v3840 = vrot.slane %v2800, 2
        %v3841 = vrot.slane %v2801, 2
        %3842 = vrot.lane.b32.xlu0 %v3839, 126
        %v3843 = vpop.permute.xlu0 %3842
        %3844 = vrot.lane.b32.xlu0 %v3840, 126
        %v3845 = vpop.permute.xlu0 %3844
        %3846 = vrot.lane.b32.xlu0 %v3841, 126
        %v3847 = vpop.permute.xlu0 %3846
        %v3848 = vsel %vm939, %v3843, %v3845
        %v3849 = vsel %vm939, %v3845, %v3847
        %v3853 = vrot.slane %v2829, 1
        %v3854 = vrot.slane %v2830, 1
        %v3855 = vrot.slane %v2831, 1
        %3856 = vrot.lane.b32.xlu0 %v3853, 110
        %v3857 = vpop.permute.xlu0 %3856
        %3858 = vrot.lane.b32.xlu0 %v3854, 110
        %v3859 = vpop.permute.xlu0 %3858
        %3860 = vrot.lane.b32.xlu0 %v3855, 110
        %v3861 = vpop.permute.xlu0 %3860
        %v3862 = vsel %vm981, %v3857, %v3859
        %v3863 = vsel %vm981, %v3859, %v3861
        %v3866 = vsel %vm1841, %v2380, %v3666
        %v3869 = vsel %vm1841, %v2381, %v3667
        %v3872 = vsel %vm1841, %v2382, %v3665
        %v3874 = vsel %vm1499, %v3866, %v3680
        %v3876 = vsel %vm1499, %v3869, %v3681
        %v3878 = vsel %vm1499, %v3872, %v3679
        %v3880 = vsel %vm3595, %v3874, %v3694
        %v3882 = vsel %vm3595, %v3876, %v3695
        %v3884 = vsel %vm3595, %v3878, %v3693
        %v3886 = vsel %vm3600, %v3880, %v3708
        %v3888 = vsel %vm3600, %v3882, %v3709
        %v3890 = vsel %vm3600, %v3884, %v3707
        %v3892 = vsel %vm3605, %v3886, %v3717
        %v3894 = vsel %vm3605, %v3888, %v3722
        %v3896 = vsel %vm3605, %v3890, %v3723
        %v3898 = vsel %vm3610, %v3892, %v3731
        %v3900 = vsel %vm3610, %v3894, %v3737
        %v3902 = vsel %vm3610, %v3896, %v3738
        %v3904 = vsel %vm3615, %v3898, %v3751
        %v3906 = vsel %vm3615, %v3900, %v3752
        %v3908 = vsel %vm3615, %v3902, %v3750
        %v3911 = vsel %vm1841, %v3762, %v3776
        %v3914 = vsel %vm1841, %v3763, %v3777
        %v3917 = vsel %vm1841, %v3761, %v3775
        %v3919 = vsel %vm1499, %v3911, %v3790
        %v3921 = vsel %vm1499, %v3914, %v3791
        %v3923 = vsel %vm1499, %v3917, %v3789
        %v3925 = vsel %vm3595, %v3919, %v3804
        %v3927 = vsel %vm3595, %v3921, %v3805
        %v3929 = vsel %vm3595, %v3923, %v3803
        %v3931 = vsel %vm3600, %v3925, %v3813
        %v3933 = vsel %vm3600, %v3927, %v3819
        %v3935 = vsel %vm3600, %v3929, %v3820
        %v3937 = vsel %vm3605, %v3931, %v3828
        %v3939 = vsel %vm3605, %v3933, %v3834
        %v3941 = vsel %vm3605, %v3935, %v3835
        %v3943 = vsel %vm3610, %v3937, %v3848
        %v3945 = vsel %vm3610, %v3939, %v3849
        %v3947 = vsel %vm3610, %v3941, %v3847
        %v3949 = vsel %vm3615, %v3943, %v3862
        %v3951 = vsel %vm3615, %v3945, %v3863
        %v3953 = vsel %vm3615, %v3947, %v3861
        %v3957 = vrot.slane %v2889, 7
        %v3958 = vrot.slane %v2890, 7
        %v3959 = vrot.slane %v2891, 7
        %3960 = vrot.lane.b32.xlu0 %v3957, 112
        %v3961 = vpop.permute.xlu0 %3960
        %3962 = vrot.lane.b32.xlu0 %v3958, 112
        %v3963 = vpop.permute.xlu0 %3962
        %3964 = vrot.lane.b32.xlu0 %v3959, 112
        %v3965 = vpop.permute.xlu0 %3964
        %v3966 = vsel %vm953, %v3961, %v3963
        %v3967 = vsel %vm953, %v3963, %v3965
        %v3971 = vrot.slane %v2919, 6
        %v3972 = vrot.slane %v2920, 6
        %v3973 = vrot.slane %v2921, 6
        %3974 = vrot.lane.b32.xlu0 %v3971, 96
        %v3975 = vpop.permute.xlu0 %3974
        %3976 = vrot.lane.b32.xlu0 %v3972, 96
        %v3977 = vpop.permute.xlu0 %3976
        %3978 = vrot.lane.b32.xlu0 %v3973, 96
        %v3979 = vpop.permute.xlu0 %3978
        %v3980 = vsel %vm995, %v3975, %v3977
        %v3981 = vsel %vm995, %v3977, %v3979
        %v3985 = vrot.slane %v2965, 5
        %v3986 = vrot.slane %v2966, 5
        %v3987 = vrot.slane %v2967, 5
        %3988 = vrot.lane.b32.xlu0 %v3985, 63
        %v3989 = vpop.permute.xlu0 %3988
        %3990 = vrot.lane.b32.xlu0 %v3986, 63
        %v3991 = vpop.permute.xlu0 %3990
        %3992 = vrot.lane.b32.xlu0 %v3987, 63
        %v3993 = vpop.permute.xlu0 %3992
        %v3994 = vsel %vm3524, %v3989, %v3991
        %v3995 = vsel %vm3524, %v3991, %v3993
        %v3999 = vrot.slane %v2995, 4
        %v4000 = vrot.slane %v2996, 4
        %v4001 = vrot.slane %v2997, 4
        %4002 = vrot.lane.b32.xlu0 %v3999, 47
        %v4003 = vpop.permute.xlu0 %4002
        %4004 = vrot.lane.b32.xlu0 %v4000, 47
        %v4005 = vpop.permute.xlu0 %4004
        %4006 = vrot.lane.b32.xlu0 %v4001, 47
        %v4007 = vpop.permute.xlu0 %4006
        %v4008 = vsel %vm3539, %v4003, %v4005
        %v4009 = vsel %vm3539, %v4005, %v4007
        %v4013 = vrot.slane %v3025, 3
        %v4014 = vrot.slane %v3026, 3
        %v4015 = vrot.slane %v3027, 3
        %4016 = vrot.lane.b32.xlu0 %v4013, 31
        %v4017 = vpop.permute.xlu0 %4016
        %4018 = vrot.lane.b32.xlu0 %v4014, 31
        %v4019 = vpop.permute.xlu0 %4018
        %4020 = vrot.lane.b32.xlu0 %v4015, 31
        %v4021 = vpop.permute.xlu0 %4020
        %v4022 = vsel %vm3554, %v4017, %v4019
        %v4023 = vsel %vm3554, %v4019, %v4021
        %v4027 = vrot.slane %v3055, 2
        %v4028 = vrot.slane %v3056, 2
        %v4029 = vrot.slane %v3057, 2
        %4030 = vrot.lane.b32.xlu0 %v4027, 15
        %v4031 = vpop.permute.xlu0 %4030
        %4032 = vrot.lane.b32.xlu0 %v4028, 15
        %v4033 = vpop.permute.xlu0 %4032
        %4034 = vrot.lane.b32.xlu0 %v4029, 15
        %v4035 = vpop.permute.xlu0 %4034
        %v4036 = vsel %vm3736, %v4031, %v4033
        %v4037 = vsel %vm3736, %v4033, %v4035
        %v4041 = vrot.slane %v3085, 1
        %v4042 = vrot.slane %v3086, 1
        %v4043 = vrot.slane %v3087, 1
        %4044 = vrot.lane.b32.xlu0 %v4041, 127
        %v4045 = vpop.permute.xlu0 %4044
        %4046 = vrot.lane.b32.xlu0 %v4042, 127
        %v4047 = vpop.permute.xlu0 %4046
        %4048 = vrot.lane.b32.xlu0 %v4043, 127
        %v4049 = vpop.permute.xlu0 %4048
        %v4050 = vsel %vm925, %v4045, %v4047
        %v4051 = vsel %vm925, %v4047, %v4049
        %4055 = vrot.lane.b32.xlu0 %v3115, 111
        %v4056 = vpop.permute.xlu0 %4055
        %4057 = vrot.lane.b32.xlu0 %v3116, 111
        %v4058 = vpop.permute.xlu0 %4057
        %4059 = vrot.lane.b32.xlu0 %v3117, 111
        %v4060 = vpop.permute.xlu0 %4059
        %v4061 = vsel %vm967, %v4056, %v4058
        %v4062 = vsel %vm967, %v4058, %v4060
        %v4066 = vrot.slane %v3145, 7
        %v4067 = vrot.slane %v3146, 7
        %v4068 = vrot.slane %v3147, 7
        %4069 = vrot.lane.b32.xlu0 %v4066, 95
        %v4070 = vpop.permute.xlu0 %4069
        %4071 = vrot.lane.b32.xlu0 %v4067, 95
        %v4072 = vpop.permute.xlu0 %4071
        %4073 = vrot.lane.b32.xlu0 %v4068, 95
        %v4074 = vpop.permute.xlu0 %4073
        %v4075 = vsel %vm1009, %v4070, %v4072
        %v4076 = vsel %vm1009, %v4072, %v4074
        %v4080 = vrot.slane %v3191, 6
        %v4081 = vrot.slane %v3192, 6
        %v4082 = vrot.slane %v3193, 6
        %4083 = vrot.lane.b32.xlu0 %v4080, 62
        %v4084 = vpop.permute.xlu0 %4083
        %4085 = vrot.lane.b32.xlu0 %v4081, 62
        %v4086 = vpop.permute.xlu0 %4085
        %4087 = vrot.lane.b32.xlu0 %v4082, 62
        %v4088 = vpop.permute.xlu0 %4087
        %vm4089 = vcmask 506880
        %v4090 = vsel %vm4089, %v4084, %v4086
        %v4091 = vsel %vm4089, %v4086, %v4088
        %v4095 = vrot.slane %v3221, 5
        %v4096 = vrot.slane %v3222, 5
        %v4097 = vrot.slane %v3223, 5
        %4098 = vrot.lane.b32.xlu0 %v4095, 46
        %v4099 = vpop.permute.xlu0 %4098
        %4100 = vrot.lane.b32.xlu0 %v4096, 46
        %v4101 = vpop.permute.xlu0 %4100
        %4102 = vrot.lane.b32.xlu0 %v4097, 46
        %v4103 = vpop.permute.xlu0 %4102
        %vm4104 = vcmask 375808
        %v4105 = vsel %vm4104, %v4099, %v4101
        %v4106 = vsel %vm4104, %v4101, %v4103
        %v4110 = vrot.slane %v3251, 4
        %v4111 = vrot.slane %v3252, 4
        %v4112 = vrot.slane %v3253, 4
        %4113 = vrot.lane.b32.xlu0 %v4110, 30
        %v4114 = vpop.permute.xlu0 %4113
        %4115 = vrot.lane.b32.xlu0 %v4111, 30
        %v4116 = vpop.permute.xlu0 %4115
        %4117 = vrot.lane.b32.xlu0 %v4112, 30
        %v4118 = vpop.permute.xlu0 %4117
        %v4119 = vsel %vm3818, %v4114, %v4116
        %v4120 = vsel %vm3818, %v4116, %v4118
        %v4124 = vrot.slane %v3281, 3
        %v4125 = vrot.slane %v3282, 3
        %v4126 = vrot.slane %v3283, 3
        %4127 = vrot.lane.b32.xlu0 %v4124, 14
        %v4128 = vpop.permute.xlu0 %4127
        %4129 = vrot.lane.b32.xlu0 %v4125, 14
        %v4130 = vpop.permute.xlu0 %4129
        %4131 = vrot.lane.b32.xlu0 %v4126, 14
        %v4132 = vpop.permute.xlu0 %4131
        %v4133 = vsel %vm3833, %v4128, %v4130
        %v4134 = vsel %vm3833, %v4130, %v4132
        %v4138 = vrot.slane %v3311, 2
        %v4139 = vrot.slane %v3312, 2
        %v4140 = vrot.slane %v3313, 2
        %4141 = vrot.lane.b32.xlu0 %v4138, 126
        %v4142 = vpop.permute.xlu0 %4141
        %4143 = vrot.lane.b32.xlu0 %v4139, 126
        %v4144 = vpop.permute.xlu0 %4143
        %4145 = vrot.lane.b32.xlu0 %v4140, 126
        %v4146 = vpop.permute.xlu0 %4145
        %v4147 = vsel %vm939, %v4142, %v4144
        %v4148 = vsel %vm939, %v4144, %v4146
        %v4152 = vrot.slane %v3341, 1
        %v4153 = vrot.slane %v3342, 1
        %v4154 = vrot.slane %v3343, 1
        %4155 = vrot.lane.b32.xlu0 %v4152, 110
        %v4156 = vpop.permute.xlu0 %4155
        %4157 = vrot.lane.b32.xlu0 %v4153, 110
        %v4158 = vpop.permute.xlu0 %4157
        %4159 = vrot.lane.b32.xlu0 %v4154, 110
        %v4160 = vpop.permute.xlu0 %4159
        %v4161 = vsel %vm981, %v4156, %v4158
        %v4162 = vsel %vm981, %v4158, %v4160
        %v4165 = vsel %vm1841, %v2859, %v3966
        %v4168 = vsel %vm1841, %v2860, %v3967
        %v4171 = vsel %vm1841, %v2861, %v3965
        %v4173 = vsel %vm1499, %v4165, %v3980
        %v4175 = vsel %vm1499, %v4168, %v3981
        %v4177 = vsel %vm1499, %v4171, %v3979
        %v4179 = vsel %vm3595, %v4173, %v3989
        %v4181 = vsel %vm3595, %v4175, %v3994
        %v4183 = vsel %vm3595, %v4177, %v3995
        %v4185 = vsel %vm3600, %v4179, %v4003
        %v4187 = vsel %vm3600, %v4181, %v4008
        %v4189 = vsel %vm3600, %v4183, %v4009
        %v4191 = vsel %vm3605, %v4185, %v4017
        %v4193 = vsel %vm3605, %v4187, %v4022
        %v4195 = vsel %vm3605, %v4189, %v4023
        %v4197 = vsel %vm3610, %v4191, %v4031
        %v4199 = vsel %vm3610, %v4193, %v4036
        %v4201 = vsel %vm3610, %v4195, %v4037
        %v4203 = vsel %vm3615, %v4197, %v4050
        %v4205 = vsel %vm3615, %v4199, %v4051
        %v4207 = vsel %vm3615, %v4201, %v4049
        %v4210 = vsel %vm1841, %v4061, %v4075
        %v4213 = vsel %vm1841, %v4062, %v4076
        %v4216 = vsel %vm1841, %v4060, %v4074
        %v4218 = vsel %vm1499, %v4210, %v4084
        %v4220 = vsel %vm1499, %v4213, %v4090
        %v4222 = vsel %vm1499, %v4216, %v4091
        %v4224 = vsel %vm3595, %v4218, %v4099
        %v4226 = vsel %vm3595, %v4220, %v4105
        %v4228 = vsel %vm3595, %v4222, %v4106
        %v4230 = vsel %vm3600, %v4224, %v4114
        %v4232 = vsel %vm3600, %v4226, %v4119
        %v4234 = vsel %vm3600, %v4228, %v4120
        %v4236 = vsel %vm3605, %v4230, %v4128
        %v4238 = vsel %vm3605, %v4232, %v4133
        %v4240 = vsel %vm3605, %v4234, %v4134
        %v4242 = vsel %vm3610, %v4236, %v4147
        %v4244 = vsel %vm3610, %v4238, %v4148
        %v4246 = vsel %vm3610, %v4240, %v4146
        %v4248 = vsel %vm3615, %v4242, %v4161
        %v4250 = vsel %vm3615, %v4244, %v4162
        %v4252 = vsel %vm3615, %v4246, %v4160
        %4259 = vrot.lane.b32.xlu0 %v3904, 94
        %v4260 = vpop.permute.xlu0 %4259
        %4261 = vrot.lane.b32.xlu0 %v3906, 94
        %v4262 = vpop.permute.xlu0 %4261
        %4263 = vrot.lane.b32.xlu0 %v3908, 94
        %v4264 = vpop.permute.xlu0 %4263
        %4265 = vrot.lane.b32.xlu0 %v3949, 94
        %v4266 = vpop.permute.xlu0 %4265
        %4267 = vrot.lane.b32.xlu0 %v3951, 94
        %v4268 = vpop.permute.xlu0 %4267
        %4269 = vrot.lane.b32.xlu0 %v3953, 94
        %v4270 = vpop.permute.xlu0 %4269
        %v4271 = vsel %vm1023, %v4260, %v4262
        %v4272 = vsel %vm1023, %v4262, %v4264
        %v4273 = vsel %vm1023, %v4266, %v4268
        %v4274 = vsel %vm1023, %v4268, %v4270
        %4285 = vrot.lane.b32.xlu0 %v4203, 60
        %v4286 = vpop.permute.xlu0 %4285
        %4287 = vrot.lane.b32.xlu0 %v4205, 60
        %v4288 = vpop.permute.xlu0 %4287
        %4289 = vrot.lane.b32.xlu0 %v4207, 60
        %v4290 = vpop.permute.xlu0 %4289
        %4291 = vrot.lane.b32.xlu0 %v4248, 60
        %v4292 = vpop.permute.xlu0 %4291
        %4293 = vrot.lane.b32.xlu0 %v4250, 60
        %v4294 = vpop.permute.xlu0 %4293
        %4295 = vrot.lane.b32.xlu0 %v4252, 60
        %v4296 = vpop.permute.xlu0 %4295
        %vm4297 = vcmask 490496
        %v4298 = vsel %vm4297, %v4286, %v4288
        %v4299 = vsel %vm4297, %v4288, %v4290
        %v4300 = vsel %vm4297, %v4292, %v4294
        %v4301 = vsel %vm4297, %v4294, %v4296
        %4309 = vrot.lane.b32.xlu0 %v3371, 26
        %v4310 = vpop.permute.xlu0 %4309
        %4311 = vrot.lane.b32.xlu0 %v3372, 26
        %v4312 = vpop.permute.xlu0 %4311
        %4313 = vrot.lane.b32.xlu0 %v3373, 26
        %v4314 = vpop.permute.xlu0 %4313
        %vm4315 = vcmask 211968
        %v4316 = vsel %vm4315, %v4310, %v4312
        %v4317 = vsel %vm4315, %v4312, %v4314
        %v4318 = vld [vmem:[%s12] sm:$0x1]
        %vm4319 = vcmask 801792
        %v4321 = vsel %vm4319, %v4318, 0
        %v4324 = vsel %vm1841, %v4316, 0
        %v4327 = vsel %vm1841, %v4317, 0
        %4329 = vmatpush.bf16.msra.mxu0 0
        %4330 = vmatpush.bf16.msra.mxu0 %v4324
        %4331 = vmatpush.bf16.msra.mxu0 %v4300
        %4332 = vmatpush.bf16.msra.mxu0 %v4298
        %4333 = vmatpush.bf16.msra.mxu0 %v4273
        %4334 = vmatpush.bf16.msra.mxu0 %v4271
        %4335 = vmatpush.bf16.msra.mxu0 %v3649
        %4336 = vmatpush.bf16.msra.mxu0 %v3617
        %4337 = vmatmul.bf16.gmra.mxu0 %v4321
        %v4338 = vpop.f32.mrf.mxu0
        %v4339 = vadd.f32 0.0, %v4338
        %v4340 = vpop.f32.mrf.mxu0
        %4341 = vdwg.mxu0
        %4342 = vmatpush.bf16.msra.mxu0 0
        %4343 = vmatpush.bf16.msra.mxu0 %v4327
        %4344 = vmatpush.bf16.msra.mxu0 %v4301
        %4345 = vmatpush.bf16.msra.mxu0 %v4299
        %4346 = vmatpush.bf16.msra.mxu0 %v4274
        %4347 = vmatpush.bf16.msra.mxu0 %v4272
        %4348 = vmatpush.bf16.msra.mxu0 %v3652
        %4349 = vmatpush.bf16.msra.mxu0 %v3620
        %4350 = vmatmul.bf16.gmra.mxu0 %v4321
        %v4351 = vpop.f32.mrf.mxu0
        %v4352 = vadd.f32 0.0, %v4351
        %v4353 = vpop.f32.mrf.mxu0
        %4354 = vdwg.mxu0
        %v4355 = vxor.u32 %v4339, 2147483648
        %v4356 = vxor.u32 %v4352, 2147483648
        %v4357 = vmul.f32 %v4355, 1.442695
        %v4358 = vpow.pop %v4357
        %v4359 = vmul.f32 %v4356, 1.442695
        %v4360 = vpow.pop %v4359
        %v4361 = vadd.f32 %v4358, 1.0
        %v4362 = vadd.f32 %v4360, 1.0
        %v4363 = vrcp.pop %v4361
        %v4364 = vmul.f32 %v4361, %v4363
        %v4365 = vsub.f32 1.0, %v4364
        %v4366 = vmul.f32 %v4363, %v4365
        %v4367 = vadd.f32 %v4363, %v4366
        %vm4368 = vweird.f32 %v4361
        %vm4369 = vweird.f32 %v4363
        %vm4370 = vmor %vm4368, %vm4369
        %v4371 = vsel %vm4370, %v4363, %v4367
        %v4372 = vand.u32 2147483647, %v4361
        %vm4373 = vcmp.eq.f32.partialorder %v4372, 8.507059e+37
        %v4374 = vand.u32 %v4361, 2147483648
        %v4375 = vor.u32 1.1754944e-38, %v4374
        %v4376 = vsel %vm4373, %v4375, %v4371
        %v4377 = vmul.f32 1.0, %v4376
        %v4378 = vrcp.pop %v4362
        %v4379 = vmul.f32 %v4362, %v4378
        %v4380 = vsub.f32 1.0, %v4379
        %v4381 = vmul.f32 %v4378, %v4380
        %v4382 = vadd.f32 %v4378, %v4381
        %vm4383 = vweird.f32 %v4362
        %vm4384 = vweird.f32 %v4378
        %vm4385 = vmor %vm4383, %vm4384
        %v4386 = vsel %vm4385, %v4378, %v4382
        %v4387 = vand.u32 2147483647, %v4362
        %vm4388 = vcmp.eq.f32.partialorder %v4387, 8.507059e+37
        %v4389 = vand.u32 %v4362, 2147483648
        %v4390 = vor.u32 1.1754944e-38, %v4389
        %v4391 = vsel %vm4388, %v4390, %v4386
        %v4392 = vmul.f32 1.0, %v4391
        %v4393 = vperm.slane %v4377, 0
        %v4394 = vperm.slane %v4392, 0
        %v4395 = vmul.f32 %v1764, %v4393
        %v4396 = vmul.f32 %v1765, %v4394
        %v4397 = vmul.f32 %v1766, %v4393
        %v4398 = vmul.f32 %v1767, %v4394
        %v4399 = vmul.f32 %v1768, %v4393
        %v4400 = vmul.f32 %v1769, %v4394
        %v4401 = vmul.f32 %v1770, %v4393
        %v4402 = vmul.f32 %v1771, %v4394
        %v4403 = vmul.f32 %v1772, %v4393
        %v4404 = vmul.f32 %v1773, %v4394
        %v4405 = vmul.f32 %v1774, %v4393
        %v4406 = vmul.f32 %v1775, %v4394
        %v4407 = vmul.f32 %v1776, %v4393
        %v4408 = vmul.f32 %v1777, %v4394
        %v4409 = vmul.f32 %v1778, %v4393
        %v4410 = vmul.f32 %v1779, %v4394
        %v4411 = vadd.f32 %v4395, %v464
        %v4412 = vadd.f32 %v4396, %v465
        %v4413 = vadd.f32 %v4397, %v466
        %v4414 = vadd.f32 %v4398, %v467
        %v4415 = vadd.f32 %v4399, %v468
        %v4416 = vadd.f32 %v4400, %v469
        %v4417 = vadd.f32 %v4401, %v470
        %v4418 = vadd.f32 %v4402, %v471
        %v4419 = vadd.f32 %v4403, %v472
        %v4420 = vadd.f32 %v4404, %v473
        %v4421 = vadd.f32 %v4405, %v474
        %v4422 = vadd.f32 %v4406, %v475
        %v4423 = vadd.f32 %v4407, %v476
        %v4424 = vadd.f32 %v4408, %v477
        %v4425 = vadd.f32 %v4409, %v478
        %v4426 = vadd.f32 %v4410, %v479
        %v4427 = vmax.f32 %v4411, 0.0
        %v4428 = vmax.f32 %v4412, 0.0
        %v4429 = vmax.f32 %v4413, 0.0
        %v4430 = vmax.f32 %v4414, 0.0
        %v4431 = vmax.f32 %v4415, 0.0
        %v4432 = vmax.f32 %v4416, 0.0
        %v4433 = vmax.f32 %v4417, 0.0
        %v4434 = vmax.f32 %v4418, 0.0
        %v4435 = vmax.f32 %v4419, 0.0
        %v4436 = vmax.f32 %v4420, 0.0
        %v4437 = vmax.f32 %v4421, 0.0
        %v4438 = vmax.f32 %v4422, 0.0
        %v4439 = vmax.f32 %v4423, 0.0
        %v4440 = vmax.f32 %v4424, 0.0
        %v4441 = vmax.f32 %v4425, 0.0
        %v4442 = vmax.f32 %v4426, 0.0
        %4443 = vst [vmem:[%s460] sm:$0xff] %v4427
        %4444 = vst [vmem:[%s460 + $0x8] sm:$0xff] %v4428
        %4445 = vst [vmem:[%s460 + $0x10] sm:$0xff] %v4429
        %4446 = vst [vmem:[%s460 + $0x18] sm:$0xff] %v4430
        %4447 = vst [vmem:[%s460 + $0x20] sm:$0xff] %v4431
        %4448 = vst [vmem:[%s460 + $0x28] sm:$0xff] %v4432
        %4449 = vst [vmem:[%s460 + $0x30] sm:$0xff] %v4433
        %4450 = vst [vmem:[%s460 + $0x38] sm:$0xff] %v4434
        %4451 = vst [vmem:[%s460 + $0x40] sm:$0xff] %v4435
        %4452 = vst [vmem:[%s460 + $0x48] sm:$0xff] %v4436
        %4453 = vst [vmem:[%s460 + $0x50] sm:$0xff] %v4437
        %4454 = vst [vmem:[%s460 + $0x58] sm:$0xff] %v4438
        %4455 = vst [vmem:[%s460 + $0x60] sm:$0xff] %v4439
        %4456 = vst [vmem:[%s460 + $0x68] sm:$0xff] %v4440
        %4457 = vst [vmem:[%s460 + $0x70] sm:$0xff] %v4441
        %4458 = vst [vmem:[%s460 + $0x78] sm:$0xff] %v4442
        %s4459 = sand.u32 %s316, 1
        %s4460 = scalar_lea.sflag [#allocation4], %s4459
        %s4461 = sand.u32 %s316, 1
        %s4462 = smul.addr %s4461, 128
        %s4463 = scalar_lea.vmem [#allocation5], %s4462
        // Predicated region
        $region77: #{tpu_custom_call.1} parent=71 // pred_check
          %p4464 = pneg %p326
        $region78: #{tpu_custom_call.1} parent=71 // pred_check_branch
          %4466 = sbr.rel (%p4464) target = $region80
        $region79: #{tpu_custom_call.1} parent=71 // pred_region
          %4468 = vsyncadd %s4460, 0
          %s4469 = smul.addr %s30, 16
          %s4470 = smul.addr %s4469, 8
          %s4471 = scalar_lea.hbm %s13, %s4470
          %s4472 = sshll.u32 %s4463, 4
          %s4473 = int_to_ptr.vmem [resolvable:$true] %s4472
          %s4474 = sshll.u32 %s4471, 4
          %s4475 = int_to_ptr.hbm [resolvable:$true] %s4474
          %4480 = dma.vmem_to_hbm [thread:$0]  %s4473, 2048, %s4475, %s4460, 256, 256, 16
        $region80: #{tpu_custom_call.1} parent=71 // pred_fallthru
          _
      $region72: #{tpu_custom_call.1} parent=5 // pred_fallthru
        _
      %p4481 = scmp.le.s32.totalorder 2, %s25
      // Predicated region
      $region81: #{tpu_custom_call.1} parent=5 // pred_check
        %p4482 = pneg %p4481
      $region82: #{tpu_custom_call.1} parent=5 // pred_check_branch
        %4484 = sbr.rel (%p4482) target = $region84
      $region83: #{tpu_custom_call.1} parent=5 // pred_region
        %s4485 = ssub.s32 %s25, 2
        // Predicated region
        $region85: #{tpu_custom_call.1} parent=83 // pred_check
          %p4486 = pneg %p332
        $region86: #{tpu_custom_call.1} parent=83 // pred_check_branch
          %4488 = sbr.rel (%p4486) target = $region88
        $region87: #{tpu_custom_call.1} parent=83 // pred_region
          %s4489 = sand.u32 %s317, 1
          %s4490 = scalar_lea.sflag [#allocation4], %s4489
          %s4491 = sand.u32 %s317, 1
          %s4492 = smul.addr %s4491, 128
          %s4493 = scalar_lea.vmem [#allocation5], %s4492
          %4495 = dma.done %s4490, 2048
        $region88: #{tpu_custom_call.1} parent=83 // pred_fallthru
          _
      $region84: #{tpu_custom_call.1} parent=5 // pred_fallthru
        _
    $region6: #{tpu_custom_call.1} parent=1 // loop_footer
      %s29 = sadd.s32 1, %s25
    $region7: #{tpu_custom_call.1} parent=1 // loop_footer_branch
      %24 = sbr.rel target = $region3
    $region8: #{tpu_custom_call.1} parent=1 // loop_exit
      _
    %4496 = vsyncpa [#allocation3], 1
    %s4497 = scalar_lea.sflag [#allocation3], 1
    %4498 = vsyncpa %s4497, 1
    %4499 = vsyncpa [#allocation4], 1
    %s4500 = scalar_lea.sflag [#allocation4], 1
    %4501 = vsyncpa %s4500, 1

</llo_original>
